<compile_context>
chip_gen: v6e
topology: v6e:2x2x1
jax: 0.10.0
libtpu: 0.0.40
codegen_flags: <defaults>
</compile_context>

<pallas_src>
import jax
import jax.numpy as jnp
from jax.experimental import pallas as pl
from jax.experimental.pallas import tpu as pltpu

BN_EPS = 1e-5
_LANE = 128
_VMEM_LIMIT = 48 * 1024 * 1024  # safe on v5e (default 16 MiB), v6e, v7x (64 MiB phys)


def _round_up(n, m):
    return (n + m - 1) // m * m


def _pick_tile(n_pad, candidates, min_tiles=1):
    for c in candidates:
        if n_pad % c == 0 and n_pad // c >= min_tiles:
            return c
    return None


# ---------------------------------------------------------------------------
# Kernels
# ---------------------------------------------------------------------------
def _sage_block_kernel(a_ref, hk_ref, hi_ref, invdeg_ref,
                       w_agg_ref, w_selfres_ref, b_selfres_ref,
                       h_out_ref, acc_ref, selfres_ref):
    """One SAGE block: mean-agg -> lin_l(+BN folded) + lin_r + relu + residual."""
    h_pad = w_agg_ref.shape[1]

    @pl.when(pl.program_id(1) == 0)
    def _():
        acc_ref[...] = jnp.zeros_like(acc_ref)
        # Self path (lin_r | residual) does not depend on the K reduction:
        # compute it once at k==0 so it overlaps the first A-tile DMAs and
        # shortens the k==last epilogue.
        selfres_ref[...] = (
            jnp.dot(hi_ref[...].astype(jnp.float32), w_selfres_ref[...],
                    preferred_element_type=jnp.float32) + b_selfres_ref[...])

    # Neighborhood-count tile: int8 in HBM/VMEM, widened to bf16 for the MXU;
    # features are already bf16 in HBM (no in-kernel feature cast).
    acc_ref[...] += jnp.dot(a_ref[...].astype(jnp.bfloat16), hk_ref[...],
                            preferred_element_type=jnp.float32)

    @pl.when(pl.program_id(1) == pl.num_programs(1) - 1)
    def _():
        agg = acc_ref[...] * invdeg_ref[...]            # mean: 1/deg applied in f32
        selfres = selfres_ref[...]
        pre = jnp.dot(agg, w_agg_ref[...],
                      preferred_element_type=jnp.float32) + selfres[:, :h_pad]
        # BatchNorm folded into weights/bias; dropout = identity (eval).
        h_out_ref[...] = (jnp.maximum(pre, 0.0)
                          + selfres[:, h_pad:]).astype(h_out_ref.dtype)


def _sage_head_kernel(a_ref, hk_ref, hi_ref, invdeg_ref,
                      w3l_ref, w3r_ref, b3_ref,
                      ff1_w_ref, ff1_b_ref, ff2_w_ref, ff2_b_ref,
                      cls_w_ref, cls_b_ref,
                      logits_ref, emb_ref, acc_ref, self3_ref):
    """sage3 + feed-forward head + classifier (lane-dense padded outputs)."""
    @pl.when(pl.program_id(1) == 0)
    def _():
        acc_ref[...] = jnp.zeros_like(acc_ref)
        self3_ref[...] = (
            jnp.dot(hi_ref[...].astype(jnp.float32), w3r_ref[...],
                    preferred_element_type=jnp.float32) + b3_ref[...])

    acc_ref[...] += jnp.dot(a_ref[...].astype(jnp.bfloat16), hk_ref[...],
                            preferred_element_type=jnp.float32)

    @pl.when(pl.program_id(1) == pl.num_programs(1) - 1)
    def _():
        agg = acc_ref[...] * invdeg_ref[...]
        h3 = (jnp.dot(agg, w3l_ref[...], preferred_element_type=jnp.float32)
              + self3_ref[...])                          # sage3 (no relu / no BN)
        f = jnp.maximum(
            jnp.dot(h3, ff1_w_ref[...], preferred_element_type=jnp.float32)
            + ff1_b_ref[...], 0.0)                       # ff_layer1 + relu
        emb = jnp.dot(f, ff2_w_ref[...],
                      preferred_element_type=jnp.float32) + ff2_b_ref[...]
        logits = jnp.dot(emb, cls_w_ref[...],
                         preferred_element_type=jnp.float32) + cls_b_ref[...]
        emb_ref[...] = emb                               # lane-dense padded
        logits_ref[...] = logits                         # lane-dense padded


# ---------------------------------------------------------------------------
# pallas_call wrappers
# ---------------------------------------------------------------------------
def _sage_block(a_i8, inv_deg, h, w_agg, w_selfres, b_selfres, *, tm, tk):
    n_pad = a_i8.shape[0]
    f_in = h.shape[1]
    h_pad = w_agg.shape[1]
    grid = (n_pad // tm, n_pad // tk)
    rep = lambda i, k: (0, 0)
    return pl.pallas_call(
        _sage_block_kernel,
        out_shape=jax.ShapeDtypeStruct((n_pad, h_pad), jnp.bfloat16),
        grid_spec=pltpu.PrefetchScalarGridSpec(
            num_scalar_prefetch=0,
            grid=grid,
            in_specs=[
                pl.BlockSpec((tm, tk), lambda i, k: (i, k)),     # A tile (int8)
                pl.BlockSpec((tk, f_in), lambda i, k: (k, 0)),   # features, K side (bf16)
                pl.BlockSpec((tm, f_in), lambda i, k: (i, 0)),   # features, row side (bf16)
                pl.BlockSpec((tm, 1), lambda i, k: (i, 0)),      # 1/deg (f32)
                pl.BlockSpec((f_in, h_pad), rep),                # lin_l (BN folded)
                pl.BlockSpec((f_in, 2 * h_pad), rep),            # [lin_r | residual]
                pl.BlockSpec((1, 2 * h_pad), rep),               # fused biases
            ],
            out_specs=pl.BlockSpec((tm, h_pad), lambda i, k: (i, 0)),
            scratch_shapes=[pltpu.VMEM((tm, f_in), jnp.float32),      # K-sum acc
                            pltpu.VMEM((tm, 2 * h_pad), jnp.float32)],  # self path
        ),
        compiler_params=pltpu.CompilerParams(
            dimension_semantics=("parallel", "arbitrary"),
            vmem_limit_bytes=_VMEM_LIMIT),
    )(a_i8, h, h, inv_deg, w_agg, w_selfres, b_selfres)


def _sage_head(a_i8, inv_deg, h, w3l, w3r, b3,
               ff1_w, ff1_b, ff2_w, ff2_b, cls_w, cls_b, *, tm, tk):
    n_pad = a_i8.shape[0]
    h_pad = h.shape[1]
    ff_pad = ff1_w.shape[1]
    o_pad = cls_w.shape[1]
    grid = (n_pad // tm, n_pad // tk)
    rep = lambda i, k: (0, 0)
    return pl.pallas_call(
        _sage_head_kernel,
        out_shape=(jax.ShapeDtypeStruct((n_pad, o_pad), jnp.float32),
                   jax.ShapeDtypeStruct((n_pad, h_pad), jnp.float32)),
        grid_spec=pltpu.PrefetchScalarGridSpec(
            num_scalar_prefetch=0,
            grid=grid,
            in_specs=[
                pl.BlockSpec((tm, tk), lambda i, k: (i, k)),     # A tile (int8)
                pl.BlockSpec((tk, h_pad), lambda i, k: (k, 0)),  # features, K side (bf16)
                pl.BlockSpec((tm, h_pad), lambda i, k: (i, 0)),  # features, row side (bf16)
                pl.BlockSpec((tm, 1), lambda i, k: (i, 0)),      # 1/deg (f32)
                pl.BlockSpec((h_pad, h_pad), rep),               # sage3 lin_l
                pl.BlockSpec((h_pad, h_pad), rep),               # sage3 lin_r
                pl.BlockSpec((1, h_pad), rep),                   # sage3 bias
                pl.BlockSpec((h_pad, ff_pad), rep),              # ff1
                pl.BlockSpec((1, ff_pad), rep),
                pl.BlockSpec((ff_pad, h_pad), rep),              # ff2 (lane-padded)
                pl.BlockSpec((1, h_pad), rep),
                pl.BlockSpec((h_pad, o_pad), rep),               # classifier (padded)
                pl.BlockSpec((1, o_pad), rep),
            ],
            out_specs=(pl.BlockSpec((tm, o_pad), lambda i, k: (i, 0)),
                       pl.BlockSpec((tm, h_pad), lambda i, k: (i, 0))),
            scratch_shapes=[pltpu.VMEM((tm, h_pad), jnp.float32),   # K-sum acc
                            pltpu.VMEM((tm, h_pad), jnp.float32)],  # sage3 self path
        ),
        compiler_params=pltpu.CompilerParams(
            dimension_semantics=("parallel", "arbitrary"),
            vmem_limit_bytes=_VMEM_LIMIT),
    )(a_i8, h, h, inv_deg, w3l, w3r, b3, ff1_w, ff1_b, ff2_w, ff2_b, cls_w, cls_b)


# ---------------------------------------------------------------------------
# Forward
# ---------------------------------------------------------------------------
def enhanced_sage_forward(x, edge_index, params):
    """x: [N, input_dim] f32; edge_index: [2, E] int32 (row0=src, row1=dst)."""
    n, input_dim = x.shape
    hidden_dim = params["s1l_w"].shape[1]
    ff_hidden_dim = params["ff1_w"].shape[1]
    output_dim = params["cls_w"].shape[1]

    h_pad = _round_up(hidden_dim, _LANE)
    o_pad = _round_up(output_dim, _LANE)
    ff_pad = _round_up(ff_hidden_dim, _LANE)

    n_pad = _round_up(max(n, 1), _LANE)
    # Large row tile to amortize K-side feature re-streaming, but keep >= 2 row
    # tiles when possible so the "parallel" axis still splits across 2 TCs (v7x).
    row_cands = (1024, 512, 256, 128)
    tm = (_pick_tile(n_pad, row_cands, min_tiles=2)
          or _pick_tile(n_pad, row_cands) or n_pad)
    tk = _pick_tile(n_pad, (2048, 1024, 512, 256, 128)) or n_pad

    src, dst = edge_index[0], edge_index[1]
    # Dense neighbor-count matrix built DIRECTLY in int8 (exact for counts < 128;
    # a strictly 0/1 adjacency is always exact); degree from the edge list.
    # No N^2 f32 passes in the glue.
    # TODO(synk): for large sparse graphs replace with a CSR/gather aggregation
    # kernel via PrefetchScalarGridSpec instead of the dense O(N^2) matrix.
    a_i8 = jnp.zeros((n_pad, n_pad), jnp.int8).at[dst, src].add(jnp.int8(1))
    deg = jnp.zeros((n_pad,), jnp.float32).at[dst].add(1.0)
    inv_deg = (1.0 / jnp.maximum(deg, 1.0)).reshape(n_pad, 1)  # zero-in-degree -> agg 0

    # Features stored bf16 in HBM (no in-kernel cast, half the feature traffic).
    x_pad = jnp.zeros((n_pad, input_dim), jnp.bfloat16).at[:n, :].set(
        x.astype(jnp.bfloat16))

    def fold_bn(prefix, bn):
        # Fold eval-mode BatchNorm (running stats) into SAGE lin_l / lin_r + bias.
        lw, lb, rw = params[prefix + "l_w"], params[prefix + "l_b"], params[prefix + "r_w"]
        g, beta, m, v = (params[bn + "_g"], params[bn + "_b"],
                         params[bn + "_m"], params[bn + "_v"])
        s = g * jax.lax.rsqrt(v + BN_EPS)
        return lw * s, (lb - m) * s + beta, rw * s

    def block_params(prefix, bn, res_w, res_b, f_real, f_in):
        lw, lb, rw = fold_bn(prefix, bn)
        w_agg = jnp.zeros((f_in, h_pad), jnp.float32).at[:f_real, :hidden_dim].set(lw)
        w_selfres = (jnp.zeros((f_in, 2 * h_pad), jnp.float32)
                     .at[:f_real, :hidden_dim].set(rw)
                     .at[:f_real, h_pad:h_pad + hidden_dim].set(res_w))
        b_selfres = (jnp.zeros((1, 2 * h_pad), jnp.float32)
                     .at[:, :hidden_dim].set(lb)
                     .at[:, h_pad:h_pad + hidden_dim].set(res_b))
        return w_agg, w_selfres, b_selfres

    # TODO(synk): when input_dim > hidden_dim, project x with lin_l BEFORE
    # aggregating (A @ (x @ W)) so the O(N^2) matmul uses the smaller dim.
    w1a, w1s, b1 = block_params("s1", "bn1", params["r1_w"], params["r1_b"],
                                input_dim, input_dim)
    w2a, w2s, b2 = block_params("s2", "bn2", params["r2_w"], params["r2_b"],
                                hidden_dim, h_pad)

    # Head weights: zero-pad input rows to h_pad (activations are 128-lane padded
    # bf16 between layers) and output columns to lane multiples (dense stores).
    w3l = jnp.zeros((h_pad, h_pad), jnp.float32).at[:hidden_dim, :hidden_dim].set(params["s3l_w"])
    w3r = jnp.zeros((h_pad, h_pad), jnp.float32).at[:hidden_dim, :hidden_dim].set(params["s3r_w"])
    b3 = jnp.zeros((1, h_pad), jnp.float32).at[:, :hidden_dim].set(params["s3l_b"])
    ff1_w = jnp.zeros((h_pad, ff_pad), jnp.float32).at[:hidden_dim, :ff_hidden_dim].set(params["ff1_w"])
    ff1_b = jnp.zeros((1, ff_pad), jnp.float32).at[:, :ff_hidden_dim].set(params["ff1_b"])
    ff2_w = jnp.zeros((ff_pad, h_pad), jnp.float32).at[:ff_hidden_dim, :hidden_dim].set(params["ff2_w"])
    ff2_b = jnp.zeros((1, h_pad), jnp.float32).at[:, :hidden_dim].set(params["ff2_b"])
    cls_w = jnp.zeros((h_pad, o_pad), jnp.float32).at[:hidden_dim, :output_dim].set(params["cls_w"])
    cls_b = jnp.zeros((1, o_pad), jnp.float32).at[:, :output_dim].set(params["cls_b"])

    # Intermediate activations stay 128-lane padded bf16 (no slicing between layers).
    h1 = _sage_block(a_i8, inv_deg, x_pad, w1a, w1s, b1, tm=tm, tk=tk)
    h2 = _sage_block(a_i8, inv_deg, h1, w2a, w2s, b2, tm=tm, tk=tk)
    logits_pad, emb_pad = _sage_head(
        a_i8, inv_deg, h2, w3l, w3r, b3,
        ff1_w, ff1_b, ff2_w, ff2_b, cls_w, cls_b, tm=tm, tk=tk)

    return logits_pad[:n, :output_dim], emb_pad[:n, :hidden_dim]


# ---------------------------------------------------------------------------
# Synthetic parameters (shapes match the torch module; weights are [in, out])
# ---------------------------------------------------------------------------
def init_params(key, input_dim, hidden_dim, output_dim, ff_hidden_dim):
    ks = iter(jax.random.split(key, 32))

    def w(shape, scale=0.1):
        return scale * jax.random.normal(next(ks), shape, jnp.float32)

    def b(dim, scale=0.05):
        return scale * jax.random.normal(next(ks), (1, dim), jnp.float32)

    p = {}
    # SAGEConv: lin_l (with bias) on aggregated neighbors, lin_r (no bias) on self.
    p["s1l_w"], p["s1l_b"], p["s1r_w"] = w((input_dim, hidden_dim)), b(hidden_dim), w((input_dim, hidden_dim))
    p["s2l_w"], p["s2l_b"], p["s2r_w"] = w((hidden_dim, hidden_dim)), b(hidden_dim), w((hidden_dim, hidden_dim))
    p["s3l_w"], p["s3l_b"], p["s3r_w"] = w((hidden_dim, hidden_dim)), b(hidden_dim), w((hidden_dim, hidden_dim))
    # BatchNorm1d (eval: running mean=0, var=1; random affine) — folded in wrapper.
    for i in (1, 2):
        p[f"bn{i}_g"] = 1.0 + 0.1 * jax.random.normal(next(ks), (1, hidden_dim), jnp.float32)
        p[f"bn{i}_b"] = 0.05 * jax.random.normal(next(ks), (1, hidden_dim), jnp.float32)
        p[f"bn{i}_m"] = jnp.zeros((1, hidden_dim), jnp.float32)
        p[f"bn{i}_v"] = jnp.ones((1, hidden_dim), jnp.float32)
    # Residual projections.
    p["r1_w"], p["r1_b"] = w((input_dim, hidden_dim)), b(hidden_dim)
    p["r2_w"], p["r2_b"] = w((hidden_dim, hidden_dim)), b(hidden_dim)
    # Feed-forward head + classifier.
    p["ff1_w"], p["ff1_b"] = w((hidden_dim, ff_hidden_dim)), b(ff_hidden_dim)
    p["ff2_w"], p["ff2_b"] = w((ff_hidden_dim, hidden_dim)), b(hidden_dim)
    p["cls_w"], p["cls_b"] = w((hidden_dim, output_dim)), b(output_dim)
    # TODO(synk): link_predictor / predict_links is not part of forward(); not implemented.
    return p


if __name__ == "__main__":
    N, INPUT_DIM, HIDDEN_DIM, FF_HIDDEN_DIM, OUTPUT_DIM = 32, 16, 32, 64, 8
    NUM_EDGES = 64

    key = jax.random.PRNGKey(0)
    k_x, k_src, k_dst, k_p = jax.random.split(key, 4)

    x = jax.random.normal(k_x, (N, INPUT_DIM), jnp.float32)
    src = jax.random.randint(k_src, (NUM_EDGES,), 0, N, dtype=jnp.int32)
    dst = jax.random.randint(k_dst, (NUM_EDGES,), 0, N, dtype=jnp.int32)
    edge_index = jnp.stack([src, dst], axis=0)

    params = init_params(k_p, INPUT_DIM, HIDDEN_DIM, OUTPUT_DIM, FF_HIDDEN_DIM)

    logits, emb = jax.jit(enhanced_sage_forward)(x, edge_index, params)
    jax.block_until_ready((logits, emb))

    assert logits.shape == (N, OUTPUT_DIM) and logits.dtype == jnp.float32
    assert emb.shape == (N, HIDDEN_DIM)
    assert bool(jnp.all(jnp.isfinite(logits))) and bool(jnp.all(jnp.isfinite(emb)))
    print("KERNEL_OK")
</pallas_src>

<mosaic_0001>
module attributes {stable_mosaic.version = 11 : i64} {
  func.func private @main(%arg0: i32) attributes {dimension_semantics = [#tpu.dimension_semantics<core_parallel>], iteration_bounds = array<i64: 2>, tpu.core_type = #tpu.core_type<sc_scalar_subcore>, window_params = []} {
    return
  }
}

module attributes {stable_mosaic.version = 11 : i64} {
  func.func private @main(%arg0: i32) attributes {dimension_semantics = [#tpu.dimension_semantics<core_parallel>], iteration_bounds = array<i64: 2>, tpu.core_type = #tpu.core_type<sc_scalar_subcore>, window_params = []} {
    return
  }
}

module attributes {stable_mosaic.version = 11 : i64} {
  func.func @_sage_block_kernel(%arg0: i32, %arg1: i32, %arg2: memref<128x128xi8, #tpu.memory_space<vmem>>, %arg3: memref<128x128xbf16, #tpu.memory_space<vmem>>, %arg4: memref<128x128xbf16, #tpu.memory_space<vmem>>, %arg5: memref<128x1xf32, #tpu.memory_space<vmem>>, %arg6: memref<128x128xf32, #tpu.memory_space<vmem>>, %arg7: memref<128x256xf32, #tpu.memory_space<vmem>>, %arg8: memref<1x256xf32, #tpu.memory_space<vmem>>, %arg9: memref<128x128xbf16, #tpu.memory_space<vmem>>, %arg10: memref<128x128xf32, #tpu.memory_space<vmem>>, %arg11: memref<128x256xf32, #tpu.memory_space<vmem>>) attributes {dimension_semantics = [#tpu.dimension_semantics<parallel>, #tpu.dimension_semantics<arbitrary>], iteration_bounds = array<i64: 1, 1>, scalar_prefetch = 0 : i64, scratch_operands = 2 : i64, tpu.core_type = #tpu.core_type<tc>, window_params = [{transform_indices = @transform_0, window_bounds = array<i64: 128, 128>}, {transform_indices = @transform_1, window_bounds = array<i64: 128, 128>}, {transform_indices = @transform_2, window_bounds = array<i64: 128, 128>}, {transform_indices = @transform_3, window_bounds = array<i64: 128, 1>}, {pipeline_mode = #tpu.pipeline_mode<synchronous>, transform_indices = @transform_4, window_bounds = array<i64: 128, 128>}, {pipeline_mode = #tpu.pipeline_mode<synchronous>, transform_indices = @transform_5, window_bounds = array<i64: 128, 256>}, {pipeline_mode = #tpu.pipeline_mode<synchronous>, transform_indices = @transform_6, window_bounds = array<i64: 1, 256>}, {transform_indices = @transform_7, window_bounds = array<i64: 128, 128>}]} {
    %c0_i32 = arith.constant 0 : i32
    %0 = arith.cmpi eq, %arg1, %c0_i32 : i32
    %1 = arith.extui %0 : i1 to i32
    %c0_i32_0 = arith.constant 0 : i32
    %2 = arith.cmpi ne, %1, %c0_i32_0 : i32
    scf.if %2 {
      %cst_10 = arith.constant 0.000000e+00 : f32
      %13 = vector.broadcast %cst_10 : f32 to vector<128x128xf32>
      %c0_11 = arith.constant 0 : index
      %c0_12 = arith.constant 0 : index
      %14 = vector.load %arg10[%c0_11, %c0_12] : memref<128x128xf32, #tpu.memory_space<vmem>>, vector<128x128xf32>
      tpu.vector_store %arg10[%c0_11, %c0_12], %13 {strides = array<i32>} : memref<128x128xf32, #tpu.memory_space<vmem>>, vector<128x128xf32>,
      %c0_13 = arith.constant 0 : index
      %c0_14 = arith.constant 0 : index
      %15 = vector.load %arg4[%c0_13, %c0_14] : memref<128x128xbf16, #tpu.memory_space<vmem>>, vector<128x128xbf16>
      %16 = arith.extf %15 : vector<128x128xbf16> to vector<128x128xf32>
      %c0_15 = arith.constant 0 : index
      %c0_16 = arith.constant 0 : index
      %17 = vector.load %arg7[%c0_15, %c0_16] : memref<128x256xf32, #tpu.memory_space<vmem>>, vector<128x256xf32>
      %cst_17 = arith.constant dense<0.000000e+00> : vector<128x256xf32>
      %18 = tpu.matmul %16, %17, %cst_17 {dimension_numbers = #tpu.dot_dimension_numbers<[1], [0], [0], [1], [0, 0, 1, 1], [], []>} : vector<128x128xf32>, vector<128x256xf32>, vector<128x256xf32> -> vector<128x256xf32>
      %c0_18 = arith.constant 0 : index
      %c0_19 = arith.constant 0 : index
      %19 = vector.load %arg8[%c0_18, %c0_19] : memref<1x256xf32, #tpu.memory_space<vmem>>, vector<1x256xf32>
      %20 = vector.broadcast %19 : vector<1x256xf32> to vector<128x256xf32>
      %21 = arith.addf %18, %20 : vector<128x256xf32>
      %c0_20 = arith.constant 0 : index
      %c0_21 = arith.constant 0 : index
      %22 = vector.load %arg11[%c0_20, %c0_21] : memref<128x256xf32, #tpu.memory_space<vmem>>, vector<128x256xf32>
      tpu.vector_store %arg11[%c0_20, %c0_21], %21 {strides = array<i32>} : memref<128x256xf32, #tpu.memory_space<vmem>>, vector<128x256xf32>,
    } else {
    }
    %c0 = arith.constant 0 : index
    %c0_1 = arith.constant 0 : index
    %3 = vector.load %arg10[%c0, %c0_1] : memref<128x128xf32, #tpu.memory_space<vmem>>, vector<128x128xf32>
    %c0_2 = arith.constant 0 : index
    %c0_3 = arith.constant 0 : index
    %4 = vector.load %arg2[%c0_2, %c0_3] : memref<128x128xi8, #tpu.memory_space<vmem>>, vector<128x128xi8>
    %5 = arith.sitofp %4 : vector<128x128xi8> to vector<128x128xbf16>
    %c0_4 = arith.constant 0 : index
    %c0_5 = arith.constant 0 : index
    %6 = vector.load %arg3[%c0_4, %c0_5] : memref<128x128xbf16, #tpu.memory_space<vmem>>, vector<128x128xbf16>
    %cst = arith.constant dense<0.000000e+00> : vector<128x128xf32>
    %7 = tpu.matmul %5, %6, %cst {dimension_numbers = #tpu.dot_dimension_numbers<[1], [0], [0], [1], [0, 0, 1, 1], [], []>} : vector<128x128xbf16>, vector<128x128xbf16>, vector<128x128xf32> -> vector<128x128xf32>
    %8 = arith.addf %3, %7 : vector<128x128xf32>
    %c0_6 = arith.constant 0 : index
    %c0_7 = arith.constant 0 : index
    %9 = vector.load %arg10[%c0_6, %c0_7] : memref<128x128xf32, #tpu.memory_space<vmem>>, vector<128x128xf32>
    tpu.vector_store %arg10[%c0_6, %c0_7], %8 {strides = array<i32>} : memref<128x128xf32, #tpu.memory_space<vmem>>, vector<128x128xf32>,
    %c0_i32_8 = arith.constant 0 : i32
    %10 = arith.cmpi eq, %arg1, %c0_i32_8 : i32
    %11 = arith.extui %10 : i1 to i32
    %c0_i32_9 = arith.constant 0 : i32
    %12 = arith.cmpi ne, %11, %c0_i32_9 : i32
    scf.if %12 {
      %c0_10 = arith.constant 0 : index
      %c0_11 = arith.constant 0 : index
      %13 = vector.load %arg10[%c0_10, %c0_11] : memref<128x128xf32, #tpu.memory_space<vmem>>, vector<128x128xf32>
      %c0_12 = arith.constant 0 : index
      %c0_13 = arith.constant 0 : index
      %14 = vector.load %arg5[%c0_12, %c0_13] : memref<128x1xf32, #tpu.memory_space<vmem>>, vector<128x1xf32>
      %15 = vector.broadcast %14 : vector<128x1xf32> to vector<128x128xf32>
      %16 = arith.mulf %13, %15 : vector<128x128xf32>
      %c0_14 = arith.constant 0 : index
      %c0_15 = arith.constant 0 : index
      %17 = vector.load %arg11[%c0_14, %c0_15] : memref<128x256xf32, #tpu.memory_space<vmem>>, vector<128x256xf32>
      %c0_16 = arith.constant 0 : index
      %c0_17 = arith.constant 0 : index
      %18 = vector.load %arg6[%c0_16, %c0_17] : memref<128x128xf32, #tpu.memory_space<vmem>>, vector<128x128xf32>
      %cst_18 = arith.constant dense<0.000000e+00> : vector<128x128xf32>
      %19 = tpu.matmul %16, %18, %cst_18 {dimension_numbers = #tpu.dot_dimension_numbers<[1], [0], [0], [1], [0, 0, 1, 1], [], []>} : vector<128x128xf32>, vector<128x128xf32>, vector<128x128xf32> -> vector<128x128xf32>
      %20 = vector.extract_strided_slice %17 {offsets = [0, 0], sizes = [128, 128], strides = [1, 1]} : vector<128x256xf32> to vector<128x128xf32>
      %21 = arith.addf %19, %20 : vector<128x128xf32>
      %cst_19 = arith.constant 0.000000e+00 : f32
      %22 = vector.broadcast %cst_19 : f32 to vector<128x128xf32>
      %23 = arith.maximumf %21, %22 : vector<128x128xf32>
      %24 = vector.extract_strided_slice %17 {offsets = [0, 128], sizes = [128, 128], strides = [1, 1]} : vector<128x256xf32> to vector<128x128xf32>
      %25 = arith.addf %23, %24 : vector<128x128xf32>
      %26 = arith.truncf %25 : vector<128x128xf32> to vector<128x128xbf16>
      %c0_20 = arith.constant 0 : index
      %c0_21 = arith.constant 0 : index
      %27 = vector.load %arg9[%c0_20, %c0_21] : memref<128x128xbf16, #tpu.memory_space<vmem>>, vector<128x128xbf16>
      tpu.vector_store %arg9[%c0_20, %c0_21], %26 {strides = array<i32>} : memref<128x128xbf16, #tpu.memory_space<vmem>>, vector<128x128xbf16>,
    } else {
    }
    return
  }
  func.func @transform_0(%arg0: i32, %arg1: i32) -> (i32, i32) {
    %c0_i32 = arith.constant 0 : i32
    return %arg0, %arg1 : i32, i32
  }
  func.func @transform_1(%arg0: i32, %arg1: i32) -> (i32, i32) {
    %c0_i32 = arith.constant 0 : i32
    %c0_i32_0 = arith.constant 0 : i32
    return %arg1, %c0_i32 : i32, i32
  }
  func.func @transform_2(%arg0: i32, %arg1: i32) -> (i32, i32) {
    %c0_i32 = arith.constant 0 : i32
    %c0_i32_0 = arith.constant 0 : i32
    return %arg0, %c0_i32 : i32, i32
  }
  func.func @transform_3(%arg0: i32, %arg1: i32) -> (i32, i32) {
    %c0_i32 = arith.constant 0 : i32
    %c0_i32_0 = arith.constant 0 : i32
    return %arg0, %c0_i32 : i32, i32
  }
  func.func @transform_4(%arg0: i32, %arg1: i32) -> (i32, i32) {
    %c0_i32 = arith.constant 0 : i32
    %c0_i32_0 = arith.constant 0 : i32
    %c0_i32_1 = arith.constant 0 : i32
    return %c0_i32, %c0_i32_0 : i32, i32
  }
  func.func @transform_5(%arg0: i32, %arg1: i32) -> (i32, i32) {
    %c0_i32 = arith.constant 0 : i32
    %c0_i32_0 = arith.constant 0 : i32
    %c0_i32_1 = arith.constant 0 : i32
    return %c0_i32, %c0_i32_0 : i32, i32
  }
  func.func @transform_6(%arg0: i32, %arg1: i32) -> (i32, i32) {
    %c0_i32 = arith.constant 0 : i32
    %c0_i32_0 = arith.constant 0 : i32
    %c0_i32_1 = arith.constant 0 : i32
    return %c0_i32, %c0_i32_0 : i32, i32
  }
  func.func @transform_7(%arg0: i32, %arg1: i32) -> (i32, i32) {
    %c0_i32 = arith.constant 0 : i32
    %c0_i32_0 = arith.constant 0 : i32
    return %arg0, %c0_i32 : i32, i32
  }
}

module attributes {stable_mosaic.version = 11 : i64} {
  func.func @_sage_block_kernel(%arg0: i32, %arg1: i32, %arg2: memref<128x128xi8, #tpu.memory_space<vmem>>, %arg3: memref<128x16xbf16, #tpu.memory_space<vmem>>, %arg4: memref<128x16xbf16, #tpu.memory_space<vmem>>, %arg5: memref<128x1xf32, #tpu.memory_space<vmem>>, %arg6: memref<16x128xf32, #tpu.memory_space<vmem>>, %arg7: memref<16x256xf32, #tpu.memory_space<vmem>>, %arg8: memref<1x256xf32, #tpu.memory_space<vmem>>, %arg9: memref<128x128xbf16, #tpu.memory_space<vmem>>, %arg10: memref<128x16xf32, #tpu.memory_space<vmem>>, %arg11: memref<128x256xf32, #tpu.memory_space<vmem>>) attributes {dimension_semantics = [#tpu.dimension_semantics<parallel>, #tpu.dimension_semantics<arbitrary>], iteration_bounds = array<i64: 1, 1>, scalar_prefetch = 0 : i64, scratch_operands = 2 : i64, tpu.core_type = #tpu.core_type<tc>, window_params = [{transform_indices = @transform_0, window_bounds = array<i64: 128, 128>}, {transform_indices = @transform_1, window_bounds = array<i64: 128, 16>}, {transform_indices = @transform_2, window_bounds = array<i64: 128, 16>}, {transform_indices = @transform_3, window_bounds = array<i64: 128, 1>}, {pipeline_mode = #tpu.pipeline_mode<synchronous>, transform_indices = @transform_4, window_bounds = array<i64: 16, 128>}, {pipeline_mode = #tpu.pipeline_mode<synchronous>, transform_indices = @transform_5, window_bounds = array<i64: 16, 256>}, {pipeline_mode = #tpu.pipeline_mode<synchronous>, transform_indices = @transform_6, window_bounds = array<i64: 1, 256>}, {transform_indices = @transform_7, window_bounds = array<i64: 128, 128>}]} {
    %c0_i32 = arith.constant 0 : i32
    %0 = arith.cmpi eq, %arg1, %c0_i32 : i32
    %1 = arith.extui %0 : i1 to i32
    %c0_i32_0 = arith.constant 0 : i32
    %2 = arith.cmpi ne, %1, %c0_i32_0 : i32
    scf.if %2 {
      %cst_10 = arith.constant 0.000000e+00 : f32
      %13 = vector.broadcast %cst_10 : f32 to vector<128x16xf32>
      %c0_11 = arith.constant 0 : index
      %c0_12 = arith.constant 0 : index
      %14 = vector.load %arg10[%c0_11, %c0_12] : memref<128x16xf32, #tpu.memory_space<vmem>>, vector<128x16xf32>
      tpu.vector_store %arg10[%c0_11, %c0_12], %13 {strides = array<i32>} : memref<128x16xf32, #tpu.memory_space<vmem>>, vector<128x16xf32>,
      %c0_13 = arith.constant 0 : index
      %c0_14 = arith.constant 0 : index
      %15 = vector.load %arg4[%c0_13, %c0_14] : memref<128x16xbf16, #tpu.memory_space<vmem>>, vector<128x16xbf16>
      %16 = arith.extf %15 : vector<128x16xbf16> to vector<128x16xf32>
      %c0_15 = arith.constant 0 : index
      %c0_16 = arith.constant 0 : index
      %17 = vector.load %arg7[%c0_15, %c0_16] : memref<16x256xf32, #tpu.memory_space<vmem>>, vector<16x256xf32>
      %cst_17 = arith.constant dense<0.000000e+00> : vector<128x256xf32>
      %18 = tpu.matmul %16, %17, %cst_17 {dimension_numbers = #tpu.dot_dimension_numbers<[1], [0], [0], [1], [0, 0, 1, 1], [], []>} : vector<128x16xf32>, vector<16x256xf32>, vector<128x256xf32> -> vector<128x256xf32>
      %c0_18 = arith.constant 0 : index
      %c0_19 = arith.constant 0 : index
      %19 = vector.load %arg8[%c0_18, %c0_19] : memref<1x256xf32, #tpu.memory_space<vmem>>, vector<1x256xf32>
      %20 = vector.broadcast %19 : vector<1x256xf32> to vector<128x256xf32>
      %21 = arith.addf %18, %20 : vector<128x256xf32>
      %c0_20 = arith.constant 0 : index
      %c0_21 = arith.constant 0 : index
      %22 = vector.load %arg11[%c0_20, %c0_21] : memref<128x256xf32, #tpu.memory_space<vmem>>, vector<128x256xf32>
      tpu.vector_store %arg11[%c0_20, %c0_21], %21 {strides = array<i32>} : memref<128x256xf32, #tpu.memory_space<vmem>>, vector<128x256xf32>,
    } else {
    }
    %c0 = arith.constant 0 : index
    %c0_1 = arith.constant 0 : index
    %3 = vector.load %arg10[%c0, %c0_1] : memref<128x16xf32, #tpu.memory_space<vmem>>, vector<128x16xf32>
    %c0_2 = arith.constant 0 : index
    %c0_3 = arith.constant 0 : index
    %4 = vector.load %arg2[%c0_2, %c0_3] : memref<128x128xi8, #tpu.memory_space<vmem>>, vector<128x128xi8>
    %5 = arith.sitofp %4 : vector<128x128xi8> to vector<128x128xbf16>
    %c0_4 = arith.constant 0 : index
    %c0_5 = arith.constant 0 : index
    %6 = vector.load %arg3[%c0_4, %c0_5] : memref<128x16xbf16, #tpu.memory_space<vmem>>, vector<128x16xbf16>
    %cst = arith.constant dense<0.000000e+00> : vector<128x16xf32>
    %7 = tpu.matmul %5, %6, %cst {dimension_numbers = #tpu.dot_dimension_numbers<[1], [0], [0], [1], [0, 0, 1, 1], [], []>} : vector<128x128xbf16>, vector<128x16xbf16>, vector<128x16xf32> -> vector<128x16xf32>
    %8 = arith.addf %3, %7 : vector<128x16xf32>
    %c0_6 = arith.constant 0 : index
    %c0_7 = arith.constant 0 : index
    %9 = vector.load %arg10[%c0_6, %c0_7] : memref<128x16xf32, #tpu.memory_space<vmem>>, vector<128x16xf32>
    tpu.vector_store %arg10[%c0_6, %c0_7], %8 {strides = array<i32>} : memref<128x16xf32, #tpu.memory_space<vmem>>, vector<128x16xf32>,
    %c0_i32_8 = arith.constant 0 : i32
    %10 = arith.cmpi eq, %arg1, %c0_i32_8 : i32
    %11 = arith.extui %10 : i1 to i32
    %c0_i32_9 = arith.constant 0 : i32
    %12 = arith.cmpi ne, %11, %c0_i32_9 : i32
    scf.if %12 {
      %c0_10 = arith.constant 0 : index
      %c0_11 = arith.constant 0 : index
      %13 = vector.load %arg10[%c0_10, %c0_11] : memref<128x16xf32, #tpu.memory_space<vmem>>, vector<128x16xf32>
      %c0_12 = arith.constant 0 : index
      %c0_13 = arith.constant 0 : index
      %14 = vector.load %arg5[%c0_12, %c0_13] : memref<128x1xf32, #tpu.memory_space<vmem>>, vector<128x1xf32>
      %15 = vector.broadcast %14 : vector<128x1xf32> to vector<128x16xf32>
      %16 = arith.mulf %13, %15 : vector<128x16xf32>
      %c0_14 = arith.constant 0 : index
      %c0_15 = arith.constant 0 : index
      %17 = vector.load %arg11[%c0_14, %c0_15] : memref<128x256xf32, #tpu.memory_space<vmem>>, vector<128x256xf32>
      %c0_16 = arith.constant 0 : index
      %c0_17 = arith.constant 0 : index
      %18 = vector.load %arg6[%c0_16, %c0_17] : memref<16x128xf32, #tpu.memory_space<vmem>>, vector<16x128xf32>
      %cst_18 = arith.constant dense<0.000000e+00> : vector<128x128xf32>
      %19 = tpu.matmul %16, %18, %cst_18 {dimension_numbers = #tpu.dot_dimension_numbers<[1], [0], [0], [1], [0, 0, 1, 1], [], []>} : vector<128x16xf32>, vector<16x128xf32>, vector<128x128xf32> -> vector<128x128xf32>
      %20 = vector.extract_strided_slice %17 {offsets = [0, 0], sizes = [128, 128], strides = [1, 1]} : vector<128x256xf32> to vector<128x128xf32>
      %21 = arith.addf %19, %20 : vector<128x128xf32>
      %cst_19 = arith.constant 0.000000e+00 : f32
      %22 = vector.broadcast %cst_19 : f32 to vector<128x128xf32>
      %23 = arith.maximumf %21, %22 : vector<128x128xf32>
      %24 = vector.extract_strided_slice %17 {offsets = [0, 128], sizes = [128, 128], strides = [1, 1]} : vector<128x256xf32> to vector<128x128xf32>
      %25 = arith.addf %23, %24 : vector<128x128xf32>
      %26 = arith.truncf %25 : vector<128x128xf32> to vector<128x128xbf16>
      %c0_20 = arith.constant 0 : index
      %c0_21 = arith.constant 0 : index
      %27 = vector.load %arg9[%c0_20, %c0_21] : memref<128x128xbf16, #tpu.memory_space<vmem>>, vector<128x128xbf16>
      tpu.vector_store %arg9[%c0_20, %c0_21], %26 {strides = array<i32>} : memref<128x128xbf16, #tpu.memory_space<vmem>>, vector<128x128xbf16>,
    } else {
    }
    return
  }
  func.func @transform_0(%arg0: i32, %arg1: i32) -> (i32, i32) {
    %c0_i32 = arith.constant 0 : i32
    return %arg0, %arg1 : i32, i32
  }
  func.func @transform_1(%arg0: i32, %arg1: i32) -> (i32, i32) {
    %c0_i32 = arith.constant 0 : i32
    %c0_i32_0 = arith.constant 0 : i32
    return %arg1, %c0_i32 : i32, i32
  }
  func.func @transform_2(%arg0: i32, %arg1: i32) -> (i32, i32) {
    %c0_i32 = arith.constant 0 : i32
    %c0_i32_0 = arith.constant 0 : i32
    return %arg0, %c0_i32 : i32, i32
  }
  func.func @transform_3(%arg0: i32, %arg1: i32) -> (i32, i32) {
    %c0_i32 = arith.constant 0 : i32
    %c0_i32_0 = arith.constant 0 : i32
    return %arg0, %c0_i32 : i32, i32
  }
  func.func @transform_4(%arg0: i32, %arg1: i32) -> (i32, i32) {
    %c0_i32 = arith.constant 0 : i32
    %c0_i32_0 = arith.constant 0 : i32
    %c0_i32_1 = arith.constant 0 : i32
    return %c0_i32, %c0_i32_0 : i32, i32
  }
  func.func @transform_5(%arg0: i32, %arg1: i32) -> (i32, i32) {
    %c0_i32 = arith.constant 0 : i32
    %c0_i32_0 = arith.constant 0 : i32
    %c0_i32_1 = arith.constant 0 : i32
    return %c0_i32, %c0_i32_0 : i32, i32
  }
  func.func @transform_6(%arg0: i32, %arg1: i32) -> (i32, i32) {
    %c0_i32 = arith.constant 0 : i32
    %c0_i32_0 = arith.constant 0 : i32
    %c0_i32_1 = arith.constant 0 : i32
    return %c0_i32, %c0_i32_0 : i32, i32
  }
  func.func @transform_7(%arg0: i32, %arg1: i32) -> (i32, i32) {
    %c0_i32 = arith.constant 0 : i32
    %c0_i32_0 = arith.constant 0 : i32
    return %arg0, %c0_i32 : i32, i32
  }
}

module attributes {stable_mosaic.version = 11 : i64} {
  func.func @_sage_head_kernel(%arg0: i32, %arg1: i32, %arg2: memref<128x128xi8, #tpu.memory_space<vmem>>, %arg3: memref<128x128xbf16, #tpu.memory_space<vmem>>, %arg4: memref<128x128xbf16, #tpu.memory_space<vmem>>, %arg5: memref<128x1xf32, #tpu.memory_space<vmem>>, %arg6: memref<128x128xf32, #tpu.memory_space<vmem>>, %arg7: memref<128x128xf32, #tpu.memory_space<vmem>>, %arg8: memref<1x128xf32, #tpu.memory_space<vmem>>, %arg9: memref<128x128xf32, #tpu.memory_space<vmem>>, %arg10: memref<1x128xf32, #tpu.memory_space<vmem>>, %arg11: memref<128x128xf32, #tpu.memory_space<vmem>>, %arg12: memref<1x128xf32, #tpu.memory_space<vmem>>, %arg13: memref<128x128xf32, #tpu.memory_space<vmem>>, %arg14: memref<1x128xf32, #tpu.memory_space<vmem>>, %arg15: memref<128x128xf32, #tpu.memory_space<vmem>>, %arg16: memref<128x128xf32, #tpu.memory_space<vmem>>, %arg17: memref<128x128xf32, #tpu.memory_space<vmem>>, %arg18: memref<128x128xf32, #tpu.memory_space<vmem>>) attributes {dimension_semantics = [#tpu.dimension_semantics<parallel>, #tpu.dimension_semantics<arbitrary>], iteration_bounds = array<i64: 1, 1>, scalar_prefetch = 0 : i64, scratch_operands = 2 : i64, tpu.core_type = #tpu.core_type<tc>, window_params = [{transform_indices = @transform_0, window_bounds = array<i64: 128, 128>}, {transform_indices = @transform_1, window_bounds = array<i64: 128, 128>}, {transform_indices = @transform_2, window_bounds = array<i64: 128, 128>}, {transform_indices = @transform_3, window_bounds = array<i64: 128, 1>}, {pipeline_mode = #tpu.pipeline_mode<synchronous>, transform_indices = @transform_4, window_bounds = array<i64: 128, 128>}, {pipeline_mode = #tpu.pipeline_mode<synchronous>, transform_indices = @transform_5, window_bounds = array<i64: 128, 128>}, {pipeline_mode = #tpu.pipeline_mode<synchronous>, transform_indices = @transform_6, window_bounds = array<i64: 1, 128>}, {pipeline_mode = #tpu.pipeline_mode<synchronous>, transform_indices = @transform_7, window_bounds = array<i64: 128, 128>}, {pipeline_mode = #tpu.pipeline_mode<synchronous>, transform_indices = @transform_8, window_bounds = array<i64: 1, 128>}, {pipeline_mode = #tpu.pipeline_mode<synchronous>, transform_indices = @transform_9, window_bounds = array<i64: 128, 128>}, {pipeline_mode = #tpu.pipeline_mode<synchronous>, transform_indices = @transform_10, window_bounds = array<i64: 1, 128>}, {pipeline_mode = #tpu.pipeline_mode<synchronous>, transform_indices = @transform_11, window_bounds = array<i64: 128, 128>}, {pipeline_mode = #tpu.pipeline_mode<synchronous>, transform_indices = @transform_12, window_bounds = array<i64: 1, 128>}, {transform_indices = @transform_13, window_bounds = array<i64: 128, 128>}, {transform_indices = @transform_14, window_bounds = array<i64: 128, 128>}]} {
    %c0_i32 = arith.constant 0 : i32
    %0 = arith.cmpi eq, %arg1, %c0_i32 : i32
    %1 = arith.extui %0 : i1 to i32
    %c0_i32_0 = arith.constant 0 : i32
    %2 = arith.cmpi ne, %1, %c0_i32_0 : i32
    scf.if %2 {
      %cst_10 = arith.constant 0.000000e+00 : f32
      %13 = vector.broadcast %cst_10 : f32 to vector<128x128xf32>
      %c0_11 = arith.constant 0 : index
      %c0_12 = arith.constant 0 : index
      %14 = vector.load %arg17[%c0_11, %c0_12] : memref<128x128xf32, #tpu.memory_space<vmem>>, vector<128x128xf32>
      tpu.vector_store %arg17[%c0_11, %c0_12], %13 {strides = array<i32>} : memref<128x128xf32, #tpu.memory_space<vmem>>, vector<128x128xf32>,
      %c0_13 = arith.constant 0 : index
      %c0_14 = arith.constant 0 : index
      %15 = vector.load %arg4[%c0_13, %c0_14] : memref<128x128xbf16, #tpu.memory_space<vmem>>, vector<128x128xbf16>
      %16 = arith.extf %15 : vector<128x128xbf16> to vector<128x128xf32>
      %c0_15 = arith.constant 0 : index
      %c0_16 = arith.constant 0 : index
      %17 = vector.load %arg7[%c0_15, %c0_16] : memref<128x128xf32, #tpu.memory_space<vmem>>, vector<128x128xf32>
      %cst_17 = arith.constant dense<0.000000e+00> : vector<128x128xf32>
      %18 = tpu.matmul %16, %17, %cst_17 {dimension_numbers = #tpu.dot_dimension_numbers<[1], [0], [0], [1], [0, 0, 1, 1], [], []>} : vector<128x128xf32>, vector<128x128xf32>, vector<128x128xf32> -> vector<128x128xf32>
      %c0_18 = arith.constant 0 : index
      %c0_19 = arith.constant 0 : index
      %19 = vector.load %arg8[%c0_18, %c0_19] : memref<1x128xf32, #tpu.memory_space<vmem>>, vector<1x128xf32>
      %20 = vector.broadcast %19 : vector<1x128xf32> to vector<128x128xf32>
      %21 = arith.addf %18, %20 : vector<128x128xf32>
      %c0_20 = arith.constant 0 : index
      %c0_21 = arith.constant 0 : index
      %22 = vector.load %arg18[%c0_20, %c0_21] : memref<128x128xf32, #tpu.memory_space<vmem>>, vector<128x128xf32>
      tpu.vector_store %arg18[%c0_20, %c0_21], %21 {strides = array<i32>} : memref<128x128xf32, #tpu.memory_space<vmem>>, vector<128x128xf32>,
    } else {
    }
    %c0 = arith.constant 0 : index
    %c0_1 = arith.constant 0 : index
    %3 = vector.load %arg17[%c0, %c0_1] : memref<128x128xf32, #tpu.memory_space<vmem>>, vector<128x128xf32>
    %c0_2 = arith.constant 0 : index
    %c0_3 = arith.constant 0 : index
    %4 = vector.load %arg2[%c0_2, %c0_3] : memref<128x128xi8, #tpu.memory_space<vmem>>, vector<128x128xi8>
    %5 = arith.sitofp %4 : vector<128x128xi8> to vector<128x128xbf16>
    %c0_4 = arith.constant 0 : index
    %c0_5 = arith.constant 0 : index
    %6 = vector.load %arg3[%c0_4, %c0_5] : memref<128x128xbf16, #tpu.memory_space<vmem>>, vector<128x128xbf16>
    %cst = arith.constant dense<0.000000e+00> : vector<128x128xf32>
    %7 = tpu.matmul %5, %6, %cst {dimension_numbers = #tpu.dot_dimension_numbers<[1], [0], [0], [1], [0, 0, 1, 1], [], []>} : vector<128x128xbf16>, vector<128x128xbf16>, vector<128x128xf32> -> vector<128x128xf32>
    %8 = arith.addf %3, %7 : vector<128x128xf32>
    %c0_6 = arith.constant 0 : index
    %c0_7 = arith.constant 0 : index
    %9 = vector.load %arg17[%c0_6, %c0_7] : memref<128x128xf32, #tpu.memory_space<vmem>>, vector<128x128xf32>
    tpu.vector_store %arg17[%c0_6, %c0_7], %8 {strides = array<i32>} : memref<128x128xf32, #tpu.memory_space<vmem>>, vector<128x128xf32>,
    %c0_i32_8 = arith.constant 0 : i32
    %10 = arith.cmpi eq, %arg1, %c0_i32_8 : i32
    %11 = arith.extui %10 : i1 to i32
    %c0_i32_9 = arith.constant 0 : i32
    %12 = arith.cmpi ne, %11, %c0_i32_9 : i32
    scf.if %12 {
      %c0_10 = arith.constant 0 : index
      %c0_11 = arith.constant 0 : index
      %13 = vector.load %arg17[%c0_10, %c0_11] : memref<128x128xf32, #tpu.memory_space<vmem>>, vector<128x128xf32>
      %c0_12 = arith.constant 0 : index
      %c0_13 = arith.constant 0 : index
      %14 = vector.load %arg5[%c0_12, %c0_13] : memref<128x1xf32, #tpu.memory_space<vmem>>, vector<128x1xf32>
      %15 = vector.broadcast %14 : vector<128x1xf32> to vector<128x128xf32>
      %16 = arith.mulf %13, %15 : vector<128x128xf32>
      %c0_14 = arith.constant 0 : index
      %c0_15 = arith.constant 0 : index
      %17 = vector.load %arg6[%c0_14, %c0_15] : memref<128x128xf32, #tpu.memory_space<vmem>>, vector<128x128xf32>
      %cst_16 = arith.constant dense<0.000000e+00> : vector<128x128xf32>
      %18 = tpu.matmul %16, %17, %cst_16 {dimension_numbers = #tpu.dot_dimension_numbers<[1], [0], [0], [1], [0, 0, 1, 1], [], []>} : vector<128x128xf32>, vector<128x128xf32>, vector<128x128xf32> -> vector<128x128xf32>
      %c0_17 = arith.constant 0 : index
      %c0_18 = arith.constant 0 : index
      %19 = vector.load %arg18[%c0_17, %c0_18] : memref<128x128xf32, #tpu.memory_space<vmem>>, vector<128x128xf32>
      %20 = arith.addf %18, %19 : vector<128x128xf32>
      %c0_19 = arith.constant 0 : index
      %c0_20 = arith.constant 0 : index
      %21 = vector.load %arg9[%c0_19, %c0_20] : memref<128x128xf32, #tpu.memory_space<vmem>>, vector<128x128xf32>
      %cst_21 = arith.constant dense<0.000000e+00> : vector<128x128xf32>
      %22 = tpu.matmul %20, %21, %cst_21 {dimension_numbers = #tpu.dot_dimension_numbers<[1], [0], [0], [1], [0, 0, 1, 1], [], []>} : vector<128x128xf32>, vector<128x128xf32>, vector<128x128xf32> -> vector<128x128xf32>
      %c0_22 = arith.constant 0 : index
      %c0_23 = arith.constant 0 : index
      %23 = vector.load %arg10[%c0_22, %c0_23] : memref<1x128xf32, #tpu.memory_space<vmem>>, vector<1x128xf32>
      %24 = vector.broadcast %23 : vector<1x128xf32> to vector<128x128xf32>
      %25 = arith.addf %22, %24 : vector<128x128xf32>
      %cst_24 = arith.constant 0.000000e+00 : f32
      %26 = vector.broadcast %cst_24 : f32 to vector<128x128xf32>
      %27 = arith.maximumf %25, %26 : vector<128x128xf32>
      %c0_25 = arith.constant 0 : index
      %c0_26 = arith.constant 0 : index
      %28 = vector.load %arg11[%c0_25, %c0_26] : memref<128x128xf32, #tpu.memory_space<vmem>>, vector<128x128xf32>
      %cst_27 = arith.constant dense<0.000000e+00> : vector<128x128xf32>
      %29 = tpu.matmul %27, %28, %cst_27 {dimension_numbers = #tpu.dot_dimension_numbers<[1], [0], [0], [1], [0, 0, 1, 1], [], []>} : vector<128x128xf32>, vector<128x128xf32>, vector<128x128xf32> -> vector<128x128xf32>
      %c0_28 = arith.constant 0 : index
      %c0_29 = arith.constant 0 : index
      %30 = vector.load %arg12[%c0_28, %c0_29] : memref<1x128xf32, #tpu.memory_space<vmem>>, vector<1x128xf32>
      %31 = vector.broadcast %30 : vector<1x128xf32> to vector<128x128xf32>
      %32 = arith.addf %29, %31 : vector<128x128xf32>
      %c0_30 = arith.constant 0 : index
      %c0_31 = arith.constant 0 : index
      %33 = vector.load %arg13[%c0_30, %c0_31] : memref<128x128xf32, #tpu.memory_space<vmem>>, vector<128x128xf32>
      %cst_32 = arith.constant dense<0.000000e+00> : vector<128x128xf32>
      %34 = tpu.matmul %32, %33, %cst_32 {dimension_numbers = #tpu.dot_dimension_numbers<[1], [0], [0], [1], [0, 0, 1, 1], [], []>} : vector<128x128xf32>, vector<128x128xf32>, vector<128x128xf32> -> vector<128x128xf32>
      %c0_33 = arith.constant 0 : index
      %c0_34 = arith.constant 0 : index
      %35 = vector.load %arg14[%c0_33, %c0_34] : memref<1x128xf32, #tpu.memory_space<vmem>>, vector<1x128xf32>
      %36 = vector.broadcast %35 : vector<1x128xf32> to vector<128x128xf32>
      %37 = arith.addf %34, %36 : vector<128x128xf32>
      %c0_35 = arith.constant 0 : index
      %c0_36 = arith.constant 0 : index
      %38 = vector.load %arg16[%c0_35, %c0_36] : memref<128x128xf32, #tpu.memory_space<vmem>>, vector<128x128xf32>
      tpu.vector_store %arg16[%c0_35, %c0_36], %32 {strides = array<i32>} : memref<128x128xf32, #tpu.memory_space<vmem>>, vector<128x128xf32>,
      %c0_37 = arith.constant 0 : index
      %c0_38 = arith.constant 0 : index
      %39 = vector.load %arg15[%c0_37, %c0_38] : memref<128x128xf32, #tpu.memory_space<vmem>>, vector<128x128xf32>
      tpu.vector_store %arg15[%c0_37, %c0_38], %37 {strides = array<i32>} : memref<128x128xf32, #tpu.memory_space<vmem>>, vector<128x128xf32>,
    } else {
    }
    return
  }
  func.func @transform_0(%arg0: i32, %arg1: i32) -> (i32, i32) {
    %c0_i32 = arith.constant 0 : i32
    return %arg0, %arg1 : i32, i32
  }
  func.func @transform_1(%arg0: i32, %arg1: i32) -> (i32, i32) {
    %c0_i32 = arith.constant 0 : i32
    %c0_i32_0 = arith.constant 0 : i32
    return %arg1, %c0_i32 : i32, i32
  }
  func.func @transform_2(%arg0: i32, %arg1: i32) -> (i32, i32) {
    %c0_i32 = arith.constant 0 : i32
    %c0_i32_0 = arith.constant 0 : i32
    return %arg0, %c0_i32 : i32, i32
  }
  func.func @transform_3(%arg0: i32, %arg1: i32) -> (i32, i32) {
    %c0_i32 = arith.constant 0 : i32
    %c0_i32_0 = arith.constant 0 : i32
    return %arg0, %c0_i32 : i32, i32
  }
  func.func @transform_4(%arg0: i32, %arg1: i32) -> (i32, i32) {
    %c0_i32 = arith.constant 0 : i32
    %c0_i32_0 = arith.constant 0 : i32
    %c0_i32_1 = arith.constant 0 : i32
    return %c0_i32, %c0_i32_0 : i32, i32
  }
  func.func @transform_5(%arg0: i32, %arg1: i32) -> (i32, i32) {
    %c0_i32 = arith.constant 0 : i32
    %c0_i32_0 = arith.constant 0 : i32
    %c0_i32_1 = arith.constant 0 : i32
    return %c0_i32, %c0_i32_0 : i32, i32
  }
  func.func @transform_6(%arg0: i32, %arg1: i32) -> (i32, i32) {
    %c0_i32 = arith.constant 0 : i32
    %c0_i32_0 = arith.constant 0 : i32
    %c0_i32_1 = arith.constant 0 : i32
    return %c0_i32, %c0_i32_0 : i32, i32
  }
  func.func @transform_7(%arg0: i32, %arg1: i32) -> (i32, i32) {
    %c0_i32 = arith.constant 0 : i32
    %c0_i32_0 = arith.constant 0 : i32
    %c0_i32_1 = arith.constant 0 : i32
    return %c0_i32, %c0_i32_0 : i32, i32
  }
  func.func @transform_8(%arg0: i32, %arg1: i32) -> (i32, i32) {
    %c0_i32 = arith.constant 0 : i32
    %c0_i32_0 = arith.constant 0 : i32
    %c0_i32_1 = arith.constant 0 : i32
    return %c0_i32, %c0_i32_0 : i32, i32
  }
  func.func @transform_9(%arg0: i32, %arg1: i32) -> (i32, i32) {
    %c0_i32 = arith.constant 0 : i32
    %c0_i32_0 = arith.constant 0 : i32
    %c0_i32_1 = arith.constant 0 : i32
    return %c0_i32, %c0_i32_0 : i32, i32
  }
  func.func @transform_10(%arg0: i32, %arg1: i32) -> (i32, i32) {
    %c0_i32 = arith.constant 0 : i32
    %c0_i32_0 = arith.constant 0 : i32
    %c0_i32_1 = arith.constant 0 : i32
    return %c0_i32, %c0_i32_0 : i32, i32
  }
  func.func @transform_11(%arg0: i32, %arg1: i32) -> (i32, i32) {
    %c0_i32 = arith.constant 0 : i32
    %c0_i32_0 = arith.constant 0 : i32
    %c0_i32_1 = arith.constant 0 : i32
    return %c0_i32, %c0_i32_0 : i32, i32
  }
  func.func @transform_12(%arg0: i32, %arg1: i32) -> (i32, i32) {
    %c0_i32 = arith.constant 0 : i32
    %c0_i32_0 = arith.constant 0 : i32
    %c0_i32_1 = arith.constant 0 : i32
    return %c0_i32, %c0_i32_0 : i32, i32
  }
  func.func @transform_13(%arg0: i32, %arg1: i32) -> (i32, i32) {
    %c0_i32 = arith.constant 0 : i32
    %c0_i32_0 = arith.constant 0 : i32
    return %arg0, %c0_i32 : i32, i32
  }
  func.func @transform_14(%arg0: i32, %arg1: i32) -> (i32, i32) {
    %c0_i32 = arith.constant 0 : i32
    %c0_i32_0 = arith.constant 0 : i32
    return %arg0, %c0_i32 : i32, i32
  }
}

</mosaic_0001>

<llo_original>
// kernel: enhanced_sage_forward.3
$region0: #{enhanced_sage_forward.3}
  #allocation0 [shape = 'u32[]', space=smem, size = 0x4, offset = 0x4, fixed_abs, tag = 'smem constant byte address 0x4 - core index']
  #allocation1 [shape = 'u32[144,128]{1,0:T(1,128)}', space=vmem, size = 0x12000, scoped, tag = 'internal scratch']
  #allocation2 [shape = 'f32[128,16]{1,0:T(8,128)}', space=vmem, size = 0x10000, scoped, tag = 'scratch operand']
  #allocation3 [shape = 'f32[128,256]{1,0:T(8,128)}', space=vmem, size = 0x20000, scoped, tag = 'scratch operand']
  %s0 = inlined_call_operand.vmem [shape: s8[128,128], index: 0, kind: input, shape index: {}]
  %s1 = inlined_call_operand.vmem [shape: bf16[128,16], index: 1, kind: input, shape index: {}, may-alias: {1,2}]
  %s2 = inlined_call_operand.vmem [shape: bf16[128,16], index: 2, kind: input, shape index: {}, may-alias: {1,2}]
  %s3 = inlined_call_operand.vmem [shape: f32[128,1], index: 3, kind: input, shape index: {}]
  %s4 = inlined_call_operand.vmem [shape: f32[16,128], index: 4, kind: input, shape index: {}]
  %s5 = inlined_call_operand.vmem [shape: f32[16,256], index: 5, kind: input, shape index: {}]
  %s6 = inlined_call_operand.vmem [shape: f32[1,256], index: 6, kind: input, shape index: {}]
  %s7 = inlined_call_operand.vmem [shape: bf16[128,128], index: 7, kind: output, shape index: {}]
  %s8 = sld [smem:[#allocation0]]
  $region46: #{enhanced_sage_forward.3} parent=0
    _
  %s10 = ssub.s32 1, %s8
  %s11 = scalar_select 0, %s10, %s8
  // Predicated region
  $region2: #{enhanced_sage_forward.3} parent=0 // pred_check
    _
  $region3: #{enhanced_sage_forward.3} parent=0 // pred_check_branch
    %13 = sbr.rel (0) target = $region5
  $region4: #{enhanced_sage_forward.3} parent=0 // pred_region
    _
  $region5: #{enhanced_sage_forward.3} parent=0 // pred_fallthru
    _
  // Predicated region
  $region6: #{enhanced_sage_forward.3} parent=0 // pred_check
    _
  $region7: #{enhanced_sage_forward.3} parent=0 // pred_check_branch
    %15 = sbr.rel (0) target = $region9
  $region8: #{enhanced_sage_forward.3} parent=0 // pred_region
    _
  $region9: #{enhanced_sage_forward.3} parent=0 // pred_fallthru
    _
  // Predicated region
  $region10: #{enhanced_sage_forward.3} parent=0 // pred_check
    _
  $region11: #{enhanced_sage_forward.3} parent=0 // pred_check_branch
    %17 = sbr.rel (0) target = $region13
  $region12: #{enhanced_sage_forward.3} parent=0 // pred_region
    _
  $region13: #{enhanced_sage_forward.3} parent=0 // pred_fallthru
    _
  // Predicated region
  $region14: #{enhanced_sage_forward.3} parent=0 // pred_check
    _
  $region15: #{enhanced_sage_forward.3} parent=0 // pred_check_branch
    %19 = sbr.rel (0) target = $region17
  $region16: #{enhanced_sage_forward.3} parent=0 // pred_region
    _
  $region17: #{enhanced_sage_forward.3} parent=0 // pred_fallthru
    _
  // Predicated region
  $region18: #{enhanced_sage_forward.3} parent=0 // pred_check
    _
  $region19: #{enhanced_sage_forward.3} parent=0 // pred_check_branch
    %21 = sbr.rel (0) target = $region21
  $region20: #{enhanced_sage_forward.3} parent=0 // pred_region
    _
  $region21: #{enhanced_sage_forward.3} parent=0 // pred_fallthru
    _
  // Predicated region
  $region22: #{enhanced_sage_forward.3} parent=0 // pred_check
    _
  $region23: #{enhanced_sage_forward.3} parent=0 // pred_check_branch
    %23 = sbr.rel (0) target = $region25
  $region24: #{enhanced_sage_forward.3} parent=0 // pred_region
    _
  $region25: #{enhanced_sage_forward.3} parent=0 // pred_fallthru
    _
  // Predicated region
  $region26: #{enhanced_sage_forward.3} parent=0 // pred_check
    _
  $region27: #{enhanced_sage_forward.3} parent=0 // pred_check_branch
    %25 = sbr.rel (0) target = $region29
  $region28: #{enhanced_sage_forward.3} parent=0 // pred_region
    _
  $region29: #{enhanced_sage_forward.3} parent=0 // pred_fallthru
    _
  %p27 = scmp.eq.s32.totalorder 0, 0
  // Predicated region
  $region30: #{enhanced_sage_forward.3} parent=0 // pred_check
    %p28 = pneg %p27
  $region31: #{enhanced_sage_forward.3} parent=0 // pred_check_branch
    %30 = sbr.rel (%p28) target = $region33
  $region32: #{enhanced_sage_forward.3} parent=0 // pred_region
    %vm31 = vcmask 130048
    %32 = vst.msk [vmem:[#allocation2] sm:$0xff] %vm31, 0.0
    %33 = vst.msk [vmem:[#allocation2 + $0x8] sm:$0xff] %vm31, 0.0
    %34 = vst.msk [vmem:[#allocation2 + $0x10] sm:$0xff] %vm31, 0.0
    %35 = vst.msk [vmem:[#allocation2 + $0x18] sm:$0xff] %vm31, 0.0
    %36 = vst.msk [vmem:[#allocation2 + $0x20] sm:$0xff] %vm31, 0.0
    %37 = vst.msk [vmem:[#allocation2 + $0x28] sm:$0xff] %vm31, 0.0
    %38 = vst.msk [vmem:[#allocation2 + $0x30] sm:$0xff] %vm31, 0.0
    %39 = vst.msk [vmem:[#allocation2 + $0x38] sm:$0xff] %vm31, 0.0
    %40 = vst.msk [vmem:[#allocation2 + $0x40] sm:$0xff] %vm31, 0.0
    %41 = vst.msk [vmem:[#allocation2 + $0x48] sm:$0xff] %vm31, 0.0
    %42 = vst.msk [vmem:[#allocation2 + $0x50] sm:$0xff] %vm31, 0.0
    %43 = vst.msk [vmem:[#allocation2 + $0x58] sm:$0xff] %vm31, 0.0
    %44 = vst.msk [vmem:[#allocation2 + $0x60] sm:$0xff] %vm31, 0.0
    %45 = vst.msk [vmem:[#allocation2 + $0x68] sm:$0xff] %vm31, 0.0
    %46 = vst.msk [vmem:[#allocation2 + $0x70] sm:$0xff] %vm31, 0.0
    %47 = vst.msk [vmem:[#allocation2 + $0x78] sm:$0xff] %vm31, 0.0
    %v48 = vld [vmem:[%s2] sm:$0xf]
    %v49 = vld [vmem:[%s2 + $0x4] sm:$0xf]
    %v50 = vld [vmem:[%s2 + $0x8] sm:$0xf]
    %v51 = vld [vmem:[%s2 + $0xc] sm:$0xf]
    %v52 = vld [vmem:[%s2 + $0x10] sm:$0xf]
    %v53 = vld [vmem:[%s2 + $0x14] sm:$0xf]
    %v54 = vld [vmem:[%s2 + $0x18] sm:$0xf]
    %v55 = vld [vmem:[%s2 + $0x1c] sm:$0xf]
    %v56 = vld [vmem:[%s2 + $0x20] sm:$0xf]
    %v57 = vld [vmem:[%s2 + $0x24] sm:$0xf]
    %v58 = vld [vmem:[%s2 + $0x28] sm:$0xf]
    %v59 = vld [vmem:[%s2 + $0x2c] sm:$0xf]
    %v60 = vld [vmem:[%s2 + $0x30] sm:$0xf]
    %v61 = vld [vmem:[%s2 + $0x34] sm:$0xf]
    %v62 = vld [vmem:[%s2 + $0x38] sm:$0xf]
    %v63 = vld [vmem:[%s2 + $0x3c] sm:$0xf]
    %v64 = vunpack.c.l.bf16 %v48
    %v65 = vunpack.c.l.bf16 %v49
    %v66 = vunpack.c.l.bf16 %v50
    %v67 = vunpack.c.l.bf16 %v51
    %v68 = vunpack.c.l.bf16 %v52
    %v69 = vunpack.c.l.bf16 %v53
    %v70 = vunpack.c.l.bf16 %v54
    %v71 = vunpack.c.l.bf16 %v55
    %v72 = vunpack.c.l.bf16 %v56
    %v73 = vunpack.c.l.bf16 %v57
    %v74 = vunpack.c.l.bf16 %v58
    %v75 = vunpack.c.l.bf16 %v59
    %v76 = vunpack.c.l.bf16 %v60
    %v77 = vunpack.c.l.bf16 %v61
    %v78 = vunpack.c.l.bf16 %v62
    %v79 = vunpack.c.l.bf16 %v63
    %v80 = vld [vmem:[%s5] sm:$0xff]
    %v81 = vld [vmem:[%s5 + $0x8] sm:$0xff]
    %v82 = vld [vmem:[%s5 + $0x10] sm:$0xff]
    %v83 = vld [vmem:[%s5 + $0x18] sm:$0xff]
    %v84 = vld [vmem:[%s6] sm:$0x3]
    %v86 = vlaneseq
    %v87 = vshrl.u32 %v86, 7
    %v88 = vsub.s32 0, %v87
    %v89 = vrot.slane %v84, %v88
    %v90 = vlaneseq
    %v91 = vshrl.u32 %v90, 7
    %v92 = vsub.s32 1, %v91
    %v93 = vrot.slane %v84, %v92
    %v97 = vsel %vm31, %v64, 0
    %v100 = vsel %vm31, %v65, 0
    %v103 = vsel %vm31, %v66, 0
    %v106 = vsel %vm31, %v67, 0
    %v109 = vsel %vm31, %v68, 0
    %v112 = vsel %vm31, %v69, 0
    %v115 = vsel %vm31, %v70, 0
    %v118 = vsel %vm31, %v71, 0
    %v121 = vsel %vm31, %v72, 0
    %v124 = vsel %vm31, %v73, 0
    %v127 = vsel %vm31, %v74, 0
    %v130 = vsel %vm31, %v75, 0
    %v133 = vsel %vm31, %v76, 0
    %v136 = vsel %vm31, %v77, 0
    %v139 = vsel %vm31, %v78, 0
    %v142 = vsel %vm31, %v79, 0
    %144 = vmatprep.subr.mxu0 0.0
    %145 = vmatpush1.msra.mxu0 0.0
    %146 = vmatprep.subr.mxu0 0.0
    %147 = vmatpush1.msra.mxu0 0.0
    %148 = vmatprep.subr.mxu0 0.0
    %149 = vmatpush1.msra.mxu0 0.0
    %150 = vmatprep.subr.mxu0 0.0
    %151 = vmatpush1.msra.mxu0 0.0
    %152 = vmatprep.subr.mxu0 0.0
    %153 = vmatpush1.msra.mxu0 0.0
    %154 = vmatprep.subr.mxu0 0.0
    %155 = vmatpush1.msra.mxu0 0.0
    %156 = vmatprep.subr.mxu0 0.0
    %157 = vmatpush1.msra.mxu0 0.0
    %158 = vmatprep.subr.mxu0 0.0
    %159 = vmatpush1.msra.mxu0 0.0
    %160 = vmatprep.subr.mxu0 0.0
    %161 = vmatpush1.msra.mxu0 0.0
    %162 = vmatprep.subr.mxu0 0.0
    %163 = vmatpush1.msra.mxu0 0.0
    %164 = vmatprep.subr.mxu0 0.0
    %165 = vmatpush1.msra.mxu0 0.0
    %166 = vmatprep.subr.mxu0 0.0
    %167 = vmatpush1.msra.mxu0 0.0
    %168 = vmatprep.subr.mxu0 0.0
    %169 = vmatpush1.msra.mxu0 0.0
    %170 = vmatprep.subr.mxu0 0.0
    %171 = vmatpush1.msra.mxu0 0.0
    %172 = vmatprep.subr.mxu0 %v83
    %173 = vmatpush1.msra.mxu0 %v82
    %174 = vmatprep.subr.mxu0 %v81
    %175 = vmatpush1.msra.mxu0 %v80
    %176 = vmatprep.subr.mxu0 0.0
    %177 = vmatpush2.msra.mxu0 0.0
    %178 = vmatprep.subr.mxu0 0.0
    %179 = vmatpush2.msra.mxu0 0.0
    %180 = vmatprep.subr.mxu0 0.0
    %181 = vmatpush2.msra.mxu0 0.0
    %182 = vmatprep.subr.mxu0 0.0
    %183 = vmatpush2.msra.mxu0 0.0
    %184 = vmatprep.subr.mxu0 0.0
    %185 = vmatpush2.msra.mxu0 0.0
    %186 = vmatprep.subr.mxu0 0.0
    %187 = vmatpush2.msra.mxu0 0.0
    %188 = vmatprep.subr.mxu0 0.0
    %189 = vmatpush2.msra.mxu0 0.0
    %190 = vmatprep.subr.mxu0 0.0
    %191 = vmatpush2.msra.mxu0 0.0
    %192 = vmatprep.subr.mxu0 0.0
    %193 = vmatpush2.msra.mxu0 0.0
    %194 = vmatprep.subr.mxu0 0.0
    %195 = vmatpush2.msra.mxu0 0.0
    %196 = vmatprep.subr.mxu0 0.0
    %197 = vmatpush2.msra.mxu0 0.0
    %198 = vmatprep.subr.mxu0 0.0
    %199 = vmatpush2.msra.mxu0 0.0
    %200 = vmatprep.subr.mxu0 0.0
    %201 = vmatpush2.msra.mxu0 0.0
    %202 = vmatprep.subr.mxu0 0.0
    %203 = vmatpush2.msra.mxu0 0.0
    %204 = vmatprep.subr.mxu0 0.0
    %205 = vmatpush2.msra.mxu0 0.0
    %206 = vmatprep.subr.mxu0 0.0
    %207 = vmatpush2.msra.mxu0 0.0
    %208 = vmatprep.mubr.f32.mxu0 0.0
    %209 = vmatmul.mubr.f32.gmra.mxu0 %v97
    %v210 = vpop.f32.mrf.mxu0
    %v211 = vadd.f32 %v89, %v210
    %v212 = vpop.f32.mrf.mxu0
    %v213 = vadd.f32 %v93, %v212
    %214 = vmatprep.mubr.f32.mxu0 0.0
    %215 = vmatmul.mubr.f32.gmra.mxu0 %v100
    %v216 = vpop.f32.mrf.mxu0
    %v217 = vadd.f32 %v89, %v216
    %v218 = vpop.f32.mrf.mxu0
    %v219 = vadd.f32 %v93, %v218
    %220 = vmatprep.mubr.f32.mxu0 0.0
    %221 = vmatmul.mubr.f32.gmra.mxu0 %v103
    %v222 = vpop.f32.mrf.mxu0
    %v223 = vadd.f32 %v89, %v222
    %v224 = vpop.f32.mrf.mxu0
    %v225 = vadd.f32 %v93, %v224
    %226 = vmatprep.mubr.f32.mxu0 0.0
    %227 = vmatmul.mubr.f32.gmra.mxu0 %v106
    %v228 = vpop.f32.mrf.mxu0
    %v229 = vadd.f32 %v89, %v228
    %v230 = vpop.f32.mrf.mxu0
    %v231 = vadd.f32 %v93, %v230
    %232 = vmatprep.mubr.f32.mxu0 0.0
    %233 = vmatmul.mubr.f32.gmra.mxu0 %v109
    %v234 = vpop.f32.mrf.mxu0
    %v235 = vadd.f32 %v89, %v234
    %v236 = vpop.f32.mrf.mxu0
    %v237 = vadd.f32 %v93, %v236
    %238 = vmatprep.mubr.f32.mxu0 0.0
    %239 = vmatmul.mubr.f32.gmra.mxu0 %v112
    %v240 = vpop.f32.mrf.mxu0
    %v241 = vadd.f32 %v89, %v240
    %v242 = vpop.f32.mrf.mxu0
    %v243 = vadd.f32 %v93, %v242
    %244 = vmatprep.mubr.f32.mxu0 0.0
    %245 = vmatmul.mubr.f32.gmra.mxu0 %v115
    %v246 = vpop.f32.mrf.mxu0
    %v247 = vadd.f32 %v89, %v246
    %v248 = vpop.f32.mrf.mxu0
    %v249 = vadd.f32 %v93, %v248
    %250 = vmatprep.mubr.f32.mxu0 0.0
    %251 = vmatmul.mubr.f32.gmra.mxu0 %v118
    %v252 = vpop.f32.mrf.mxu0
    %v253 = vadd.f32 %v89, %v252
    %v254 = vpop.f32.mrf.mxu0
    %v255 = vadd.f32 %v93, %v254
    %256 = vmatprep.mubr.f32.mxu0 0.0
    %257 = vmatmul.mubr.f32.gmra.mxu0 %v121
    %v258 = vpop.f32.mrf.mxu0
    %v259 = vadd.f32 %v89, %v258
    %v260 = vpop.f32.mrf.mxu0
    %v261 = vadd.f32 %v93, %v260
    %262 = vmatprep.mubr.f32.mxu0 0.0
    %263 = vmatmul.mubr.f32.gmra.mxu0 %v124
    %v264 = vpop.f32.mrf.mxu0
    %v265 = vadd.f32 %v89, %v264
    %v266 = vpop.f32.mrf.mxu0
    %v267 = vadd.f32 %v93, %v266
    %268 = vmatprep.mubr.f32.mxu0 0.0
    %269 = vmatmul.mubr.f32.gmra.mxu0 %v127
    %v270 = vpop.f32.mrf.mxu0
    %v271 = vadd.f32 %v89, %v270
    %v272 = vpop.f32.mrf.mxu0
    %v273 = vadd.f32 %v93, %v272
    %274 = vmatprep.mubr.f32.mxu0 0.0
    %275 = vmatmul.mubr.f32.gmra.mxu0 %v130
    %v276 = vpop.f32.mrf.mxu0
    %v277 = vadd.f32 %v89, %v276
    %v278 = vpop.f32.mrf.mxu0
    %v279 = vadd.f32 %v93, %v278
    %280 = vmatprep.mubr.f32.mxu0 0.0
    %281 = vmatmul.mubr.f32.gmra.mxu0 %v133
    %v282 = vpop.f32.mrf.mxu0
    %v283 = vadd.f32 %v89, %v282
    %v284 = vpop.f32.mrf.mxu0
    %v285 = vadd.f32 %v93, %v284
    %286 = vmatprep.mubr.f32.mxu0 0.0
    %287 = vmatmul.mubr.f32.gmra.mxu0 %v136
    %v288 = vpop.f32.mrf.mxu0
    %v289 = vadd.f32 %v89, %v288
    %v290 = vpop.f32.mrf.mxu0
    %v291 = vadd.f32 %v93, %v290
    %292 = vmatprep.mubr.f32.mxu0 0.0
    %293 = vmatmul.mubr.f32.gmra.mxu0 %v139
    %v294 = vpop.f32.mrf.mxu0
    %v295 = vadd.f32 %v89, %v294
    %v296 = vpop.f32.mrf.mxu0
    %v297 = vadd.f32 %v93, %v296
    %298 = vmatprep.mubr.f32.mxu0 0.0
    %299 = vmatmul.mubr.f32.gmra.mxu0 %v142
    %v300 = vpop.f32.mrf.mxu0
    %v301 = vadd.f32 %v89, %v300
    %v302 = vpop.f32.mrf.mxu0
    %v303 = vadd.f32 %v93, %v302
    %304 = vdwg.mxu0
    %305 = vst [vmem:[#allocation3] sm:$0xff] %v211
    %306 = vst [vmem:[#allocation3 + $0x8] sm:$0xff] %v213
    %307 = vst [vmem:[#allocation3 + $0x10] sm:$0xff] %v217
    %308 = vst [vmem:[#allocation3 + $0x18] sm:$0xff] %v219
    %309 = vst [vmem:[#allocation3 + $0x20] sm:$0xff] %v223
    %310 = vst [vmem:[#allocation3 + $0x28] sm:$0xff] %v225
    %311 = vst [vmem:[#allocation3 + $0x30] sm:$0xff] %v229
    %312 = vst [vmem:[#allocation3 + $0x38] sm:$0xff] %v231
    %313 = vst [vmem:[#allocation3 + $0x40] sm:$0xff] %v235
    %314 = vst [vmem:[#allocation3 + $0x48] sm:$0xff] %v237
    %315 = vst [vmem:[#allocation3 + $0x50] sm:$0xff] %v241
    %316 = vst [vmem:[#allocation3 + $0x58] sm:$0xff] %v243
    %317 = vst [vmem:[#allocation3 + $0x60] sm:$0xff] %v247
    %318 = vst [vmem:[#allocation3 + $0x68] sm:$0xff] %v249
    %319 = vst [vmem:[#allocation3 + $0x70] sm:$0xff] %v253
    %320 = vst [vmem:[#allocation3 + $0x78] sm:$0xff] %v255
    %321 = vst [vmem:[#allocation3 + $0x80] sm:$0xff] %v259
    %322 = vst [vmem:[#allocation3 + $0x88] sm:$0xff] %v261
    %323 = vst [vmem:[#allocation3 + $0x90] sm:$0xff] %v265
    %324 = vst [vmem:[#allocation3 + $0x98] sm:$0xff] %v267
    %325 = vst [vmem:[#allocation3 + $0xa0] sm:$0xff] %v271
    %326 = vst [vmem:[#allocation3 + $0xa8] sm:$0xff] %v273
    %327 = vst [vmem:[#allocation3 + $0xb0] sm:$0xff] %v277
    %328 = vst [vmem:[#allocation3 + $0xb8] sm:$0xff] %v279
    %329 = vst [vmem:[#allocation3 + $0xc0] sm:$0xff] %v283
    %330 = vst [vmem:[#allocation3 + $0xc8] sm:$0xff] %v285
    %331 = vst [vmem:[#allocation3 + $0xd0] sm:$0xff] %v289
    %332 = vst [vmem:[#allocation3 + $0xd8] sm:$0xff] %v291
    %333 = vst [vmem:[#allocation3 + $0xe0] sm:$0xff] %v295
    %334 = vst [vmem:[#allocation3 + $0xe8] sm:$0xff] %v297
    %335 = vst [vmem:[#allocation3 + $0xf0] sm:$0xff] %v301
    %336 = vst [vmem:[#allocation3 + $0xf8] sm:$0xff] %v303
  $region33: #{enhanced_sage_forward.3} parent=0 // pred_fallthru
    _
  %v337 = vld [vmem:[#allocation2] sm:$0xff]
  %v338 = vld [vmem:[#allocation2 + $0x8] sm:$0xff]
  %v339 = vld [vmem:[#allocation2 + $0x10] sm:$0xff]
  %v340 = vld [vmem:[#allocation2 + $0x18] sm:$0xff]
  %v341 = vld [vmem:[#allocation2 + $0x20] sm:$0xff]
  %v342 = vld [vmem:[#allocation2 + $0x28] sm:$0xff]
  %v343 = vld [vmem:[#allocation2 + $0x30] sm:$0xff]
  %v344 = vld [vmem:[#allocation2 + $0x38] sm:$0xff]
  %v345 = vld [vmem:[#allocation2 + $0x40] sm:$0xff]
  %v346 = vld [vmem:[#allocation2 + $0x48] sm:$0xff]
  %v347 = vld [vmem:[#allocation2 + $0x50] sm:$0xff]
  %v348 = vld [vmem:[#allocation2 + $0x58] sm:$0xff]
  %v349 = vld [vmem:[#allocation2 + $0x60] sm:$0xff]
  %v350 = vld [vmem:[#allocation2 + $0x68] sm:$0xff]
  %v351 = vld [vmem:[#allocation2 + $0x70] sm:$0xff]
  %v352 = vld [vmem:[#allocation2 + $0x78] sm:$0xff]
  %v353 = vld [vmem:[%s0] sm:$0x3]
  %v354 = vld [vmem:[%s0 + $0x2] sm:$0x3]
  %v355 = vld [vmem:[%s0 + $0x4] sm:$0x3]
  %v356 = vld [vmem:[%s0 + $0x6] sm:$0x3]
  %v357 = vld [vmem:[%s0 + $0x8] sm:$0x3]
  %v358 = vld [vmem:[%s0 + $0xa] sm:$0x3]
  %v359 = vld [vmem:[%s0 + $0xc] sm:$0x3]
  %v360 = vld [vmem:[%s0 + $0xe] sm:$0x3]
  %v361 = vld [vmem:[%s0 + $0x10] sm:$0x3]
  %v362 = vld [vmem:[%s0 + $0x12] sm:$0x3]
  %v363 = vld [vmem:[%s0 + $0x14] sm:$0x3]
  %v364 = vld [vmem:[%s0 + $0x16] sm:$0x3]
  %v365 = vld [vmem:[%s0 + $0x18] sm:$0x3]
  %v366 = vld [vmem:[%s0 + $0x1a] sm:$0x3]
  %v367 = vld [vmem:[%s0 + $0x1c] sm:$0x3]
  %v368 = vld [vmem:[%s0 + $0x1e] sm:$0x3]
  %v369 = vunpack.c.l.s8.bf16 %v353
  %v370 = vunpack.c.l.s8.bf16 %v354
  %v371 = vunpack.c.l.s8.bf16 %v355
  %v372 = vunpack.c.l.s8.bf16 %v356
  %v373 = vunpack.c.l.s8.bf16 %v357
  %v374 = vunpack.c.l.s8.bf16 %v358
  %v375 = vunpack.c.l.s8.bf16 %v359
  %v376 = vunpack.c.l.s8.bf16 %v360
  %v377 = vunpack.c.l.s8.bf16 %v361
  %v378 = vunpack.c.l.s8.bf16 %v362
  %v379 = vunpack.c.l.s8.bf16 %v363
  %v380 = vunpack.c.l.s8.bf16 %v364
  %v381 = vunpack.c.l.s8.bf16 %v365
  %v382 = vunpack.c.l.s8.bf16 %v366
  %v383 = vunpack.c.l.s8.bf16 %v367
  %v384 = vunpack.c.l.s8.bf16 %v368
  %v385 = vld [vmem:[%s1] sm:$0xf]
  %v386 = vld [vmem:[%s1 + $0x4] sm:$0xf]
  %v387 = vld [vmem:[%s1 + $0x8] sm:$0xf]
  %v388 = vld [vmem:[%s1 + $0xc] sm:$0xf]
  %v389 = vld [vmem:[%s1 + $0x10] sm:$0xf]
  %v390 = vld [vmem:[%s1 + $0x14] sm:$0xf]
  %v391 = vld [vmem:[%s1 + $0x18] sm:$0xf]
  %v392 = vld [vmem:[%s1 + $0x1c] sm:$0xf]
  %v393 = vld [vmem:[%s1 + $0x20] sm:$0xf]
  %v394 = vld [vmem:[%s1 + $0x24] sm:$0xf]
  %v395 = vld [vmem:[%s1 + $0x28] sm:$0xf]
  %v396 = vld [vmem:[%s1 + $0x2c] sm:$0xf]
  %v397 = vld [vmem:[%s1 + $0x30] sm:$0xf]
  %v398 = vld [vmem:[%s1 + $0x34] sm:$0xf]
  %v399 = vld [vmem:[%s1 + $0x38] sm:$0xf]
  %v400 = vld [vmem:[%s1 + $0x3c] sm:$0xf]
  %v417 = vunpack.c.l.b16 %v369
  %v418 = vunpack.c.l.b16 %v370
  %v419 = vunpack.c.l.b16 %v371
  %v420 = vunpack.c.l.b16 %v372
  %v421 = vunpack.c.l.b16 %v373
  %v422 = vunpack.c.l.b16 %v374
  %v423 = vunpack.c.l.b16 %v375
  %v424 = vunpack.c.l.b16 %v376
  %v425 = vunpack.c.l.b16 %v377
  %v426 = vunpack.c.l.b16 %v378
  %v427 = vunpack.c.l.b16 %v379
  %v428 = vunpack.c.l.b16 %v380
  %v429 = vunpack.c.l.b16 %v381
  %v430 = vunpack.c.l.b16 %v382
  %v431 = vunpack.c.l.b16 %v383
  %v432 = vunpack.c.l.b16 %v384
  %v433 = vpack.c.b16 %v418, %v417
  %v434 = vpack.c.b16 %v420, %v419
  %v435 = vpack.c.b16 %v422, %v421
  %v436 = vpack.c.b16 %v424, %v423
  %v437 = vpack.c.b16 %v426, %v425
  %v438 = vpack.c.b16 %v428, %v427
  %v439 = vpack.c.b16 %v430, %v429
  %v440 = vpack.c.b16 %v432, %v431
  %v465 = vunpack.c.l.b16 %v385
  %v466 = vunpack.c.l.b16 %v386
  %v467 = vunpack.c.l.b16 %v387
  %v468 = vunpack.c.l.b16 %v388
  %v469 = vunpack.c.l.b16 %v389
  %v470 = vunpack.c.l.b16 %v390
  %v471 = vunpack.c.l.b16 %v391
  %v472 = vunpack.c.l.b16 %v392
  %v473 = vunpack.c.l.b16 %v393
  %v474 = vunpack.c.l.b16 %v394
  %v475 = vunpack.c.l.b16 %v395
  %v476 = vunpack.c.l.b16 %v396
  %v477 = vunpack.c.l.b16 %v397
  %v478 = vunpack.c.l.b16 %v398
  %v479 = vunpack.c.l.b16 %v399
  %v480 = vunpack.c.l.b16 %v400
  %v481 = vpack.c.b16 %v466, %v465
  %v482 = vpack.c.b16 %v468, %v467
  %v483 = vpack.c.b16 %v470, %v469
  %v484 = vpack.c.b16 %v472, %v471
  %v485 = vpack.c.b16 %v474, %v473
  %v486 = vpack.c.b16 %v476, %v475
  %v487 = vpack.c.b16 %v478, %v477
  %v488 = vpack.c.b16 %v480, %v479
  %497 = vmatprep.subr.bf16.mxu0 0
  %498 = vmatpush1.bf16.msra.mxu0 %v488
  %499 = vmatprep.subr.bf16.mxu0 0
  %500 = vmatpush1.bf16.msra.mxu0 %v487
  %501 = vmatprep.subr.bf16.mxu0 0
  %502 = vmatpush1.bf16.msra.mxu0 %v486
  %503 = vmatprep.subr.bf16.mxu0 0
  %504 = vmatpush1.bf16.msra.mxu0 %v485
  %505 = vmatprep.subr.bf16.mxu0 0
  %506 = vmatpush1.bf16.msra.mxu0 %v484
  %507 = vmatprep.subr.bf16.mxu0 0
  %508 = vmatpush1.bf16.msra.mxu0 %v483
  %509 = vmatprep.subr.bf16.mxu0 0
  %510 = vmatpush1.bf16.msra.mxu0 %v482
  %511 = vmatprep.subr.bf16.mxu0 0
  %512 = vmatpush1.bf16.msra.mxu0 %v481
  %513 = vmatprep.subr.bf16.mxu0 0
  %514 = vmatpush2.bf16.msra.mxu0 0
  %515 = vmatprep.subr.bf16.mxu0 0
  %516 = vmatpush2.bf16.msra.mxu0 0
  %517 = vmatprep.subr.bf16.mxu0 0
  %518 = vmatpush2.bf16.msra.mxu0 0
  %519 = vmatprep.subr.bf16.mxu0 0
  %520 = vmatpush2.bf16.msra.mxu0 0
  %521 = vmatprep.subr.bf16.mxu0 0
  %522 = vmatpush2.bf16.msra.mxu0 0
  %523 = vmatprep.subr.bf16.mxu0 0
  %524 = vmatpush2.bf16.msra.mxu0 0
  %525 = vmatprep.subr.bf16.mxu0 0
  %526 = vmatpush2.bf16.msra.mxu0 0
  %527 = vmatprep.subr.bf16.mxu0 0
  %528 = vmatpush2.bf16.msra.mxu0 0
  %529 = vmatprep.mubr.bf16.mxu0 0
  %530 = vmatmul.mubr.bf16.gmra.mxu0 %v433
  %v531 = vpop.f32.mrf.mxu0
  %v532 = vadd.f32 0.0, %v531
  %v533 = vpop.f32.mrf.mxu0
  %v534 = vpop.f32.mrf.mxu0
  %v535 = vadd.f32 0.0, %v534
  %v536 = vpop.f32.mrf.mxu0
  %537 = vmatprep.mubr.bf16.mxu0 0
  %538 = vmatmul.mubr.bf16.gmra.mxu0 %v434
  %v539 = vpop.f32.mrf.mxu0
  %v540 = vadd.f32 0.0, %v539
  %v541 = vpop.f32.mrf.mxu0
  %v542 = vpop.f32.mrf.mxu0
  %v543 = vadd.f32 0.0, %v542
  %v544 = vpop.f32.mrf.mxu0
  %545 = vmatprep.mubr.bf16.mxu0 0
  %546 = vmatmul.mubr.bf16.gmra.mxu0 %v435
  %v547 = vpop.f32.mrf.mxu0
  %v548 = vadd.f32 0.0, %v547
  %v549 = vpop.f32.mrf.mxu0
  %v550 = vpop.f32.mrf.mxu0
  %v551 = vadd.f32 0.0, %v550
  %v552 = vpop.f32.mrf.mxu0
  %553 = vmatprep.mubr.bf16.mxu0 0
  %554 = vmatmul.mubr.bf16.gmra.mxu0 %v436
  %v555 = vpop.f32.mrf.mxu0
  %v556 = vadd.f32 0.0, %v555
  %v557 = vpop.f32.mrf.mxu0
  %v558 = vpop.f32.mrf.mxu0
  %v559 = vadd.f32 0.0, %v558
  %v560 = vpop.f32.mrf.mxu0
  %561 = vmatprep.mubr.bf16.mxu0 0
  %562 = vmatmul.mubr.bf16.gmra.mxu0 %v437
  %v563 = vpop.f32.mrf.mxu0
  %v564 = vadd.f32 0.0, %v563
  %v565 = vpop.f32.mrf.mxu0
  %v566 = vpop.f32.mrf.mxu0
  %v567 = vadd.f32 0.0, %v566
  %v568 = vpop.f32.mrf.mxu0
  %569 = vmatprep.mubr.bf16.mxu0 0
  %570 = vmatmul.mubr.bf16.gmra.mxu0 %v438
  %v571 = vpop.f32.mrf.mxu0
  %v572 = vadd.f32 0.0, %v571
  %v573 = vpop.f32.mrf.mxu0
  %v574 = vpop.f32.mrf.mxu0
  %v575 = vadd.f32 0.0, %v574
  %v576 = vpop.f32.mrf.mxu0
  %577 = vmatprep.mubr.bf16.mxu0 0
  %578 = vmatmul.mubr.bf16.gmra.mxu0 %v439
  %v579 = vpop.f32.mrf.mxu0
  %v580 = vadd.f32 0.0, %v579
  %v581 = vpop.f32.mrf.mxu0
  %v582 = vpop.f32.mrf.mxu0
  %v583 = vadd.f32 0.0, %v582
  %v584 = vpop.f32.mrf.mxu0
  %585 = vmatprep.mubr.bf16.mxu0 0
  %586 = vmatmul.mubr.bf16.gmra.mxu0 %v440
  %v587 = vpop.f32.mrf.mxu0
  %v588 = vadd.f32 0.0, %v587
  %v589 = vpop.f32.mrf.mxu0
  %v590 = vpop.f32.mrf.mxu0
  %v591 = vadd.f32 0.0, %v590
  %v592 = vpop.f32.mrf.mxu0
  %593 = vdwg.mxu0
  %v594 = vadd.f32 %v337, %v532
  %v595 = vadd.f32 %v338, %v535
  %v596 = vadd.f32 %v339, %v540
  %v597 = vadd.f32 %v340, %v543
  %v598 = vadd.f32 %v341, %v548
  %v599 = vadd.f32 %v342, %v551
  %v600 = vadd.f32 %v343, %v556
  %v601 = vadd.f32 %v344, %v559
  %v602 = vadd.f32 %v345, %v564
  %v603 = vadd.f32 %v346, %v567
  %v604 = vadd.f32 %v347, %v572
  %v605 = vadd.f32 %v348, %v575
  %v606 = vadd.f32 %v349, %v580
  %v607 = vadd.f32 %v350, %v583
  %v608 = vadd.f32 %v351, %v588
  %v609 = vadd.f32 %v352, %v591
  %vm610 = vcmask 130048
  %611 = vst.msk [vmem:[#allocation2] sm:$0xff] %vm610, %v594
  %612 = vst.msk [vmem:[#allocation2 + $0x8] sm:$0xff] %vm610, %v595
  %613 = vst.msk [vmem:[#allocation2 + $0x10] sm:$0xff] %vm610, %v596
  %614 = vst.msk [vmem:[#allocation2 + $0x18] sm:$0xff] %vm610, %v597
  %615 = vst.msk [vmem:[#allocation2 + $0x20] sm:$0xff] %vm610, %v598
  %616 = vst.msk [vmem:[#allocation2 + $0x28] sm:$0xff] %vm610, %v599
  %617 = vst.msk [vmem:[#allocation2 + $0x30] sm:$0xff] %vm610, %v600
  %618 = vst.msk [vmem:[#allocation2 + $0x38] sm:$0xff] %vm610, %v601
  %619 = vst.msk [vmem:[#allocation2 + $0x40] sm:$0xff] %vm610, %v602
  %620 = vst.msk [vmem:[#allocation2 + $0x48] sm:$0xff] %vm610, %v603
  %621 = vst.msk [vmem:[#allocation2 + $0x50] sm:$0xff] %vm610, %v604
  %622 = vst.msk [vmem:[#allocation2 + $0x58] sm:$0xff] %vm610, %v605
  %623 = vst.msk [vmem:[#allocation2 + $0x60] sm:$0xff] %vm610, %v606
  %624 = vst.msk [vmem:[#allocation2 + $0x68] sm:$0xff] %vm610, %v607
  %625 = vst.msk [vmem:[#allocation2 + $0x70] sm:$0xff] %vm610, %v608
  %626 = vst.msk [vmem:[#allocation2 + $0x78] sm:$0xff] %vm610, %v609
  // Predicated region
  $region34: #{enhanced_sage_forward.3} parent=0 // pred_check
    %p627 = pneg %p27
  $region35: #{enhanced_sage_forward.3} parent=0 // pred_check_branch
    %629 = sbr.rel (%p627) target = $region37
  $region36: #{enhanced_sage_forward.3} parent=0 // pred_region
    %v630 = vld [vmem:[#allocation2] sm:$0xff]
    %v631 = vld [vmem:[#allocation2 + $0x8] sm:$0xff]
    %v632 = vld [vmem:[#allocation2 + $0x10] sm:$0xff]
    %v633 = vld [vmem:[#allocation2 + $0x18] sm:$0xff]
    %v634 = vld [vmem:[#allocation2 + $0x20] sm:$0xff]
    %v635 = vld [vmem:[#allocation2 + $0x28] sm:$0xff]
    %v636 = vld [vmem:[#allocation2 + $0x30] sm:$0xff]
    %v637 = vld [vmem:[#allocation2 + $0x38] sm:$0xff]
    %v638 = vld [vmem:[#allocation2 + $0x40] sm:$0xff]
    %v639 = vld [vmem:[#allocation2 + $0x48] sm:$0xff]
    %v640 = vld [vmem:[#allocation2 + $0x50] sm:$0xff]
    %v641 = vld [vmem:[#allocation2 + $0x58] sm:$0xff]
    %v642 = vld [vmem:[#allocation2 + $0x60] sm:$0xff]
    %v643 = vld [vmem:[#allocation2 + $0x68] sm:$0xff]
    %v644 = vld [vmem:[#allocation2 + $0x70] sm:$0xff]
    %v645 = vld [vmem:[#allocation2 + $0x78] sm:$0xff]
    %v646 = vld [vmem:[%s3] sm:$0xff]
    %v647 = vld [vmem:[%s3 + $0x8] sm:$0xff]
    %v648 = vld [vmem:[%s3 + $0x10] sm:$0xff]
    %v649 = vld [vmem:[%s3 + $0x18] sm:$0xff]
    %v650 = vld [vmem:[%s3 + $0x20] sm:$0xff]
    %v651 = vld [vmem:[%s3 + $0x28] sm:$0xff]
    %v652 = vld [vmem:[%s3 + $0x30] sm:$0xff]
    %v653 = vld [vmem:[%s3 + $0x38] sm:$0xff]
    %v654 = vld [vmem:[%s3 + $0x40] sm:$0xff]
    %v655 = vld [vmem:[%s3 + $0x48] sm:$0xff]
    %v656 = vld [vmem:[%s3 + $0x50] sm:$0xff]
    %v657 = vld [vmem:[%s3 + $0x58] sm:$0xff]
    %v658 = vld [vmem:[%s3 + $0x60] sm:$0xff]
    %v659 = vld [vmem:[%s3 + $0x68] sm:$0xff]
    %v660 = vld [vmem:[%s3 + $0x70] sm:$0xff]
    %v661 = vld [vmem:[%s3 + $0x78] sm:$0xff]
    %663 = vset.pattern.permute.xlu0 0
    %664 = vperm.xlu0 %663, %v646
    %v665 = vpop.permute.xlu0 %664
    %668 = vset.pattern.permute.xlu0 0
    %669 = vperm.xlu0 %668, %v647
    %v670 = vpop.permute.xlu0 %669
    %673 = vset.pattern.permute.xlu0 0
    %674 = vperm.xlu0 %673, %v648
    %v675 = vpop.permute.xlu0 %674
    %678 = vset.pattern.permute.xlu0 0
    %679 = vperm.xlu0 %678, %v649
    %v680 = vpop.permute.xlu0 %679
    %683 = vset.pattern.permute.xlu0 0
    %684 = vperm.xlu0 %683, %v650
    %v685 = vpop.permute.xlu0 %684
    %688 = vset.pattern.permute.xlu0 0
    %689 = vperm.xlu0 %688, %v651
    %v690 = vpop.permute.xlu0 %689
    %693 = vset.pattern.permute.xlu0 0
    %694 = vperm.xlu0 %693, %v652
    %v695 = vpop.permute.xlu0 %694
    %698 = vset.pattern.permute.xlu0 0
    %699 = vperm.xlu0 %698, %v653
    %v700 = vpop.permute.xlu0 %699
    %703 = vset.pattern.permute.xlu0 0
    %704 = vperm.xlu0 %703, %v654
    %v705 = vpop.permute.xlu0 %704
    %708 = vset.pattern.permute.xlu0 0
    %709 = vperm.xlu0 %708, %v655
    %v710 = vpop.permute.xlu0 %709
    %713 = vset.pattern.permute.xlu0 0
    %714 = vperm.xlu0 %713, %v656
    %v715 = vpop.permute.xlu0 %714
    %718 = vset.pattern.permute.xlu0 0
    %719 = vperm.xlu0 %718, %v657
    %v720 = vpop.permute.xlu0 %719
    %723 = vset.pattern.permute.xlu0 0
    %724 = vperm.xlu0 %723, %v658
    %v725 = vpop.permute.xlu0 %724
    %728 = vset.pattern.permute.xlu0 0
    %729 = vperm.xlu0 %728, %v659
    %v730 = vpop.permute.xlu0 %729
    %733 = vset.pattern.permute.xlu0 0
    %734 = vperm.xlu0 %733, %v660
    %v735 = vpop.permute.xlu0 %734
    %738 = vset.pattern.permute.xlu0 0
    %739 = vperm.xlu0 %738, %v661
    %v740 = vpop.permute.xlu0 %739
    %v742 = vmul.f32 %v630, %v665
    %v743 = vmul.f32 %v631, %v670
    %v744 = vmul.f32 %v632, %v675
    %v745 = vmul.f32 %v633, %v680
    %v746 = vmul.f32 %v634, %v685
    %v747 = vmul.f32 %v635, %v690
    %v748 = vmul.f32 %v636, %v695
    %v749 = vmul.f32 %v637, %v700
    %v750 = vmul.f32 %v638, %v705
    %v751 = vmul.f32 %v639, %v710
    %v752 = vmul.f32 %v640, %v715
    %v753 = vmul.f32 %v641, %v720
    %v754 = vmul.f32 %v642, %v725
    %v755 = vmul.f32 %v643, %v730
    %v756 = vmul.f32 %v644, %v735
    %v757 = vmul.f32 %v645, %v740
    %v758 = vld [vmem:[#allocation3] sm:$0xff]
    %v759 = vld [vmem:[#allocation3 + $0x8] sm:$0xff]
    %v760 = vld [vmem:[#allocation3 + $0x10] sm:$0xff]
    %v761 = vld [vmem:[#allocation3 + $0x18] sm:$0xff]
    %v762 = vld [vmem:[#allocation3 + $0x20] sm:$0xff]
    %v763 = vld [vmem:[#allocation3 + $0x28] sm:$0xff]
    %v764 = vld [vmem:[#allocation3 + $0x30] sm:$0xff]
    %v765 = vld [vmem:[#allocation3 + $0x38] sm:$0xff]
    %v766 = vld [vmem:[#allocation3 + $0x40] sm:$0xff]
    %v767 = vld [vmem:[#allocation3 + $0x48] sm:$0xff]
    %v768 = vld [vmem:[#allocation3 + $0x50] sm:$0xff]
    %v769 = vld [vmem:[#allocation3 + $0x58] sm:$0xff]
    %v770 = vld [vmem:[#allocation3 + $0x60] sm:$0xff]
    %v771 = vld [vmem:[#allocation3 + $0x68] sm:$0xff]
    %v772 = vld [vmem:[#allocation3 + $0x70] sm:$0xff]
    %v773 = vld [vmem:[#allocation3 + $0x78] sm:$0xff]
    %v774 = vld [vmem:[#allocation3 + $0x80] sm:$0xff]
    %v775 = vld [vmem:[#allocation3 + $0x88] sm:$0xff]
    %v776 = vld [vmem:[#allocation3 + $0x90] sm:$0xff]
    %v777 = vld [vmem:[#allocation3 + $0x98] sm:$0xff]
    %v778 = vld [vmem:[#allocation3 + $0xa0] sm:$0xff]
    %v779 = vld [vmem:[#allocation3 + $0xa8] sm:$0xff]
    %v780 = vld [vmem:[#allocation3 + $0xb0] sm:$0xff]
    %v781 = vld [vmem:[#allocation3 + $0xb8] sm:$0xff]
    %v782 = vld [vmem:[#allocation3 + $0xc0] sm:$0xff]
    %v783 = vld [vmem:[#allocation3 + $0xc8] sm:$0xff]
    %v784 = vld [vmem:[#allocation3 + $0xd0] sm:$0xff]
    %v785 = vld [vmem:[#allocation3 + $0xd8] sm:$0xff]
    %v786 = vld [vmem:[#allocation3 + $0xe0] sm:$0xff]
    %v787 = vld [vmem:[#allocation3 + $0xe8] sm:$0xff]
    %v788 = vld [vmem:[#allocation3 + $0xf0] sm:$0xff]
    %v789 = vld [vmem:[#allocation3 + $0xf8] sm:$0xff]
    %v790 = vld [vmem:[%s4] sm:$0xff]
    %v791 = vld [vmem:[%s4 + $0x8] sm:$0xff]
    %v793 = vsel %vm610, %v742, 0
    %v796 = vsel %vm610, %v743, 0
    %v799 = vsel %vm610, %v744, 0
    %v802 = vsel %vm610, %v745, 0
    %v805 = vsel %vm610, %v746, 0
    %v808 = vsel %vm610, %v747, 0
    %v811 = vsel %vm610, %v748, 0
    %v814 = vsel %vm610, %v749, 0
    %v817 = vsel %vm610, %v750, 0
    %v820 = vsel %vm610, %v751, 0
    %v823 = vsel %vm610, %v752, 0
    %v826 = vsel %vm610, %v753, 0
    %v829 = vsel %vm610, %v754, 0
    %v832 = vsel %vm610, %v755, 0
    %v835 = vsel %vm610, %v756, 0
    %v838 = vsel %vm610, %v757, 0
    %840 = vmatprep.subr.mxu0 0.0
    %841 = vmatpush1.msra.mxu0 0.0
    %842 = vmatprep.subr.mxu0 0.0
    %843 = vmatpush1.msra.mxu0 0.0
    %844 = vmatprep.subr.mxu0 0.0
    %845 = vmatpush1.msra.mxu0 0.0
    %846 = vmatprep.subr.mxu0 0.0
    %847 = vmatpush1.msra.mxu0 0.0
    %848 = vmatprep.subr.mxu0 0.0
    %849 = vmatpush1.msra.mxu0 0.0
    %850 = vmatprep.subr.mxu0 0.0
    %851 = vmatpush1.msra.mxu0 0.0
    %852 = vmatprep.subr.mxu0 0.0
    %853 = vmatpush1.msra.mxu0 0.0
    %854 = vmatprep.subr.mxu0 0.0
    %855 = vmatpush1.msra.mxu0 0.0
    %856 = vmatprep.subr.mxu0 0.0
    %857 = vmatpush1.msra.mxu0 0.0
    %858 = vmatprep.subr.mxu0 0.0
    %859 = vmatpush1.msra.mxu0 0.0
    %860 = vmatprep.subr.mxu0 0.0
    %861 = vmatpush1.msra.mxu0 0.0
    %862 = vmatprep.subr.mxu0 0.0
    %863 = vmatpush1.msra.mxu0 0.0
    %864 = vmatprep.subr.mxu0 0.0
    %865 = vmatpush1.msra.mxu0 0.0
    %866 = vmatprep.subr.mxu0 0.0
    %867 = vmatpush1.msra.mxu0 0.0
    %868 = vmatprep.subr.mxu0 0.0
    %869 = vmatpush1.msra.mxu0 %v791
    %870 = vmatprep.subr.mxu0 0.0
    %871 = vmatpush1.msra.mxu0 %v790
    %872 = vmatprep.subr.mxu0 0.0
    %873 = vmatpush2.msra.mxu0 0.0
    %874 = vmatprep.subr.mxu0 0.0
    %875 = vmatpush2.msra.mxu0 0.0
    %876 = vmatprep.subr.mxu0 0.0
    %877 = vmatpush2.msra.mxu0 0.0
    %878 = vmatprep.subr.mxu0 0.0
    %879 = vmatpush2.msra.mxu0 0.0
    %880 = vmatprep.subr.mxu0 0.0
    %881 = vmatpush2.msra.mxu0 0.0
    %882 = vmatprep.subr.mxu0 0.0
    %883 = vmatpush2.msra.mxu0 0.0
    %884 = vmatprep.subr.mxu0 0.0
    %885 = vmatpush2.msra.mxu0 0.0
    %886 = vmatprep.subr.mxu0 0.0
    %887 = vmatpush2.msra.mxu0 0.0
    %888 = vmatprep.subr.mxu0 0.0
    %889 = vmatpush2.msra.mxu0 0.0
    %890 = vmatprep.subr.mxu0 0.0
    %891 = vmatpush2.msra.mxu0 0.0
    %892 = vmatprep.subr.mxu0 0.0
    %893 = vmatpush2.msra.mxu0 0.0
    %894 = vmatprep.subr.mxu0 0.0
    %895 = vmatpush2.msra.mxu0 0.0
    %896 = vmatprep.subr.mxu0 0.0
    %897 = vmatpush2.msra.mxu0 0.0
    %898 = vmatprep.subr.mxu0 0.0
    %899 = vmatpush2.msra.mxu0 0.0
    %900 = vmatprep.subr.mxu0 0.0
    %901 = vmatpush2.msra.mxu0 0.0
    %902 = vmatprep.subr.mxu0 0.0
    %903 = vmatpush2.msra.mxu0 0.0
    %904 = vmatprep.mubr.f32.mxu0 0.0
    %905 = vmatmul.mubr.f32.gmra.mxu0 %v793
    %v906 = vpop.f32.mrf.mxu0
    %v907 = vadd.f32 %v758, %v906
    %v908 = vpop.f32.mrf.mxu0
    %909 = vmatprep.mubr.f32.mxu0 0.0
    %910 = vmatmul.mubr.f32.gmra.mxu0 %v796
    %v911 = vpop.f32.mrf.mxu0
    %v912 = vadd.f32 %v760, %v911
    %v913 = vpop.f32.mrf.mxu0
    %914 = vmatprep.mubr.f32.mxu0 0.0
    %915 = vmatmul.mubr.f32.gmra.mxu0 %v799
    %v916 = vpop.f32.mrf.mxu0
    %v917 = vadd.f32 %v762, %v916
    %v918 = vpop.f32.mrf.mxu0
    %919 = vmatprep.mubr.f32.mxu0 0.0
    %920 = vmatmul.mubr.f32.gmra.mxu0 %v802
    %v921 = vpop.f32.mrf.mxu0
    %v922 = vadd.f32 %v764, %v921
    %v923 = vpop.f32.mrf.mxu0
    %924 = vmatprep.mubr.f32.mxu0 0.0
    %925 = vmatmul.mubr.f32.gmra.mxu0 %v805
    %v926 = vpop.f32.mrf.mxu0
    %v927 = vadd.f32 %v766, %v926
    %v928 = vpop.f32.mrf.mxu0
    %929 = vmatprep.mubr.f32.mxu0 0.0
    %930 = vmatmul.mubr.f32.gmra.mxu0 %v808
    %v931 = vpop.f32.mrf.mxu0
    %v932 = vadd.f32 %v768, %v931
    %v933 = vpop.f32.mrf.mxu0
    %934 = vmatprep.mubr.f32.mxu0 0.0
    %935 = vmatmul.mubr.f32.gmra.mxu0 %v811
    %v936 = vpop.f32.mrf.mxu0
    %v937 = vadd.f32 %v770, %v936
    %v938 = vpop.f32.mrf.mxu0
    %939 = vmatprep.mubr.f32.mxu0 0.0
    %940 = vmatmul.mubr.f32.gmra.mxu0 %v814
    %v941 = vpop.f32.mrf.mxu0
    %v942 = vadd.f32 %v772, %v941
    %v943 = vpop.f32.mrf.mxu0
    %944 = vmatprep.mubr.f32.mxu0 0.0
    %945 = vmatmul.mubr.f32.gmra.mxu0 %v817
    %v946 = vpop.f32.mrf.mxu0
    %v947 = vadd.f32 %v774, %v946
    %v948 = vpop.f32.mrf.mxu0
    %949 = vmatprep.mubr.f32.mxu0 0.0
    %950 = vmatmul.mubr.f32.gmra.mxu0 %v820
    %v951 = vpop.f32.mrf.mxu0
    %v952 = vadd.f32 %v776, %v951
    %v953 = vpop.f32.mrf.mxu0
    %954 = vmatprep.mubr.f32.mxu0 0.0
    %955 = vmatmul.mubr.f32.gmra.mxu0 %v823
    %v956 = vpop.f32.mrf.mxu0
    %v957 = vadd.f32 %v778, %v956
    %v958 = vpop.f32.mrf.mxu0
    %959 = vmatprep.mubr.f32.mxu0 0.0
    %960 = vmatmul.mubr.f32.gmra.mxu0 %v826
    %v961 = vpop.f32.mrf.mxu0
    %v962 = vadd.f32 %v780, %v961
    %v963 = vpop.f32.mrf.mxu0
    %964 = vmatprep.mubr.f32.mxu0 0.0
    %965 = vmatmul.mubr.f32.gmra.mxu0 %v829
    %v966 = vpop.f32.mrf.mxu0
    %v967 = vadd.f32 %v782, %v966
    %v968 = vpop.f32.mrf.mxu0
    %969 = vmatprep.mubr.f32.mxu0 0.0
    %970 = vmatmul.mubr.f32.gmra.mxu0 %v832
    %v971 = vpop.f32.mrf.mxu0
    %v972 = vadd.f32 %v784, %v971
    %v973 = vpop.f32.mrf.mxu0
    %974 = vmatprep.mubr.f32.mxu0 0.0
    %975 = vmatmul.mubr.f32.gmra.mxu0 %v835
    %v976 = vpop.f32.mrf.mxu0
    %v977 = vadd.f32 %v786, %v976
    %v978 = vpop.f32.mrf.mxu0
    %979 = vmatprep.mubr.f32.mxu0 0.0
    %980 = vmatmul.mubr.f32.gmra.mxu0 %v838
    %v981 = vpop.f32.mrf.mxu0
    %v982 = vadd.f32 %v788, %v981
    %v983 = vpop.f32.mrf.mxu0
    %984 = vdwg.mxu0
    %v985 = vmax.f32 %v907, 0.0
    %v986 = vmax.f32 %v912, 0.0
    %v987 = vmax.f32 %v917, 0.0
    %v988 = vmax.f32 %v922, 0.0
    %v989 = vmax.f32 %v927, 0.0
    %v990 = vmax.f32 %v932, 0.0
    %v991 = vmax.f32 %v937, 0.0
    %v992 = vmax.f32 %v942, 0.0
    %v993 = vmax.f32 %v947, 0.0
    %v994 = vmax.f32 %v952, 0.0
    %v995 = vmax.f32 %v957, 0.0
    %v996 = vmax.f32 %v962, 0.0
    %v997 = vmax.f32 %v967, 0.0
    %v998 = vmax.f32 %v972, 0.0
    %v999 = vmax.f32 %v977, 0.0
    %v1000 = vmax.f32 %v982, 0.0
    %v1001 = vadd.f32 %v985, %v759
    %v1002 = vadd.f32 %v986, %v761
    %v1003 = vadd.f32 %v987, %v763
    %v1004 = vadd.f32 %v988, %v765
    %v1005 = vadd.f32 %v989, %v767
    %v1006 = vadd.f32 %v990, %v769
    %v1007 = vadd.f32 %v991, %v771
    %v1008 = vadd.f32 %v992, %v773
    %v1009 = vadd.f32 %v993, %v775
    %v1010 = vadd.f32 %v994, %v777
    %v1011 = vadd.f32 %v995, %v779
    %v1012 = vadd.f32 %v996, %v781
    %v1013 = vadd.f32 %v997, %v783
    %v1014 = vadd.f32 %v998, %v785
    %v1015 = vadd.f32 %v999, %v787
    %v1016 = vadd.f32 %v1000, %v789
    %v1017 = vpack.c.bf16 %v1002, %v1001
    %v1018 = vpack.c.bf16 %v1004, %v1003
    %v1019 = vpack.c.bf16 %v1006, %v1005
    %v1020 = vpack.c.bf16 %v1008, %v1007
    %v1021 = vpack.c.bf16 %v1010, %v1009
    %v1022 = vpack.c.bf16 %v1012, %v1011
    %v1023 = vpack.c.bf16 %v1014, %v1013
    %v1024 = vpack.c.bf16 %v1016, %v1015
    %v1033 = vunpack.c.l.b16 %v1017
    %v1034 = vunpack.c.h.b16 %v1017
    %v1035 = vunpack.c.l.b16 %v1018
    %v1036 = vunpack.c.h.b16 %v1018
    %v1037 = vunpack.c.l.b16 %v1019
    %v1038 = vunpack.c.h.b16 %v1019
    %v1039 = vunpack.c.l.b16 %v1020
    %v1040 = vunpack.c.h.b16 %v1020
    %v1041 = vunpack.c.l.b16 %v1021
    %v1042 = vunpack.c.h.b16 %v1021
    %v1043 = vunpack.c.l.b16 %v1022
    %v1044 = vunpack.c.h.b16 %v1022
    %v1045 = vunpack.c.l.b16 %v1023
    %v1046 = vunpack.c.h.b16 %v1023
    %v1047 = vunpack.c.l.b16 %v1024
    %v1048 = vunpack.c.h.b16 %v1024
    %v1049 = vpack.c.b16 %v1033, %v1033
    %v1050 = vpack.c.b16 %v1034, %v1034
    %v1051 = vpack.c.b16 %v1035, %v1035
    %v1052 = vpack.c.b16 %v1036, %v1036
    %v1053 = vpack.c.b16 %v1037, %v1037
    %v1054 = vpack.c.b16 %v1038, %v1038
    %v1055 = vpack.c.b16 %v1039, %v1039
    %v1056 = vpack.c.b16 %v1040, %v1040
    %v1057 = vpack.c.b16 %v1041, %v1041
    %v1058 = vpack.c.b16 %v1042, %v1042
    %v1059 = vpack.c.b16 %v1043, %v1043
    %v1060 = vpack.c.b16 %v1044, %v1044
    %v1061 = vpack.c.b16 %v1045, %v1045
    %v1062 = vpack.c.b16 %v1046, %v1046
    %v1063 = vpack.c.b16 %v1047, %v1047
    %v1064 = vpack.c.b16 %v1048, %v1048
    %1081 = vst [vmem:[%s7] sm:$0xf] %v1049
    %1082 = vst [vmem:[%s7 + $0x4] sm:$0xf] %v1050
    %1083 = vst [vmem:[%s7 + $0x8] sm:$0xf] %v1051
    %1084 = vst [vmem:[%s7 + $0xc] sm:$0xf] %v1052
    %1085 = vst [vmem:[%s7 + $0x10] sm:$0xf] %v1053
    %1086 = vst [vmem:[%s7 + $0x14] sm:$0xf] %v1054
    %1087 = vst [vmem:[%s7 + $0x18] sm:$0xf] %v1055
    %1088 = vst [vmem:[%s7 + $0x1c] sm:$0xf] %v1056
    %1089 = vst [vmem:[%s7 + $0x20] sm:$0xf] %v1057
    %1090 = vst [vmem:[%s7 + $0x24] sm:$0xf] %v1058
    %1091 = vst [vmem:[%s7 + $0x28] sm:$0xf] %v1059
    %1092 = vst [vmem:[%s7 + $0x2c] sm:$0xf] %v1060
    %1093 = vst [vmem:[%s7 + $0x30] sm:$0xf] %v1061
    %1094 = vst [vmem:[%s7 + $0x34] sm:$0xf] %v1062
    %1095 = vst [vmem:[%s7 + $0x38] sm:$0xf] %v1063
    %1096 = vst [vmem:[%s7 + $0x3c] sm:$0xf] %v1064
  $region37: #{enhanced_sage_forward.3} parent=0 // pred_fallthru
    _
  // Predicated region
  $region38: #{enhanced_sage_forward.3} parent=0 // pred_check
    _
  $region39: #{enhanced_sage_forward.3} parent=0 // pred_check_branch
    %1098 = sbr.rel (0) target = $region41
  $region40: #{enhanced_sage_forward.3} parent=0 // pred_region
    _
  $region41: #{enhanced_sage_forward.3} parent=0 // pred_fallthru
    _
  // Predicated region
  $region42: #{enhanced_sage_forward.3} parent=0 // pred_check
    _
  $region43: #{enhanced_sage_forward.3} parent=0 // pred_check_branch
    %1100 = sbr.rel (0) target = $region45
  $region44: #{enhanced_sage_forward.3} parent=0 // pred_region
    _
  $region45: #{enhanced_sage_forward.3} parent=0 // pred_fallthru
    _

// kernel: enhanced_sage_forward.4
$region0: #{enhanced_sage_forward.4}
  #allocation0 [shape = 'u32[]', space=smem, size = 0x4, offset = 0x4, fixed_abs, tag = 'smem constant byte address 0x4 - core index']
  #allocation1 [shape = 'u32[144,128]{1,0:T(1,128)}', space=vmem, size = 0x12000, scoped, tag = 'internal scratch']
  #allocation2 [shape = 'f32[128,128]{1,0:T(8,128)}', space=vmem, size = 0x10000, scoped, tag = 'scratch operand']
  #allocation3 [shape = 'f32[128,256]{1,0:T(8,128)}', space=vmem, size = 0x20000, scoped, tag = 'scratch operand']
  %s0 = inlined_call_operand.vmem [shape: s8[128,128], index: 0, kind: input, shape index: {}]
  %s1 = inlined_call_operand.vmem [shape: bf16[128,128], index: 1, kind: input, shape index: {}, may-alias: {1,2}]
  %s2 = inlined_call_operand.vmem [shape: bf16[128,128], index: 2, kind: input, shape index: {}, may-alias: {1,2}]
  %s3 = inlined_call_operand.vmem [shape: f32[128,1], index: 3, kind: input, shape index: {}]
  %s4 = inlined_call_operand.vmem [shape: f32[128,128], index: 4, kind: input, shape index: {}]
  %s5 = inlined_call_operand.vmem [shape: f32[128,256], index: 5, kind: input, shape index: {}]
  %s6 = inlined_call_operand.vmem [shape: f32[1,256], index: 6, kind: input, shape index: {}]
  %s7 = inlined_call_operand.vmem [shape: bf16[128,128], index: 7, kind: output, shape index: {}]
  %s8 = sld [smem:[#allocation0]]
  $region46: #{enhanced_sage_forward.4} parent=0
    _
  %s10 = ssub.s32 1, %s8
  %s11 = scalar_select 0, %s10, %s8
  // Predicated region
  $region2: #{enhanced_sage_forward.4} parent=0 // pred_check
    _
  $region3: #{enhanced_sage_forward.4} parent=0 // pred_check_branch
    %13 = sbr.rel (0) target = $region5
  $region4: #{enhanced_sage_forward.4} parent=0 // pred_region
    _
  $region5: #{enhanced_sage_forward.4} parent=0 // pred_fallthru
    _
  // Predicated region
  $region6: #{enhanced_sage_forward.4} parent=0 // pred_check
    _
  $region7: #{enhanced_sage_forward.4} parent=0 // pred_check_branch
    %15 = sbr.rel (0) target = $region9
  $region8: #{enhanced_sage_forward.4} parent=0 // pred_region
    _
  $region9: #{enhanced_sage_forward.4} parent=0 // pred_fallthru
    _
  // Predicated region
  $region10: #{enhanced_sage_forward.4} parent=0 // pred_check
    _
  $region11: #{enhanced_sage_forward.4} parent=0 // pred_check_branch
    %17 = sbr.rel (0) target = $region13
  $region12: #{enhanced_sage_forward.4} parent=0 // pred_region
    _
  $region13: #{enhanced_sage_forward.4} parent=0 // pred_fallthru
    _
  // Predicated region
  $region14: #{enhanced_sage_forward.4} parent=0 // pred_check
    _
  $region15: #{enhanced_sage_forward.4} parent=0 // pred_check_branch
    %19 = sbr.rel (0) target = $region17
  $region16: #{enhanced_sage_forward.4} parent=0 // pred_region
    _
  $region17: #{enhanced_sage_forward.4} parent=0 // pred_fallthru
    _
  // Predicated region
  $region18: #{enhanced_sage_forward.4} parent=0 // pred_check
    _
  $region19: #{enhanced_sage_forward.4} parent=0 // pred_check_branch
    %21 = sbr.rel (0) target = $region21
  $region20: #{enhanced_sage_forward.4} parent=0 // pred_region
    _
  $region21: #{enhanced_sage_forward.4} parent=0 // pred_fallthru
    _
  // Predicated region
  $region22: #{enhanced_sage_forward.4} parent=0 // pred_check
    _
  $region23: #{enhanced_sage_forward.4} parent=0 // pred_check_branch
    %23 = sbr.rel (0) target = $region25
  $region24: #{enhanced_sage_forward.4} parent=0 // pred_region
    _
  $region25: #{enhanced_sage_forward.4} parent=0 // pred_fallthru
    _
  // Predicated region
  $region26: #{enhanced_sage_forward.4} parent=0 // pred_check
    _
  $region27: #{enhanced_sage_forward.4} parent=0 // pred_check_branch
    %25 = sbr.rel (0) target = $region29
  $region28: #{enhanced_sage_forward.4} parent=0 // pred_region
    _
  $region29: #{enhanced_sage_forward.4} parent=0 // pred_fallthru
    _
  %p27 = scmp.eq.s32.totalorder 0, 0
  // Predicated region
  $region30: #{enhanced_sage_forward.4} parent=0 // pred_check
    %p28 = pneg %p27
  $region31: #{enhanced_sage_forward.4} parent=0 // pred_check_branch
    %30 = sbr.rel (%p28) target = $region33
  $region32: #{enhanced_sage_forward.4} parent=0 // pred_region
    %31 = vst [vmem:[#allocation2] sm:$0xff] 0.0
    %32 = vst [vmem:[#allocation2 + $0x8] sm:$0xff] 0.0
    %33 = vst [vmem:[#allocation2 + $0x10] sm:$0xff] 0.0
    %34 = vst [vmem:[#allocation2 + $0x18] sm:$0xff] 0.0
    %35 = vst [vmem:[#allocation2 + $0x20] sm:$0xff] 0.0
    %36 = vst [vmem:[#allocation2 + $0x28] sm:$0xff] 0.0
    %37 = vst [vmem:[#allocation2 + $0x30] sm:$0xff] 0.0
    %38 = vst [vmem:[#allocation2 + $0x38] sm:$0xff] 0.0
    %39 = vst [vmem:[#allocation2 + $0x40] sm:$0xff] 0.0
    %40 = vst [vmem:[#allocation2 + $0x48] sm:$0xff] 0.0
    %41 = vst [vmem:[#allocation2 + $0x50] sm:$0xff] 0.0
    %42 = vst [vmem:[#allocation2 + $0x58] sm:$0xff] 0.0
    %43 = vst [vmem:[#allocation2 + $0x60] sm:$0xff] 0.0
    %44 = vst [vmem:[#allocation2 + $0x68] sm:$0xff] 0.0
    %45 = vst [vmem:[#allocation2 + $0x70] sm:$0xff] 0.0
    %46 = vst [vmem:[#allocation2 + $0x78] sm:$0xff] 0.0
    %v47 = vld [vmem:[%s2] sm:$0xf]
    %v48 = vld [vmem:[%s2 + $0x4] sm:$0xf]
    %v49 = vld [vmem:[%s2 + $0x8] sm:$0xf]
    %v50 = vld [vmem:[%s2 + $0xc] sm:$0xf]
    %v51 = vld [vmem:[%s2 + $0x10] sm:$0xf]
    %v52 = vld [vmem:[%s2 + $0x14] sm:$0xf]
    %v53 = vld [vmem:[%s2 + $0x18] sm:$0xf]
    %v54 = vld [vmem:[%s2 + $0x1c] sm:$0xf]
    %v55 = vld [vmem:[%s2 + $0x20] sm:$0xf]
    %v56 = vld [vmem:[%s2 + $0x24] sm:$0xf]
    %v57 = vld [vmem:[%s2 + $0x28] sm:$0xf]
    %v58 = vld [vmem:[%s2 + $0x2c] sm:$0xf]
    %v59 = vld [vmem:[%s2 + $0x30] sm:$0xf]
    %v60 = vld [vmem:[%s2 + $0x34] sm:$0xf]
    %v61 = vld [vmem:[%s2 + $0x38] sm:$0xf]
    %v62 = vld [vmem:[%s2 + $0x3c] sm:$0xf]
    %v63 = vunpack.c.l.bf16 %v47
    %v64 = vunpack.c.l.bf16 %v48
    %v65 = vunpack.c.l.bf16 %v49
    %v66 = vunpack.c.l.bf16 %v50
    %v67 = vunpack.c.l.bf16 %v51
    %v68 = vunpack.c.l.bf16 %v52
    %v69 = vunpack.c.l.bf16 %v53
    %v70 = vunpack.c.l.bf16 %v54
    %v71 = vunpack.c.l.bf16 %v55
    %v72 = vunpack.c.l.bf16 %v56
    %v73 = vunpack.c.l.bf16 %v57
    %v74 = vunpack.c.l.bf16 %v58
    %v75 = vunpack.c.l.bf16 %v59
    %v76 = vunpack.c.l.bf16 %v60
    %v77 = vunpack.c.l.bf16 %v61
    %v78 = vunpack.c.l.bf16 %v62
    %v79 = vld [vmem:[%s5] sm:$0xff]
    %v80 = vld [vmem:[%s5 + $0x8] sm:$0xff]
    %v81 = vld [vmem:[%s5 + $0x10] sm:$0xff]
    %v82 = vld [vmem:[%s5 + $0x18] sm:$0xff]
    %v83 = vld [vmem:[%s5 + $0x20] sm:$0xff]
    %v84 = vld [vmem:[%s5 + $0x28] sm:$0xff]
    %v85 = vld [vmem:[%s5 + $0x30] sm:$0xff]
    %v86 = vld [vmem:[%s5 + $0x38] sm:$0xff]
    %v87 = vld [vmem:[%s5 + $0x40] sm:$0xff]
    %v88 = vld [vmem:[%s5 + $0x48] sm:$0xff]
    %v89 = vld [vmem:[%s5 + $0x50] sm:$0xff]
    %v90 = vld [vmem:[%s5 + $0x58] sm:$0xff]
    %v91 = vld [vmem:[%s5 + $0x60] sm:$0xff]
    %v92 = vld [vmem:[%s5 + $0x68] sm:$0xff]
    %v93 = vld [vmem:[%s5 + $0x70] sm:$0xff]
    %v94 = vld [vmem:[%s5 + $0x78] sm:$0xff]
    %v95 = vld [vmem:[%s5 + $0x80] sm:$0xff]
    %v96 = vld [vmem:[%s5 + $0x88] sm:$0xff]
    %v97 = vld [vmem:[%s5 + $0x90] sm:$0xff]
    %v98 = vld [vmem:[%s5 + $0x98] sm:$0xff]
    %v99 = vld [vmem:[%s5 + $0xa0] sm:$0xff]
    %v100 = vld [vmem:[%s5 + $0xa8] sm:$0xff]
    %v101 = vld [vmem:[%s5 + $0xb0] sm:$0xff]
    %v102 = vld [vmem:[%s5 + $0xb8] sm:$0xff]
    %v103 = vld [vmem:[%s5 + $0xc0] sm:$0xff]
    %v104 = vld [vmem:[%s5 + $0xc8] sm:$0xff]
    %v105 = vld [vmem:[%s5 + $0xd0] sm:$0xff]
    %v106 = vld [vmem:[%s5 + $0xd8] sm:$0xff]
    %v107 = vld [vmem:[%s5 + $0xe0] sm:$0xff]
    %v108 = vld [vmem:[%s5 + $0xe8] sm:$0xff]
    %v109 = vld [vmem:[%s5 + $0xf0] sm:$0xff]
    %v110 = vld [vmem:[%s5 + $0xf8] sm:$0xff]
    %v111 = vld [vmem:[%s6] sm:$0x3]
    %v113 = vlaneseq
    %v114 = vshrl.u32 %v113, 7
    %v115 = vsub.s32 0, %v114
    %v116 = vrot.slane %v111, %v115
    %v117 = vlaneseq
    %v118 = vshrl.u32 %v117, 7
    %v119 = vsub.s32 1, %v118
    %v120 = vrot.slane %v111, %v119
    %123 = vmatprep.subr.mxu0 %v110
    %124 = vmatpush1.msra.mxu0 %v109
    %125 = vmatprep.subr.mxu0 %v108
    %126 = vmatpush1.msra.mxu0 %v107
    %127 = vmatprep.subr.mxu0 %v106
    %128 = vmatpush1.msra.mxu0 %v105
    %129 = vmatprep.subr.mxu0 %v104
    %130 = vmatpush1.msra.mxu0 %v103
    %131 = vmatprep.subr.mxu0 %v102
    %132 = vmatpush1.msra.mxu0 %v101
    %133 = vmatprep.subr.mxu0 %v100
    %134 = vmatpush1.msra.mxu0 %v99
    %135 = vmatprep.subr.mxu0 %v98
    %136 = vmatpush1.msra.mxu0 %v97
    %137 = vmatprep.subr.mxu0 %v96
    %138 = vmatpush1.msra.mxu0 %v95
    %139 = vmatprep.subr.mxu0 %v94
    %140 = vmatpush1.msra.mxu0 %v93
    %141 = vmatprep.subr.mxu0 %v92
    %142 = vmatpush1.msra.mxu0 %v91
    %143 = vmatprep.subr.mxu0 %v90
    %144 = vmatpush1.msra.mxu0 %v89
    %145 = vmatprep.subr.mxu0 %v88
    %146 = vmatpush1.msra.mxu0 %v87
    %147 = vmatprep.subr.mxu0 %v86
    %148 = vmatpush1.msra.mxu0 %v85
    %149 = vmatprep.subr.mxu0 %v84
    %150 = vmatpush1.msra.mxu0 %v83
    %151 = vmatprep.subr.mxu0 %v82
    %152 = vmatpush1.msra.mxu0 %v81
    %153 = vmatprep.subr.mxu0 %v80
    %154 = vmatpush1.msra.mxu0 %v79
    %155 = vmatprep.subr.mxu0 0.0
    %156 = vmatpush2.msra.mxu0 0.0
    %157 = vmatprep.subr.mxu0 0.0
    %158 = vmatpush2.msra.mxu0 0.0
    %159 = vmatprep.subr.mxu0 0.0
    %160 = vmatpush2.msra.mxu0 0.0
    %161 = vmatprep.subr.mxu0 0.0
    %162 = vmatpush2.msra.mxu0 0.0
    %163 = vmatprep.subr.mxu0 0.0
    %164 = vmatpush2.msra.mxu0 0.0
    %165 = vmatprep.subr.mxu0 0.0
    %166 = vmatpush2.msra.mxu0 0.0
    %167 = vmatprep.subr.mxu0 0.0
    %168 = vmatpush2.msra.mxu0 0.0
    %169 = vmatprep.subr.mxu0 0.0
    %170 = vmatpush2.msra.mxu0 0.0
    %171 = vmatprep.subr.mxu0 0.0
    %172 = vmatpush2.msra.mxu0 0.0
    %173 = vmatprep.subr.mxu0 0.0
    %174 = vmatpush2.msra.mxu0 0.0
    %175 = vmatprep.subr.mxu0 0.0
    %176 = vmatpush2.msra.mxu0 0.0
    %177 = vmatprep.subr.mxu0 0.0
    %178 = vmatpush2.msra.mxu0 0.0
    %179 = vmatprep.subr.mxu0 0.0
    %180 = vmatpush2.msra.mxu0 0.0
    %181 = vmatprep.subr.mxu0 0.0
    %182 = vmatpush2.msra.mxu0 0.0
    %183 = vmatprep.subr.mxu0 0.0
    %184 = vmatpush2.msra.mxu0 0.0
    %185 = vmatprep.subr.mxu0 0.0
    %186 = vmatpush2.msra.mxu0 0.0
    %187 = vmatprep.mubr.f32.mxu0 0.0
    %188 = vmatmul.mubr.f32.gmra.mxu0 %v63
    %v189 = vpop.f32.mrf.mxu0
    %v190 = vadd.f32 %v116, %v189
    %v191 = vpop.f32.mrf.mxu0
    %v192 = vadd.f32 %v120, %v191
    %193 = vmatprep.mubr.f32.mxu0 0.0
    %194 = vmatmul.mubr.f32.gmra.mxu0 %v64
    %v195 = vpop.f32.mrf.mxu0
    %v196 = vadd.f32 %v116, %v195
    %v197 = vpop.f32.mrf.mxu0
    %v198 = vadd.f32 %v120, %v197
    %199 = vmatprep.mubr.f32.mxu0 0.0
    %200 = vmatmul.mubr.f32.gmra.mxu0 %v65
    %v201 = vpop.f32.mrf.mxu0
    %v202 = vadd.f32 %v116, %v201
    %v203 = vpop.f32.mrf.mxu0
    %v204 = vadd.f32 %v120, %v203
    %205 = vmatprep.mubr.f32.mxu0 0.0
    %206 = vmatmul.mubr.f32.gmra.mxu0 %v66
    %v207 = vpop.f32.mrf.mxu0
    %v208 = vadd.f32 %v116, %v207
    %v209 = vpop.f32.mrf.mxu0
    %v210 = vadd.f32 %v120, %v209
    %211 = vmatprep.mubr.f32.mxu0 0.0
    %212 = vmatmul.mubr.f32.gmra.mxu0 %v67
    %v213 = vpop.f32.mrf.mxu0
    %v214 = vadd.f32 %v116, %v213
    %v215 = vpop.f32.mrf.mxu0
    %v216 = vadd.f32 %v120, %v215
    %217 = vmatprep.mubr.f32.mxu0 0.0
    %218 = vmatmul.mubr.f32.gmra.mxu0 %v68
    %v219 = vpop.f32.mrf.mxu0
    %v220 = vadd.f32 %v116, %v219
    %v221 = vpop.f32.mrf.mxu0
    %v222 = vadd.f32 %v120, %v221
    %223 = vmatprep.mubr.f32.mxu0 0.0
    %224 = vmatmul.mubr.f32.gmra.mxu0 %v69
    %v225 = vpop.f32.mrf.mxu0
    %v226 = vadd.f32 %v116, %v225
    %v227 = vpop.f32.mrf.mxu0
    %v228 = vadd.f32 %v120, %v227
    %229 = vmatprep.mubr.f32.mxu0 0.0
    %230 = vmatmul.mubr.f32.gmra.mxu0 %v70
    %v231 = vpop.f32.mrf.mxu0
    %v232 = vadd.f32 %v116, %v231
    %v233 = vpop.f32.mrf.mxu0
    %v234 = vadd.f32 %v120, %v233
    %235 = vmatprep.mubr.f32.mxu0 0.0
    %236 = vmatmul.mubr.f32.gmra.mxu0 %v71
    %v237 = vpop.f32.mrf.mxu0
    %v238 = vadd.f32 %v116, %v237
    %v239 = vpop.f32.mrf.mxu0
    %v240 = vadd.f32 %v120, %v239
    %241 = vmatprep.mubr.f32.mxu0 0.0
    %242 = vmatmul.mubr.f32.gmra.mxu0 %v72
    %v243 = vpop.f32.mrf.mxu0
    %v244 = vadd.f32 %v116, %v243
    %v245 = vpop.f32.mrf.mxu0
    %v246 = vadd.f32 %v120, %v245
    %247 = vmatprep.mubr.f32.mxu0 0.0
    %248 = vmatmul.mubr.f32.gmra.mxu0 %v73
    %v249 = vpop.f32.mrf.mxu0
    %v250 = vadd.f32 %v116, %v249
    %v251 = vpop.f32.mrf.mxu0
    %v252 = vadd.f32 %v120, %v251
    %253 = vmatprep.mubr.f32.mxu0 0.0
    %254 = vmatmul.mubr.f32.gmra.mxu0 %v74
    %v255 = vpop.f32.mrf.mxu0
    %v256 = vadd.f32 %v116, %v255
    %v257 = vpop.f32.mrf.mxu0
    %v258 = vadd.f32 %v120, %v257
    %259 = vmatprep.mubr.f32.mxu0 0.0
    %260 = vmatmul.mubr.f32.gmra.mxu0 %v75
    %v261 = vpop.f32.mrf.mxu0
    %v262 = vadd.f32 %v116, %v261
    %v263 = vpop.f32.mrf.mxu0
    %v264 = vadd.f32 %v120, %v263
    %265 = vmatprep.mubr.f32.mxu0 0.0
    %266 = vmatmul.mubr.f32.gmra.mxu0 %v76
    %v267 = vpop.f32.mrf.mxu0
    %v268 = vadd.f32 %v116, %v267
    %v269 = vpop.f32.mrf.mxu0
    %v270 = vadd.f32 %v120, %v269
    %271 = vmatprep.mubr.f32.mxu0 0.0
    %272 = vmatmul.mubr.f32.gmra.mxu0 %v77
    %v273 = vpop.f32.mrf.mxu0
    %v274 = vadd.f32 %v116, %v273
    %v275 = vpop.f32.mrf.mxu0
    %v276 = vadd.f32 %v120, %v275
    %277 = vmatprep.mubr.f32.mxu0 0.0
    %278 = vmatmul.mubr.f32.gmra.mxu0 %v78
    %v279 = vpop.f32.mrf.mxu0
    %v280 = vadd.f32 %v116, %v279
    %v281 = vpop.f32.mrf.mxu0
    %v282 = vadd.f32 %v120, %v281
    %283 = vdwg.mxu0
    %284 = vst [vmem:[#allocation3] sm:$0xff] %v190
    %285 = vst [vmem:[#allocation3 + $0x8] sm:$0xff] %v192
    %286 = vst [vmem:[#allocation3 + $0x10] sm:$0xff] %v196
    %287 = vst [vmem:[#allocation3 + $0x18] sm:$0xff] %v198
    %288 = vst [vmem:[#allocation3 + $0x20] sm:$0xff] %v202
    %289 = vst [vmem:[#allocation3 + $0x28] sm:$0xff] %v204
    %290 = vst [vmem:[#allocation3 + $0x30] sm:$0xff] %v208
    %291 = vst [vmem:[#allocation3 + $0x38] sm:$0xff] %v210
    %292 = vst [vmem:[#allocation3 + $0x40] sm:$0xff] %v214
    %293 = vst [vmem:[#allocation3 + $0x48] sm:$0xff] %v216
    %294 = vst [vmem:[#allocation3 + $0x50] sm:$0xff] %v220
    %295 = vst [vmem:[#allocation3 + $0x58] sm:$0xff] %v222
    %296 = vst [vmem:[#allocation3 + $0x60] sm:$0xff] %v226
    %297 = vst [vmem:[#allocation3 + $0x68] sm:$0xff] %v228
    %298 = vst [vmem:[#allocation3 + $0x70] sm:$0xff] %v232
    %299 = vst [vmem:[#allocation3 + $0x78] sm:$0xff] %v234
    %300 = vst [vmem:[#allocation3 + $0x80] sm:$0xff] %v238
    %301 = vst [vmem:[#allocation3 + $0x88] sm:$0xff] %v240
    %302 = vst [vmem:[#allocation3 + $0x90] sm:$0xff] %v244
    %303 = vst [vmem:[#allocation3 + $0x98] sm:$0xff] %v246
    %304 = vst [vmem:[#allocation3 + $0xa0] sm:$0xff] %v250
    %305 = vst [vmem:[#allocation3 + $0xa8] sm:$0xff] %v252
    %306 = vst [vmem:[#allocation3 + $0xb0] sm:$0xff] %v256
    %307 = vst [vmem:[#allocation3 + $0xb8] sm:$0xff] %v258
    %308 = vst [vmem:[#allocation3 + $0xc0] sm:$0xff] %v262
    %309 = vst [vmem:[#allocation3 + $0xc8] sm:$0xff] %v264
    %310 = vst [vmem:[#allocation3 + $0xd0] sm:$0xff] %v268
    %311 = vst [vmem:[#allocation3 + $0xd8] sm:$0xff] %v270
    %312 = vst [vmem:[#allocation3 + $0xe0] sm:$0xff] %v274
    %313 = vst [vmem:[#allocation3 + $0xe8] sm:$0xff] %v276
    %314 = vst [vmem:[#allocation3 + $0xf0] sm:$0xff] %v280
    %315 = vst [vmem:[#allocation3 + $0xf8] sm:$0xff] %v282
  $region33: #{enhanced_sage_forward.4} parent=0 // pred_fallthru
    _
  %v316 = vld [vmem:[#allocation2] sm:$0xff]
  %v317 = vld [vmem:[#allocation2 + $0x8] sm:$0xff]
  %v318 = vld [vmem:[#allocation2 + $0x10] sm:$0xff]
  %v319 = vld [vmem:[#allocation2 + $0x18] sm:$0xff]
  %v320 = vld [vmem:[#allocation2 + $0x20] sm:$0xff]
  %v321 = vld [vmem:[#allocation2 + $0x28] sm:$0xff]
  %v322 = vld [vmem:[#allocation2 + $0x30] sm:$0xff]
  %v323 = vld [vmem:[#allocation2 + $0x38] sm:$0xff]
  %v324 = vld [vmem:[#allocation2 + $0x40] sm:$0xff]
  %v325 = vld [vmem:[#allocation2 + $0x48] sm:$0xff]
  %v326 = vld [vmem:[#allocation2 + $0x50] sm:$0xff]
  %v327 = vld [vmem:[#allocation2 + $0x58] sm:$0xff]
  %v328 = vld [vmem:[#allocation2 + $0x60] sm:$0xff]
  %v329 = vld [vmem:[#allocation2 + $0x68] sm:$0xff]
  %v330 = vld [vmem:[#allocation2 + $0x70] sm:$0xff]
  %v331 = vld [vmem:[#allocation2 + $0x78] sm:$0xff]
  %v332 = vld [vmem:[%s0] sm:$0x3]
  %v333 = vld [vmem:[%s0 + $0x2] sm:$0x3]
  %v334 = vld [vmem:[%s0 + $0x4] sm:$0x3]
  %v335 = vld [vmem:[%s0 + $0x6] sm:$0x3]
  %v336 = vld [vmem:[%s0 + $0x8] sm:$0x3]
  %v337 = vld [vmem:[%s0 + $0xa] sm:$0x3]
  %v338 = vld [vmem:[%s0 + $0xc] sm:$0x3]
  %v339 = vld [vmem:[%s0 + $0xe] sm:$0x3]
  %v340 = vld [vmem:[%s0 + $0x10] sm:$0x3]
  %v341 = vld [vmem:[%s0 + $0x12] sm:$0x3]
  %v342 = vld [vmem:[%s0 + $0x14] sm:$0x3]
  %v343 = vld [vmem:[%s0 + $0x16] sm:$0x3]
  %v344 = vld [vmem:[%s0 + $0x18] sm:$0x3]
  %v345 = vld [vmem:[%s0 + $0x1a] sm:$0x3]
  %v346 = vld [vmem:[%s0 + $0x1c] sm:$0x3]
  %v347 = vld [vmem:[%s0 + $0x1e] sm:$0x3]
  %v348 = vunpack.c.l.s8.bf16 %v332
  %v349 = vunpack.c.l.s8.bf16 %v333
  %v350 = vunpack.c.l.s8.bf16 %v334
  %v351 = vunpack.c.l.s8.bf16 %v335
  %v352 = vunpack.c.l.s8.bf16 %v336
  %v353 = vunpack.c.l.s8.bf16 %v337
  %v354 = vunpack.c.l.s8.bf16 %v338
  %v355 = vunpack.c.l.s8.bf16 %v339
  %v356 = vunpack.c.l.s8.bf16 %v340
  %v357 = vunpack.c.l.s8.bf16 %v341
  %v358 = vunpack.c.l.s8.bf16 %v342
  %v359 = vunpack.c.l.s8.bf16 %v343
  %v360 = vunpack.c.l.s8.bf16 %v344
  %v361 = vunpack.c.l.s8.bf16 %v345
  %v362 = vunpack.c.l.s8.bf16 %v346
  %v363 = vunpack.c.l.s8.bf16 %v347
  %v364 = vld [vmem:[%s1] sm:$0xf]
  %v365 = vld [vmem:[%s1 + $0x4] sm:$0xf]
  %v366 = vld [vmem:[%s1 + $0x8] sm:$0xf]
  %v367 = vld [vmem:[%s1 + $0xc] sm:$0xf]
  %v368 = vld [vmem:[%s1 + $0x10] sm:$0xf]
  %v369 = vld [vmem:[%s1 + $0x14] sm:$0xf]
  %v370 = vld [vmem:[%s1 + $0x18] sm:$0xf]
  %v371 = vld [vmem:[%s1 + $0x1c] sm:$0xf]
  %v372 = vld [vmem:[%s1 + $0x20] sm:$0xf]
  %v373 = vld [vmem:[%s1 + $0x24] sm:$0xf]
  %v374 = vld [vmem:[%s1 + $0x28] sm:$0xf]
  %v375 = vld [vmem:[%s1 + $0x2c] sm:$0xf]
  %v376 = vld [vmem:[%s1 + $0x30] sm:$0xf]
  %v377 = vld [vmem:[%s1 + $0x34] sm:$0xf]
  %v378 = vld [vmem:[%s1 + $0x38] sm:$0xf]
  %v379 = vld [vmem:[%s1 + $0x3c] sm:$0xf]
  %v396 = vunpack.c.l.b16 %v348
  %v397 = vunpack.c.l.b16 %v349
  %v398 = vunpack.c.l.b16 %v350
  %v399 = vunpack.c.l.b16 %v351
  %v400 = vunpack.c.l.b16 %v352
  %v401 = vunpack.c.l.b16 %v353
  %v402 = vunpack.c.l.b16 %v354
  %v403 = vunpack.c.l.b16 %v355
  %v404 = vunpack.c.l.b16 %v356
  %v405 = vunpack.c.l.b16 %v357
  %v406 = vunpack.c.l.b16 %v358
  %v407 = vunpack.c.l.b16 %v359
  %v408 = vunpack.c.l.b16 %v360
  %v409 = vunpack.c.l.b16 %v361
  %v410 = vunpack.c.l.b16 %v362
  %v411 = vunpack.c.l.b16 %v363
  %v412 = vpack.c.b16 %v397, %v396
  %v413 = vpack.c.b16 %v399, %v398
  %v414 = vpack.c.b16 %v401, %v400
  %v415 = vpack.c.b16 %v403, %v402
  %v416 = vpack.c.b16 %v405, %v404
  %v417 = vpack.c.b16 %v407, %v406
  %v418 = vpack.c.b16 %v409, %v408
  %v419 = vpack.c.b16 %v411, %v410
  %v444 = vunpack.c.l.b16 %v364
  %v445 = vunpack.c.l.b16 %v365
  %v446 = vunpack.c.l.b16 %v366
  %v447 = vunpack.c.l.b16 %v367
  %v448 = vunpack.c.l.b16 %v368
  %v449 = vunpack.c.l.b16 %v369
  %v450 = vunpack.c.l.b16 %v370
  %v451 = vunpack.c.l.b16 %v371
  %v452 = vunpack.c.l.b16 %v372
  %v453 = vunpack.c.l.b16 %v373
  %v454 = vunpack.c.l.b16 %v374
  %v455 = vunpack.c.l.b16 %v375
  %v456 = vunpack.c.l.b16 %v376
  %v457 = vunpack.c.l.b16 %v377
  %v458 = vunpack.c.l.b16 %v378
  %v459 = vunpack.c.l.b16 %v379
  %v460 = vpack.c.b16 %v445, %v444
  %v461 = vpack.c.b16 %v447, %v446
  %v462 = vpack.c.b16 %v449, %v448
  %v463 = vpack.c.b16 %v451, %v450
  %v464 = vpack.c.b16 %v453, %v452
  %v465 = vpack.c.b16 %v455, %v454
  %v466 = vpack.c.b16 %v457, %v456
  %v467 = vpack.c.b16 %v459, %v458
  %476 = vmatprep.subr.bf16.mxu0 0
  %477 = vmatpush1.bf16.msra.mxu0 %v467
  %478 = vmatprep.subr.bf16.mxu0 0
  %479 = vmatpush1.bf16.msra.mxu0 %v466
  %480 = vmatprep.subr.bf16.mxu0 0
  %481 = vmatpush1.bf16.msra.mxu0 %v465
  %482 = vmatprep.subr.bf16.mxu0 0
  %483 = vmatpush1.bf16.msra.mxu0 %v464
  %484 = vmatprep.subr.bf16.mxu0 0
  %485 = vmatpush1.bf16.msra.mxu0 %v463
  %486 = vmatprep.subr.bf16.mxu0 0
  %487 = vmatpush1.bf16.msra.mxu0 %v462
  %488 = vmatprep.subr.bf16.mxu0 0
  %489 = vmatpush1.bf16.msra.mxu0 %v461
  %490 = vmatprep.subr.bf16.mxu0 0
  %491 = vmatpush1.bf16.msra.mxu0 %v460
  %492 = vmatprep.subr.bf16.mxu0 0
  %493 = vmatpush2.bf16.msra.mxu0 0
  %494 = vmatprep.subr.bf16.mxu0 0
  %495 = vmatpush2.bf16.msra.mxu0 0
  %496 = vmatprep.subr.bf16.mxu0 0
  %497 = vmatpush2.bf16.msra.mxu0 0
  %498 = vmatprep.subr.bf16.mxu0 0
  %499 = vmatpush2.bf16.msra.mxu0 0
  %500 = vmatprep.subr.bf16.mxu0 0
  %501 = vmatpush2.bf16.msra.mxu0 0
  %502 = vmatprep.subr.bf16.mxu0 0
  %503 = vmatpush2.bf16.msra.mxu0 0
  %504 = vmatprep.subr.bf16.mxu0 0
  %505 = vmatpush2.bf16.msra.mxu0 0
  %506 = vmatprep.subr.bf16.mxu0 0
  %507 = vmatpush2.bf16.msra.mxu0 0
  %508 = vmatprep.mubr.bf16.mxu0 0
  %509 = vmatmul.mubr.bf16.gmra.mxu0 %v412
  %v510 = vpop.f32.mrf.mxu0
  %v511 = vadd.f32 0.0, %v510
  %v512 = vpop.f32.mrf.mxu0
  %v513 = vpop.f32.mrf.mxu0
  %v514 = vadd.f32 0.0, %v513
  %v515 = vpop.f32.mrf.mxu0
  %516 = vmatprep.mubr.bf16.mxu0 0
  %517 = vmatmul.mubr.bf16.gmra.mxu0 %v413
  %v518 = vpop.f32.mrf.mxu0
  %v519 = vadd.f32 0.0, %v518
  %v520 = vpop.f32.mrf.mxu0
  %v521 = vpop.f32.mrf.mxu0
  %v522 = vadd.f32 0.0, %v521
  %v523 = vpop.f32.mrf.mxu0
  %524 = vmatprep.mubr.bf16.mxu0 0
  %525 = vmatmul.mubr.bf16.gmra.mxu0 %v414
  %v526 = vpop.f32.mrf.mxu0
  %v527 = vadd.f32 0.0, %v526
  %v528 = vpop.f32.mrf.mxu0
  %v529 = vpop.f32.mrf.mxu0
  %v530 = vadd.f32 0.0, %v529
  %v531 = vpop.f32.mrf.mxu0
  %532 = vmatprep.mubr.bf16.mxu0 0
  %533 = vmatmul.mubr.bf16.gmra.mxu0 %v415
  %v534 = vpop.f32.mrf.mxu0
  %v535 = vadd.f32 0.0, %v534
  %v536 = vpop.f32.mrf.mxu0
  %v537 = vpop.f32.mrf.mxu0
  %v538 = vadd.f32 0.0, %v537
  %v539 = vpop.f32.mrf.mxu0
  %540 = vmatprep.mubr.bf16.mxu0 0
  %541 = vmatmul.mubr.bf16.gmra.mxu0 %v416
  %v542 = vpop.f32.mrf.mxu0
  %v543 = vadd.f32 0.0, %v542
  %v544 = vpop.f32.mrf.mxu0
  %v545 = vpop.f32.mrf.mxu0
  %v546 = vadd.f32 0.0, %v545
  %v547 = vpop.f32.mrf.mxu0
  %548 = vmatprep.mubr.bf16.mxu0 0
  %549 = vmatmul.mubr.bf16.gmra.mxu0 %v417
  %v550 = vpop.f32.mrf.mxu0
  %v551 = vadd.f32 0.0, %v550
  %v552 = vpop.f32.mrf.mxu0
  %v553 = vpop.f32.mrf.mxu0
  %v554 = vadd.f32 0.0, %v553
  %v555 = vpop.f32.mrf.mxu0
  %556 = vmatprep.mubr.bf16.mxu0 0
  %557 = vmatmul.mubr.bf16.gmra.mxu0 %v418
  %v558 = vpop.f32.mrf.mxu0
  %v559 = vadd.f32 0.0, %v558
  %v560 = vpop.f32.mrf.mxu0
  %v561 = vpop.f32.mrf.mxu0
  %v562 = vadd.f32 0.0, %v561
  %v563 = vpop.f32.mrf.mxu0
  %564 = vmatprep.mubr.bf16.mxu0 0
  %565 = vmatmul.mubr.bf16.gmra.mxu0 %v419
  %v566 = vpop.f32.mrf.mxu0
  %v567 = vadd.f32 0.0, %v566
  %v568 = vpop.f32.mrf.mxu0
  %v569 = vpop.f32.mrf.mxu0
  %v570 = vadd.f32 0.0, %v569
  %v571 = vpop.f32.mrf.mxu0
  %572 = vdwg.mxu0
  %v573 = vadd.f32 %v316, %v511
  %v574 = vadd.f32 %v317, %v514
  %v575 = vadd.f32 %v318, %v519
  %v576 = vadd.f32 %v319, %v522
  %v577 = vadd.f32 %v320, %v527
  %v578 = vadd.f32 %v321, %v530
  %v579 = vadd.f32 %v322, %v535
  %v580 = vadd.f32 %v323, %v538
  %v581 = vadd.f32 %v324, %v543
  %v582 = vadd.f32 %v325, %v546
  %v583 = vadd.f32 %v326, %v551
  %v584 = vadd.f32 %v327, %v554
  %v585 = vadd.f32 %v328, %v559
  %v586 = vadd.f32 %v329, %v562
  %v587 = vadd.f32 %v330, %v567
  %v588 = vadd.f32 %v331, %v570
  %589 = vst [vmem:[#allocation2] sm:$0xff] %v573
  %590 = vst [vmem:[#allocation2 + $0x8] sm:$0xff] %v574
  %591 = vst [vmem:[#allocation2 + $0x10] sm:$0xff] %v575
  %592 = vst [vmem:[#allocation2 + $0x18] sm:$0xff] %v576
  %593 = vst [vmem:[#allocation2 + $0x20] sm:$0xff] %v577
  %594 = vst [vmem:[#allocation2 + $0x28] sm:$0xff] %v578
  %595 = vst [vmem:[#allocation2 + $0x30] sm:$0xff] %v579
  %596 = vst [vmem:[#allocation2 + $0x38] sm:$0xff] %v580
  %597 = vst [vmem:[#allocation2 + $0x40] sm:$0xff] %v581
  %598 = vst [vmem:[#allocation2 + $0x48] sm:$0xff] %v582
  %599 = vst [vmem:[#allocation2 + $0x50] sm:$0xff] %v583
  %600 = vst [vmem:[#allocation2 + $0x58] sm:$0xff] %v584
  %601 = vst [vmem:[#allocation2 + $0x60] sm:$0xff] %v585
  %602 = vst [vmem:[#allocation2 + $0x68] sm:$0xff] %v586
  %603 = vst [vmem:[#allocation2 + $0x70] sm:$0xff] %v587
  %604 = vst [vmem:[#allocation2 + $0x78] sm:$0xff] %v588
  // Predicated region
  $region34: #{enhanced_sage_forward.4} parent=0 // pred_check
    %p605 = pneg %p27
  $region35: #{enhanced_sage_forward.4} parent=0 // pred_check_branch
    %607 = sbr.rel (%p605) target = $region37
  $region36: #{enhanced_sage_forward.4} parent=0 // pred_region
    %v608 = vld [vmem:[#allocation2] sm:$0xff]
    %v609 = vld [vmem:[#allocation2 + $0x8] sm:$0xff]
    %v610 = vld [vmem:[#allocation2 + $0x10] sm:$0xff]
    %v611 = vld [vmem:[#allocation2 + $0x18] sm:$0xff]
    %v612 = vld [vmem:[#allocation2 + $0x20] sm:$0xff]
    %v613 = vld [vmem:[#allocation2 + $0x28] sm:$0xff]
    %v614 = vld [vmem:[#allocation2 + $0x30] sm:$0xff]
    %v615 = vld [vmem:[#allocation2 + $0x38] sm:$0xff]
    %v616 = vld [vmem:[#allocation2 + $0x40] sm:$0xff]
    %v617 = vld [vmem:[#allocation2 + $0x48] sm:$0xff]
    %v618 = vld [vmem:[#allocation2 + $0x50] sm:$0xff]
    %v619 = vld [vmem:[#allocation2 + $0x58] sm:$0xff]
    %v620 = vld [vmem:[#allocation2 + $0x60] sm:$0xff]
    %v621 = vld [vmem:[#allocation2 + $0x68] sm:$0xff]
    %v622 = vld [vmem:[#allocation2 + $0x70] sm:$0xff]
    %v623 = vld [vmem:[#allocation2 + $0x78] sm:$0xff]
    %v624 = vld [vmem:[%s3] sm:$0xff]
    %v625 = vld [vmem:[%s3 + $0x8] sm:$0xff]
    %v626 = vld [vmem:[%s3 + $0x10] sm:$0xff]
    %v627 = vld [vmem:[%s3 + $0x18] sm:$0xff]
    %v628 = vld [vmem:[%s3 + $0x20] sm:$0xff]
    %v629 = vld [vmem:[%s3 + $0x28] sm:$0xff]
    %v630 = vld [vmem:[%s3 + $0x30] sm:$0xff]
    %v631 = vld [vmem:[%s3 + $0x38] sm:$0xff]
    %v632 = vld [vmem:[%s3 + $0x40] sm:$0xff]
    %v633 = vld [vmem:[%s3 + $0x48] sm:$0xff]
    %v634 = vld [vmem:[%s3 + $0x50] sm:$0xff]
    %v635 = vld [vmem:[%s3 + $0x58] sm:$0xff]
    %v636 = vld [vmem:[%s3 + $0x60] sm:$0xff]
    %v637 = vld [vmem:[%s3 + $0x68] sm:$0xff]
    %v638 = vld [vmem:[%s3 + $0x70] sm:$0xff]
    %v639 = vld [vmem:[%s3 + $0x78] sm:$0xff]
    %641 = vset.pattern.permute.xlu0 0
    %642 = vperm.xlu0 %641, %v624
    %v643 = vpop.permute.xlu0 %642
    %646 = vset.pattern.permute.xlu0 0
    %647 = vperm.xlu0 %646, %v625
    %v648 = vpop.permute.xlu0 %647
    %651 = vset.pattern.permute.xlu0 0
    %652 = vperm.xlu0 %651, %v626
    %v653 = vpop.permute.xlu0 %652
    %656 = vset.pattern.permute.xlu0 0
    %657 = vperm.xlu0 %656, %v627
    %v658 = vpop.permute.xlu0 %657
    %661 = vset.pattern.permute.xlu0 0
    %662 = vperm.xlu0 %661, %v628
    %v663 = vpop.permute.xlu0 %662
    %666 = vset.pattern.permute.xlu0 0
    %667 = vperm.xlu0 %666, %v629
    %v668 = vpop.permute.xlu0 %667
    %671 = vset.pattern.permute.xlu0 0
    %672 = vperm.xlu0 %671, %v630
    %v673 = vpop.permute.xlu0 %672
    %676 = vset.pattern.permute.xlu0 0
    %677 = vperm.xlu0 %676, %v631
    %v678 = vpop.permute.xlu0 %677
    %681 = vset.pattern.permute.xlu0 0
    %682 = vperm.xlu0 %681, %v632
    %v683 = vpop.permute.xlu0 %682
    %686 = vset.pattern.permute.xlu0 0
    %687 = vperm.xlu0 %686, %v633
    %v688 = vpop.permute.xlu0 %687
    %691 = vset.pattern.permute.xlu0 0
    %692 = vperm.xlu0 %691, %v634
    %v693 = vpop.permute.xlu0 %692
    %696 = vset.pattern.permute.xlu0 0
    %697 = vperm.xlu0 %696, %v635
    %v698 = vpop.permute.xlu0 %697
    %701 = vset.pattern.permute.xlu0 0
    %702 = vperm.xlu0 %701, %v636
    %v703 = vpop.permute.xlu0 %702
    %706 = vset.pattern.permute.xlu0 0
    %707 = vperm.xlu0 %706, %v637
    %v708 = vpop.permute.xlu0 %707
    %711 = vset.pattern.permute.xlu0 0
    %712 = vperm.xlu0 %711, %v638
    %v713 = vpop.permute.xlu0 %712
    %716 = vset.pattern.permute.xlu0 0
    %717 = vperm.xlu0 %716, %v639
    %v718 = vpop.permute.xlu0 %717
    %v720 = vmul.f32 %v608, %v643
    %v721 = vmul.f32 %v609, %v648
    %v722 = vmul.f32 %v610, %v653
    %v723 = vmul.f32 %v611, %v658
    %v724 = vmul.f32 %v612, %v663
    %v725 = vmul.f32 %v613, %v668
    %v726 = vmul.f32 %v614, %v673
    %v727 = vmul.f32 %v615, %v678
    %v728 = vmul.f32 %v616, %v683
    %v729 = vmul.f32 %v617, %v688
    %v730 = vmul.f32 %v618, %v693
    %v731 = vmul.f32 %v619, %v698
    %v732 = vmul.f32 %v620, %v703
    %v733 = vmul.f32 %v621, %v708
    %v734 = vmul.f32 %v622, %v713
    %v735 = vmul.f32 %v623, %v718
    %v736 = vld [vmem:[#allocation3] sm:$0xff]
    %v737 = vld [vmem:[#allocation3 + $0x8] sm:$0xff]
    %v738 = vld [vmem:[#allocation3 + $0x10] sm:$0xff]
    %v739 = vld [vmem:[#allocation3 + $0x18] sm:$0xff]
    %v740 = vld [vmem:[#allocation3 + $0x20] sm:$0xff]
    %v741 = vld [vmem:[#allocation3 + $0x28] sm:$0xff]
    %v742 = vld [vmem:[#allocation3 + $0x30] sm:$0xff]
    %v743 = vld [vmem:[#allocation3 + $0x38] sm:$0xff]
    %v744 = vld [vmem:[#allocation3 + $0x40] sm:$0xff]
    %v745 = vld [vmem:[#allocation3 + $0x48] sm:$0xff]
    %v746 = vld [vmem:[#allocation3 + $0x50] sm:$0xff]
    %v747 = vld [vmem:[#allocation3 + $0x58] sm:$0xff]
    %v748 = vld [vmem:[#allocation3 + $0x60] sm:$0xff]
    %v749 = vld [vmem:[#allocation3 + $0x68] sm:$0xff]
    %v750 = vld [vmem:[#allocation3 + $0x70] sm:$0xff]
    %v751 = vld [vmem:[#allocation3 + $0x78] sm:$0xff]
    %v752 = vld [vmem:[#allocation3 + $0x80] sm:$0xff]
    %v753 = vld [vmem:[#allocation3 + $0x88] sm:$0xff]
    %v754 = vld [vmem:[#allocation3 + $0x90] sm:$0xff]
    %v755 = vld [vmem:[#allocation3 + $0x98] sm:$0xff]
    %v756 = vld [vmem:[#allocation3 + $0xa0] sm:$0xff]
    %v757 = vld [vmem:[#allocation3 + $0xa8] sm:$0xff]
    %v758 = vld [vmem:[#allocation3 + $0xb0] sm:$0xff]
    %v759 = vld [vmem:[#allocation3 + $0xb8] sm:$0xff]
    %v760 = vld [vmem:[#allocation3 + $0xc0] sm:$0xff]
    %v761 = vld [vmem:[#allocation3 + $0xc8] sm:$0xff]
    %v762 = vld [vmem:[#allocation3 + $0xd0] sm:$0xff]
    %v763 = vld [vmem:[#allocation3 + $0xd8] sm:$0xff]
    %v764 = vld [vmem:[#allocation3 + $0xe0] sm:$0xff]
    %v765 = vld [vmem:[#allocation3 + $0xe8] sm:$0xff]
    %v766 = vld [vmem:[#allocation3 + $0xf0] sm:$0xff]
    %v767 = vld [vmem:[#allocation3 + $0xf8] sm:$0xff]
    %v768 = vld [vmem:[%s4] sm:$0xff]
    %v769 = vld [vmem:[%s4 + $0x8] sm:$0xff]
    %v770 = vld [vmem:[%s4 + $0x10] sm:$0xff]
    %v771 = vld [vmem:[%s4 + $0x18] sm:$0xff]
    %v772 = vld [vmem:[%s4 + $0x20] sm:$0xff]
    %v773 = vld [vmem:[%s4 + $0x28] sm:$0xff]
    %v774 = vld [vmem:[%s4 + $0x30] sm:$0xff]
    %v775 = vld [vmem:[%s4 + $0x38] sm:$0xff]
    %v776 = vld [vmem:[%s4 + $0x40] sm:$0xff]
    %v777 = vld [vmem:[%s4 + $0x48] sm:$0xff]
    %v778 = vld [vmem:[%s4 + $0x50] sm:$0xff]
    %v779 = vld [vmem:[%s4 + $0x58] sm:$0xff]
    %v780 = vld [vmem:[%s4 + $0x60] sm:$0xff]
    %v781 = vld [vmem:[%s4 + $0x68] sm:$0xff]
    %v782 = vld [vmem:[%s4 + $0x70] sm:$0xff]
    %v783 = vld [vmem:[%s4 + $0x78] sm:$0xff]
    %784 = vmatprep.subr.mxu0 0.0
    %785 = vmatpush1.msra.mxu0 %v783
    %786 = vmatprep.subr.mxu0 0.0
    %787 = vmatpush1.msra.mxu0 %v782
    %788 = vmatprep.subr.mxu0 0.0
    %789 = vmatpush1.msra.mxu0 %v781
    %790 = vmatprep.subr.mxu0 0.0
    %791 = vmatpush1.msra.mxu0 %v780
    %792 = vmatprep.subr.mxu0 0.0
    %793 = vmatpush1.msra.mxu0 %v779
    %794 = vmatprep.subr.mxu0 0.0
    %795 = vmatpush1.msra.mxu0 %v778
    %796 = vmatprep.subr.mxu0 0.0
    %797 = vmatpush1.msra.mxu0 %v777
    %798 = vmatprep.subr.mxu0 0.0
    %799 = vmatpush1.msra.mxu0 %v776
    %800 = vmatprep.subr.mxu0 0.0
    %801 = vmatpush1.msra.mxu0 %v775
    %802 = vmatprep.subr.mxu0 0.0
    %803 = vmatpush1.msra.mxu0 %v774
    %804 = vmatprep.subr.mxu0 0.0
    %805 = vmatpush1.msra.mxu0 %v773
    %806 = vmatprep.subr.mxu0 0.0
    %807 = vmatpush1.msra.mxu0 %v772
    %808 = vmatprep.subr.mxu0 0.0
    %809 = vmatpush1.msra.mxu0 %v771
    %810 = vmatprep.subr.mxu0 0.0
    %811 = vmatpush1.msra.mxu0 %v770
    %812 = vmatprep.subr.mxu0 0.0
    %813 = vmatpush1.msra.mxu0 %v769
    %814 = vmatprep.subr.mxu0 0.0
    %815 = vmatpush1.msra.mxu0 %v768
    %816 = vmatprep.subr.mxu0 0.0
    %817 = vmatpush2.msra.mxu0 0.0
    %818 = vmatprep.subr.mxu0 0.0
    %819 = vmatpush2.msra.mxu0 0.0
    %820 = vmatprep.subr.mxu0 0.0
    %821 = vmatpush2.msra.mxu0 0.0
    %822 = vmatprep.subr.mxu0 0.0
    %823 = vmatpush2.msra.mxu0 0.0
    %824 = vmatprep.subr.mxu0 0.0
    %825 = vmatpush2.msra.mxu0 0.0
    %826 = vmatprep.subr.mxu0 0.0
    %827 = vmatpush2.msra.mxu0 0.0
    %828 = vmatprep.subr.mxu0 0.0
    %829 = vmatpush2.msra.mxu0 0.0
    %830 = vmatprep.subr.mxu0 0.0
    %831 = vmatpush2.msra.mxu0 0.0
    %832 = vmatprep.subr.mxu0 0.0
    %833 = vmatpush2.msra.mxu0 0.0
    %834 = vmatprep.subr.mxu0 0.0
    %835 = vmatpush2.msra.mxu0 0.0
    %836 = vmatprep.subr.mxu0 0.0
    %837 = vmatpush2.msra.mxu0 0.0
    %838 = vmatprep.subr.mxu0 0.0
    %839 = vmatpush2.msra.mxu0 0.0
    %840 = vmatprep.subr.mxu0 0.0
    %841 = vmatpush2.msra.mxu0 0.0
    %842 = vmatprep.subr.mxu0 0.0
    %843 = vmatpush2.msra.mxu0 0.0
    %844 = vmatprep.subr.mxu0 0.0
    %845 = vmatpush2.msra.mxu0 0.0
    %846 = vmatprep.subr.mxu0 0.0
    %847 = vmatpush2.msra.mxu0 0.0
    %848 = vmatprep.mubr.f32.mxu0 0.0
    %849 = vmatmul.mubr.f32.gmra.mxu0 %v720
    %v850 = vpop.f32.mrf.mxu0
    %v851 = vadd.f32 %v736, %v850
    %v852 = vpop.f32.mrf.mxu0
    %853 = vmatprep.mubr.f32.mxu0 0.0
    %854 = vmatmul.mubr.f32.gmra.mxu0 %v721
    %v855 = vpop.f32.mrf.mxu0
    %v856 = vadd.f32 %v738, %v855
    %v857 = vpop.f32.mrf.mxu0
    %858 = vmatprep.mubr.f32.mxu0 0.0
    %859 = vmatmul.mubr.f32.gmra.mxu0 %v722
    %v860 = vpop.f32.mrf.mxu0
    %v861 = vadd.f32 %v740, %v860
    %v862 = vpop.f32.mrf.mxu0
    %863 = vmatprep.mubr.f32.mxu0 0.0
    %864 = vmatmul.mubr.f32.gmra.mxu0 %v723
    %v865 = vpop.f32.mrf.mxu0
    %v866 = vadd.f32 %v742, %v865
    %v867 = vpop.f32.mrf.mxu0
    %868 = vmatprep.mubr.f32.mxu0 0.0
    %869 = vmatmul.mubr.f32.gmra.mxu0 %v724
    %v870 = vpop.f32.mrf.mxu0
    %v871 = vadd.f32 %v744, %v870
    %v872 = vpop.f32.mrf.mxu0
    %873 = vmatprep.mubr.f32.mxu0 0.0
    %874 = vmatmul.mubr.f32.gmra.mxu0 %v725
    %v875 = vpop.f32.mrf.mxu0
    %v876 = vadd.f32 %v746, %v875
    %v877 = vpop.f32.mrf.mxu0
    %878 = vmatprep.mubr.f32.mxu0 0.0
    %879 = vmatmul.mubr.f32.gmra.mxu0 %v726
    %v880 = vpop.f32.mrf.mxu0
    %v881 = vadd.f32 %v748, %v880
    %v882 = vpop.f32.mrf.mxu0
    %883 = vmatprep.mubr.f32.mxu0 0.0
    %884 = vmatmul.mubr.f32.gmra.mxu0 %v727
    %v885 = vpop.f32.mrf.mxu0
    %v886 = vadd.f32 %v750, %v885
    %v887 = vpop.f32.mrf.mxu0
    %888 = vmatprep.mubr.f32.mxu0 0.0
    %889 = vmatmul.mubr.f32.gmra.mxu0 %v728
    %v890 = vpop.f32.mrf.mxu0
    %v891 = vadd.f32 %v752, %v890
    %v892 = vpop.f32.mrf.mxu0
    %893 = vmatprep.mubr.f32.mxu0 0.0
    %894 = vmatmul.mubr.f32.gmra.mxu0 %v729
    %v895 = vpop.f32.mrf.mxu0
    %v896 = vadd.f32 %v754, %v895
    %v897 = vpop.f32.mrf.mxu0
    %898 = vmatprep.mubr.f32.mxu0 0.0
    %899 = vmatmul.mubr.f32.gmra.mxu0 %v730
    %v900 = vpop.f32.mrf.mxu0
    %v901 = vadd.f32 %v756, %v900
    %v902 = vpop.f32.mrf.mxu0
    %903 = vmatprep.mubr.f32.mxu0 0.0
    %904 = vmatmul.mubr.f32.gmra.mxu0 %v731
    %v905 = vpop.f32.mrf.mxu0
    %v906 = vadd.f32 %v758, %v905
    %v907 = vpop.f32.mrf.mxu0
    %908 = vmatprep.mubr.f32.mxu0 0.0
    %909 = vmatmul.mubr.f32.gmra.mxu0 %v732
    %v910 = vpop.f32.mrf.mxu0
    %v911 = vadd.f32 %v760, %v910
    %v912 = vpop.f32.mrf.mxu0
    %913 = vmatprep.mubr.f32.mxu0 0.0
    %914 = vmatmul.mubr.f32.gmra.mxu0 %v733
    %v915 = vpop.f32.mrf.mxu0
    %v916 = vadd.f32 %v762, %v915
    %v917 = vpop.f32.mrf.mxu0
    %918 = vmatprep.mubr.f32.mxu0 0.0
    %919 = vmatmul.mubr.f32.gmra.mxu0 %v734
    %v920 = vpop.f32.mrf.mxu0
    %v921 = vadd.f32 %v764, %v920
    %v922 = vpop.f32.mrf.mxu0
    %923 = vmatprep.mubr.f32.mxu0 0.0
    %924 = vmatmul.mubr.f32.gmra.mxu0 %v735
    %v925 = vpop.f32.mrf.mxu0
    %v926 = vadd.f32 %v766, %v925
    %v927 = vpop.f32.mrf.mxu0
    %928 = vdwg.mxu0
    %v929 = vmax.f32 %v851, 0.0
    %v930 = vmax.f32 %v856, 0.0
    %v931 = vmax.f32 %v861, 0.0
    %v932 = vmax.f32 %v866, 0.0
    %v933 = vmax.f32 %v871, 0.0
    %v934 = vmax.f32 %v876, 0.0
    %v935 = vmax.f32 %v881, 0.0
    %v936 = vmax.f32 %v886, 0.0
    %v937 = vmax.f32 %v891, 0.0
    %v938 = vmax.f32 %v896, 0.0
    %v939 = vmax.f32 %v901, 0.0
    %v940 = vmax.f32 %v906, 0.0
    %v941 = vmax.f32 %v911, 0.0
    %v942 = vmax.f32 %v916, 0.0
    %v943 = vmax.f32 %v921, 0.0
    %v944 = vmax.f32 %v926, 0.0
    %v945 = vadd.f32 %v929, %v737
    %v946 = vadd.f32 %v930, %v739
    %v947 = vadd.f32 %v931, %v741
    %v948 = vadd.f32 %v932, %v743
    %v949 = vadd.f32 %v933, %v745
    %v950 = vadd.f32 %v934, %v747
    %v951 = vadd.f32 %v935, %v749
    %v952 = vadd.f32 %v936, %v751
    %v953 = vadd.f32 %v937, %v753
    %v954 = vadd.f32 %v938, %v755
    %v955 = vadd.f32 %v939, %v757
    %v956 = vadd.f32 %v940, %v759
    %v957 = vadd.f32 %v941, %v761
    %v958 = vadd.f32 %v942, %v763
    %v959 = vadd.f32 %v943, %v765
    %v960 = vadd.f32 %v944, %v767
    %v961 = vpack.c.bf16 %v946, %v945
    %v962 = vpack.c.bf16 %v948, %v947
    %v963 = vpack.c.bf16 %v950, %v949
    %v964 = vpack.c.bf16 %v952, %v951
    %v965 = vpack.c.bf16 %v954, %v953
    %v966 = vpack.c.bf16 %v956, %v955
    %v967 = vpack.c.bf16 %v958, %v957
    %v968 = vpack.c.bf16 %v960, %v959
    %v977 = vunpack.c.l.b16 %v961
    %v978 = vunpack.c.h.b16 %v961
    %v979 = vunpack.c.l.b16 %v962
    %v980 = vunpack.c.h.b16 %v962
    %v981 = vunpack.c.l.b16 %v963
    %v982 = vunpack.c.h.b16 %v963
    %v983 = vunpack.c.l.b16 %v964
    %v984 = vunpack.c.h.b16 %v964
    %v985 = vunpack.c.l.b16 %v965
    %v986 = vunpack.c.h.b16 %v965
    %v987 = vunpack.c.l.b16 %v966
    %v988 = vunpack.c.h.b16 %v966
    %v989 = vunpack.c.l.b16 %v967
    %v990 = vunpack.c.h.b16 %v967
    %v991 = vunpack.c.l.b16 %v968
    %v992 = vunpack.c.h.b16 %v968
    %v993 = vpack.c.b16 %v977, %v977
    %v994 = vpack.c.b16 %v978, %v978
    %v995 = vpack.c.b16 %v979, %v979
    %v996 = vpack.c.b16 %v980, %v980
    %v997 = vpack.c.b16 %v981, %v981
    %v998 = vpack.c.b16 %v982, %v982
    %v999 = vpack.c.b16 %v983, %v983
    %v1000 = vpack.c.b16 %v984, %v984
    %v1001 = vpack.c.b16 %v985, %v985
    %v1002 = vpack.c.b16 %v986, %v986
    %v1003 = vpack.c.b16 %v987, %v987
    %v1004 = vpack.c.b16 %v988, %v988
    %v1005 = vpack.c.b16 %v989, %v989
    %v1006 = vpack.c.b16 %v990, %v990
    %v1007 = vpack.c.b16 %v991, %v991
    %v1008 = vpack.c.b16 %v992, %v992
    %1025 = vst [vmem:[%s7] sm:$0xf] %v993
    %1026 = vst [vmem:[%s7 + $0x4] sm:$0xf] %v994
    %1027 = vst [vmem:[%s7 + $0x8] sm:$0xf] %v995
    %1028 = vst [vmem:[%s7 + $0xc] sm:$0xf] %v996
    %1029 = vst [vmem:[%s7 + $0x10] sm:$0xf] %v997
    %1030 = vst [vmem:[%s7 + $0x14] sm:$0xf] %v998
    %1031 = vst [vmem:[%s7 + $0x18] sm:$0xf] %v999
    %1032 = vst [vmem:[%s7 + $0x1c] sm:$0xf] %v1000
    %1033 = vst [vmem:[%s7 + $0x20] sm:$0xf] %v1001
    %1034 = vst [vmem:[%s7 + $0x24] sm:$0xf] %v1002
    %1035 = vst [vmem:[%s7 + $0x28] sm:$0xf] %v1003
    %1036 = vst [vmem:[%s7 + $0x2c] sm:$0xf] %v1004
    %1037 = vst [vmem:[%s7 + $0x30] sm:$0xf] %v1005
    %1038 = vst [vmem:[%s7 + $0x34] sm:$0xf] %v1006
    %1039 = vst [vmem:[%s7 + $0x38] sm:$0xf] %v1007
    %1040 = vst [vmem:[%s7 + $0x3c] sm:$0xf] %v1008
  $region37: #{enhanced_sage_forward.4} parent=0 // pred_fallthru
    _
  // Predicated region
  $region38: #{enhanced_sage_forward.4} parent=0 // pred_check
    _
  $region39: #{enhanced_sage_forward.4} parent=0 // pred_check_branch
    %1042 = sbr.rel (0) target = $region41
  $region40: #{enhanced_sage_forward.4} parent=0 // pred_region
    _
  $region41: #{enhanced_sage_forward.4} parent=0 // pred_fallthru
    _
  // Predicated region
  $region42: #{enhanced_sage_forward.4} parent=0 // pred_check
    _
  $region43: #{enhanced_sage_forward.4} parent=0 // pred_check_branch
    %1044 = sbr.rel (0) target = $region45
  $region44: #{enhanced_sage_forward.4} parent=0 // pred_region
    _
  $region45: #{enhanced_sage_forward.4} parent=0 // pred_fallthru
    _

// kernel: enhanced_sage_forward.5
$region0: #{enhanced_sage_forward.5}
  #allocation0 [shape = 'u32[]', space=smem, size = 0x4, offset = 0x4, fixed_abs, tag = 'smem constant byte address 0x4 - core index']
  #allocation1 [shape = 'u32[144,128]{1,0:T(1,128)}', space=vmem, size = 0x12000, scoped, tag = 'internal scratch']
  #allocation2 [shape = 'f32[128,128]{1,0:T(8,128)}', space=vmem, size = 0x10000, scoped, tag = 'scratch operand']
  #allocation3 [shape = 'f32[128,128]{1,0:T(8,128)}', space=vmem, size = 0x10000, scoped, tag = 'scratch operand']
  %s0 = inlined_call_operand.vmem [shape: s8[128,128], index: 0, kind: input, shape index: {}]
  %s1 = inlined_call_operand.vmem [shape: bf16[128,128], index: 1, kind: input, shape index: {}, may-alias: {1,2}]
  %s2 = inlined_call_operand.vmem [shape: bf16[128,128], index: 2, kind: input, shape index: {}, may-alias: {1,2}]
  %s3 = inlined_call_operand.vmem [shape: f32[128,1], index: 3, kind: input, shape index: {}]
  %s4 = inlined_call_operand.vmem [shape: f32[128,128], index: 4, kind: input, shape index: {}]
  %s5 = inlined_call_operand.vmem [shape: f32[128,128], index: 5, kind: input, shape index: {}]
  %s6 = inlined_call_operand.vmem [shape: f32[1,128], index: 6, kind: input, shape index: {}]
  %s7 = inlined_call_operand.vmem [shape: f32[128,128], index: 7, kind: input, shape index: {}]
  %s8 = inlined_call_operand.vmem [shape: f32[1,128], index: 8, kind: input, shape index: {}]
  %s9 = inlined_call_operand.vmem [shape: f32[128,128], index: 9, kind: input, shape index: {}]
  %s10 = inlined_call_operand.vmem [shape: f32[1,128], index: 10, kind: input, shape index: {}]
  %s11 = inlined_call_operand.vmem [shape: f32[128,128], index: 11, kind: input, shape index: {}]
  %s12 = inlined_call_operand.vmem [shape: f32[1,128], index: 12, kind: input, shape index: {}]
  %s13 = inlined_call_operand.vmem [shape: f32[128,128], index: 13, kind: output, shape index: {0}]
  %s14 = inlined_call_operand.vmem [shape: f32[128,128], index: 14, kind: output, shape index: {1}]
  %15 = xla_tuple %s13, %s14
  %s16 = sld [smem:[#allocation0]]
  $region78: #{enhanced_sage_forward.5} parent=0
    _
  %s18 = ssub.s32 1, %s16
  %s19 = scalar_select 0, %s18, %s16
  // Predicated region
  $region2: #{enhanced_sage_forward.5} parent=0 // pred_check
    _
  $region3: #{enhanced_sage_forward.5} parent=0 // pred_check_branch
    %21 = sbr.rel (0) target = $region5
  $region4: #{enhanced_sage_forward.5} parent=0 // pred_region
    _
  $region5: #{enhanced_sage_forward.5} parent=0 // pred_fallthru
    _
  // Predicated region
  $region6: #{enhanced_sage_forward.5} parent=0 // pred_check
    _
  $region7: #{enhanced_sage_forward.5} parent=0 // pred_check_branch
    %23 = sbr.rel (0) target = $region9
  $region8: #{enhanced_sage_forward.5} parent=0 // pred_region
    _
  $region9: #{enhanced_sage_forward.5} parent=0 // pred_fallthru
    _
  // Predicated region
  $region10: #{enhanced_sage_forward.5} parent=0 // pred_check
    _
  $region11: #{enhanced_sage_forward.5} parent=0 // pred_check_branch
    %25 = sbr.rel (0) target = $region13
  $region12: #{enhanced_sage_forward.5} parent=0 // pred_region
    _
  $region13: #{enhanced_sage_forward.5} parent=0 // pred_fallthru
    _
  // Predicated region
  $region14: #{enhanced_sage_forward.5} parent=0 // pred_check
    _
  $region15: #{enhanced_sage_forward.5} parent=0 // pred_check_branch
    %27 = sbr.rel (0) target = $region17
  $region16: #{enhanced_sage_forward.5} parent=0 // pred_region
    _
  $region17: #{enhanced_sage_forward.5} parent=0 // pred_fallthru
    _
  // Predicated region
  $region18: #{enhanced_sage_forward.5} parent=0 // pred_check
    _
  $region19: #{enhanced_sage_forward.5} parent=0 // pred_check_branch
    %29 = sbr.rel (0) target = $region21
  $region20: #{enhanced_sage_forward.5} parent=0 // pred_region
    _
  $region21: #{enhanced_sage_forward.5} parent=0 // pred_fallthru
    _
  // Predicated region
  $region22: #{enhanced_sage_forward.5} parent=0 // pred_check
    _
  $region23: #{enhanced_sage_forward.5} parent=0 // pred_check_branch
    %31 = sbr.rel (0) target = $region25
  $region24: #{enhanced_sage_forward.5} parent=0 // pred_region
    _
  $region25: #{enhanced_sage_forward.5} parent=0 // pred_fallthru
    _
  // Predicated region
  $region26: #{enhanced_sage_forward.5} parent=0 // pred_check
    _
  $region27: #{enhanced_sage_forward.5} parent=0 // pred_check_branch
    %33 = sbr.rel (0) target = $region29
  $region28: #{enhanced_sage_forward.5} parent=0 // pred_region
    _
  $region29: #{enhanced_sage_forward.5} parent=0 // pred_fallthru
    _
  // Predicated region
  $region30: #{enhanced_sage_forward.5} parent=0 // pred_check
    _
  $region31: #{enhanced_sage_forward.5} parent=0 // pred_check_branch
    %35 = sbr.rel (0) target = $region33
  $region32: #{enhanced_sage_forward.5} parent=0 // pred_region
    _
  $region33: #{enhanced_sage_forward.5} parent=0 // pred_fallthru
    _
  // Predicated region
  $region34: #{enhanced_sage_forward.5} parent=0 // pred_check
    _
  $region35: #{enhanced_sage_forward.5} parent=0 // pred_check_branch
    %37 = sbr.rel (0) target = $region37
  $region36: #{enhanced_sage_forward.5} parent=0 // pred_region
    _
  $region37: #{enhanced_sage_forward.5} parent=0 // pred_fallthru
    _
  // Predicated region
  $region38: #{enhanced_sage_forward.5} parent=0 // pred_check
    _
  $region39: #{enhanced_sage_forward.5} parent=0 // pred_check_branch
    %39 = sbr.rel (0) target = $region41
  $region40: #{enhanced_sage_forward.5} parent=0 // pred_region
    _
  $region41: #{enhanced_sage_forward.5} parent=0 // pred_fallthru
    _
  // Predicated region
  $region42: #{enhanced_sage_forward.5} parent=0 // pred_check
    _
  $region43: #{enhanced_sage_forward.5} parent=0 // pred_check_branch
    %41 = sbr.rel (0) target = $region45
  $region44: #{enhanced_sage_forward.5} parent=0 // pred_region
    _
  $region45: #{enhanced_sage_forward.5} parent=0 // pred_fallthru
    _
  // Predicated region
  $region46: #{enhanced_sage_forward.5} parent=0 // pred_check
    _
  $region47: #{enhanced_sage_forward.5} parent=0 // pred_check_branch
    %43 = sbr.rel (0) target = $region49
  $region48: #{enhanced_sage_forward.5} parent=0 // pred_region
    _
  $region49: #{enhanced_sage_forward.5} parent=0 // pred_fallthru
    _
  // Predicated region
  $region50: #{enhanced_sage_forward.5} parent=0 // pred_check
    _
  $region51: #{enhanced_sage_forward.5} parent=0 // pred_check_branch
    %45 = sbr.rel (0) target = $region53
  $region52: #{enhanced_sage_forward.5} parent=0 // pred_region
    _
  $region53: #{enhanced_sage_forward.5} parent=0 // pred_fallthru
    _
  %p47 = scmp.eq.s32.totalorder 0, 0
  // Predicated region
  $region54: #{enhanced_sage_forward.5} parent=0 // pred_check
    %p48 = pneg %p47
  $region55: #{enhanced_sage_forward.5} parent=0 // pred_check_branch
    %50 = sbr.rel (%p48) target = $region57
  $region56: #{enhanced_sage_forward.5} parent=0 // pred_region
    %51 = vst [vmem:[#allocation2] sm:$0xff] 0.0
    %52 = vst [vmem:[#allocation2 + $0x8] sm:$0xff] 0.0
    %53 = vst [vmem:[#allocation2 + $0x10] sm:$0xff] 0.0
    %54 = vst [vmem:[#allocation2 + $0x18] sm:$0xff] 0.0
    %55 = vst [vmem:[#allocation2 + $0x20] sm:$0xff] 0.0
    %56 = vst [vmem:[#allocation2 + $0x28] sm:$0xff] 0.0
    %57 = vst [vmem:[#allocation2 + $0x30] sm:$0xff] 0.0
    %58 = vst [vmem:[#allocation2 + $0x38] sm:$0xff] 0.0
    %59 = vst [vmem:[#allocation2 + $0x40] sm:$0xff] 0.0
    %60 = vst [vmem:[#allocation2 + $0x48] sm:$0xff] 0.0
    %61 = vst [vmem:[#allocation2 + $0x50] sm:$0xff] 0.0
    %62 = vst [vmem:[#allocation2 + $0x58] sm:$0xff] 0.0
    %63 = vst [vmem:[#allocation2 + $0x60] sm:$0xff] 0.0
    %64 = vst [vmem:[#allocation2 + $0x68] sm:$0xff] 0.0
    %65 = vst [vmem:[#allocation2 + $0x70] sm:$0xff] 0.0
    %66 = vst [vmem:[#allocation2 + $0x78] sm:$0xff] 0.0
    %v67 = vld [vmem:[%s2] sm:$0xf]
    %v68 = vld [vmem:[%s2 + $0x4] sm:$0xf]
    %v69 = vld [vmem:[%s2 + $0x8] sm:$0xf]
    %v70 = vld [vmem:[%s2 + $0xc] sm:$0xf]
    %v71 = vld [vmem:[%s2 + $0x10] sm:$0xf]
    %v72 = vld [vmem:[%s2 + $0x14] sm:$0xf]
    %v73 = vld [vmem:[%s2 + $0x18] sm:$0xf]
    %v74 = vld [vmem:[%s2 + $0x1c] sm:$0xf]
    %v75 = vld [vmem:[%s2 + $0x20] sm:$0xf]
    %v76 = vld [vmem:[%s2 + $0x24] sm:$0xf]
    %v77 = vld [vmem:[%s2 + $0x28] sm:$0xf]
    %v78 = vld [vmem:[%s2 + $0x2c] sm:$0xf]
    %v79 = vld [vmem:[%s2 + $0x30] sm:$0xf]
    %v80 = vld [vmem:[%s2 + $0x34] sm:$0xf]
    %v81 = vld [vmem:[%s2 + $0x38] sm:$0xf]
    %v82 = vld [vmem:[%s2 + $0x3c] sm:$0xf]
    %v83 = vunpack.c.l.bf16 %v67
    %v84 = vunpack.c.l.bf16 %v68
    %v85 = vunpack.c.l.bf16 %v69
    %v86 = vunpack.c.l.bf16 %v70
    %v87 = vunpack.c.l.bf16 %v71
    %v88 = vunpack.c.l.bf16 %v72
    %v89 = vunpack.c.l.bf16 %v73
    %v90 = vunpack.c.l.bf16 %v74
    %v91 = vunpack.c.l.bf16 %v75
    %v92 = vunpack.c.l.bf16 %v76
    %v93 = vunpack.c.l.bf16 %v77
    %v94 = vunpack.c.l.bf16 %v78
    %v95 = vunpack.c.l.bf16 %v79
    %v96 = vunpack.c.l.bf16 %v80
    %v97 = vunpack.c.l.bf16 %v81
    %v98 = vunpack.c.l.bf16 %v82
    %v99 = vld [vmem:[%s5] sm:$0xff]
    %v100 = vld [vmem:[%s5 + $0x8] sm:$0xff]
    %v101 = vld [vmem:[%s5 + $0x10] sm:$0xff]
    %v102 = vld [vmem:[%s5 + $0x18] sm:$0xff]
    %v103 = vld [vmem:[%s5 + $0x20] sm:$0xff]
    %v104 = vld [vmem:[%s5 + $0x28] sm:$0xff]
    %v105 = vld [vmem:[%s5 + $0x30] sm:$0xff]
    %v106 = vld [vmem:[%s5 + $0x38] sm:$0xff]
    %v107 = vld [vmem:[%s5 + $0x40] sm:$0xff]
    %v108 = vld [vmem:[%s5 + $0x48] sm:$0xff]
    %v109 = vld [vmem:[%s5 + $0x50] sm:$0xff]
    %v110 = vld [vmem:[%s5 + $0x58] sm:$0xff]
    %v111 = vld [vmem:[%s5 + $0x60] sm:$0xff]
    %v112 = vld [vmem:[%s5 + $0x68] sm:$0xff]
    %v113 = vld [vmem:[%s5 + $0x70] sm:$0xff]
    %v114 = vld [vmem:[%s5 + $0x78] sm:$0xff]
    %v115 = vld [vmem:[%s6] sm:$0x1]
    %v117 = vlaneseq
    %v118 = vshrl.u32 %v117, 7
    %v119 = vsub.s32 0, %v118
    %v120 = vrot.slane %v115, %v119
    %122 = vmatprep.subr.mxu0 0.0
    %123 = vmatpush1.msra.mxu0 %v114
    %124 = vmatprep.subr.mxu0 0.0
    %125 = vmatpush1.msra.mxu0 %v113
    %126 = vmatprep.subr.mxu0 0.0
    %127 = vmatpush1.msra.mxu0 %v112
    %128 = vmatprep.subr.mxu0 0.0
    %129 = vmatpush1.msra.mxu0 %v111
    %130 = vmatprep.subr.mxu0 0.0
    %131 = vmatpush1.msra.mxu0 %v110
    %132 = vmatprep.subr.mxu0 0.0
    %133 = vmatpush1.msra.mxu0 %v109
    %134 = vmatprep.subr.mxu0 0.0
    %135 = vmatpush1.msra.mxu0 %v108
    %136 = vmatprep.subr.mxu0 0.0
    %137 = vmatpush1.msra.mxu0 %v107
    %138 = vmatprep.subr.mxu0 0.0
    %139 = vmatpush1.msra.mxu0 %v106
    %140 = vmatprep.subr.mxu0 0.0
    %141 = vmatpush1.msra.mxu0 %v105
    %142 = vmatprep.subr.mxu0 0.0
    %143 = vmatpush1.msra.mxu0 %v104
    %144 = vmatprep.subr.mxu0 0.0
    %145 = vmatpush1.msra.mxu0 %v103
    %146 = vmatprep.subr.mxu0 0.0
    %147 = vmatpush1.msra.mxu0 %v102
    %148 = vmatprep.subr.mxu0 0.0
    %149 = vmatpush1.msra.mxu0 %v101
    %150 = vmatprep.subr.mxu0 0.0
    %151 = vmatpush1.msra.mxu0 %v100
    %152 = vmatprep.subr.mxu0 0.0
    %153 = vmatpush1.msra.mxu0 %v99
    %154 = vmatprep.subr.mxu0 0.0
    %155 = vmatpush2.msra.mxu0 0.0
    %156 = vmatprep.subr.mxu0 0.0
    %157 = vmatpush2.msra.mxu0 0.0
    %158 = vmatprep.subr.mxu0 0.0
    %159 = vmatpush2.msra.mxu0 0.0
    %160 = vmatprep.subr.mxu0 0.0
    %161 = vmatpush2.msra.mxu0 0.0
    %162 = vmatprep.subr.mxu0 0.0
    %163 = vmatpush2.msra.mxu0 0.0
    %164 = vmatprep.subr.mxu0 0.0
    %165 = vmatpush2.msra.mxu0 0.0
    %166 = vmatprep.subr.mxu0 0.0
    %167 = vmatpush2.msra.mxu0 0.0
    %168 = vmatprep.subr.mxu0 0.0
    %169 = vmatpush2.msra.mxu0 0.0
    %170 = vmatprep.subr.mxu0 0.0
    %171 = vmatpush2.msra.mxu0 0.0
    %172 = vmatprep.subr.mxu0 0.0
    %173 = vmatpush2.msra.mxu0 0.0
    %174 = vmatprep.subr.mxu0 0.0
    %175 = vmatpush2.msra.mxu0 0.0
    %176 = vmatprep.subr.mxu0 0.0
    %177 = vmatpush2.msra.mxu0 0.0
    %178 = vmatprep.subr.mxu0 0.0
    %179 = vmatpush2.msra.mxu0 0.0
    %180 = vmatprep.subr.mxu0 0.0
    %181 = vmatpush2.msra.mxu0 0.0
    %182 = vmatprep.subr.mxu0 0.0
    %183 = vmatpush2.msra.mxu0 0.0
    %184 = vmatprep.subr.mxu0 0.0
    %185 = vmatpush2.msra.mxu0 0.0
    %186 = vmatprep.mubr.f32.mxu0 0.0
    %187 = vmatmul.mubr.f32.gmra.mxu0 %v83
    %v188 = vpop.f32.mrf.mxu0
    %v189 = vadd.f32 %v120, %v188
    %v190 = vpop.f32.mrf.mxu0
    %191 = vmatprep.mubr.f32.mxu0 0.0
    %192 = vmatmul.mubr.f32.gmra.mxu0 %v84
    %v193 = vpop.f32.mrf.mxu0
    %v194 = vadd.f32 %v120, %v193
    %v195 = vpop.f32.mrf.mxu0
    %196 = vmatprep.mubr.f32.mxu0 0.0
    %197 = vmatmul.mubr.f32.gmra.mxu0 %v85
    %v198 = vpop.f32.mrf.mxu0
    %v199 = vadd.f32 %v120, %v198
    %v200 = vpop.f32.mrf.mxu0
    %201 = vmatprep.mubr.f32.mxu0 0.0
    %202 = vmatmul.mubr.f32.gmra.mxu0 %v86
    %v203 = vpop.f32.mrf.mxu0
    %v204 = vadd.f32 %v120, %v203
    %v205 = vpop.f32.mrf.mxu0
    %206 = vmatprep.mubr.f32.mxu0 0.0
    %207 = vmatmul.mubr.f32.gmra.mxu0 %v87
    %v208 = vpop.f32.mrf.mxu0
    %v209 = vadd.f32 %v120, %v208
    %v210 = vpop.f32.mrf.mxu0
    %211 = vmatprep.mubr.f32.mxu0 0.0
    %212 = vmatmul.mubr.f32.gmra.mxu0 %v88
    %v213 = vpop.f32.mrf.mxu0
    %v214 = vadd.f32 %v120, %v213
    %v215 = vpop.f32.mrf.mxu0
    %216 = vmatprep.mubr.f32.mxu0 0.0
    %217 = vmatmul.mubr.f32.gmra.mxu0 %v89
    %v218 = vpop.f32.mrf.mxu0
    %v219 = vadd.f32 %v120, %v218
    %v220 = vpop.f32.mrf.mxu0
    %221 = vmatprep.mubr.f32.mxu0 0.0
    %222 = vmatmul.mubr.f32.gmra.mxu0 %v90
    %v223 = vpop.f32.mrf.mxu0
    %v224 = vadd.f32 %v120, %v223
    %v225 = vpop.f32.mrf.mxu0
    %226 = vmatprep.mubr.f32.mxu0 0.0
    %227 = vmatmul.mubr.f32.gmra.mxu0 %v91
    %v228 = vpop.f32.mrf.mxu0
    %v229 = vadd.f32 %v120, %v228
    %v230 = vpop.f32.mrf.mxu0
    %231 = vmatprep.mubr.f32.mxu0 0.0
    %232 = vmatmul.mubr.f32.gmra.mxu0 %v92
    %v233 = vpop.f32.mrf.mxu0
    %v234 = vadd.f32 %v120, %v233
    %v235 = vpop.f32.mrf.mxu0
    %236 = vmatprep.mubr.f32.mxu0 0.0
    %237 = vmatmul.mubr.f32.gmra.mxu0 %v93
    %v238 = vpop.f32.mrf.mxu0
    %v239 = vadd.f32 %v120, %v238
    %v240 = vpop.f32.mrf.mxu0
    %241 = vmatprep.mubr.f32.mxu0 0.0
    %242 = vmatmul.mubr.f32.gmra.mxu0 %v94
    %v243 = vpop.f32.mrf.mxu0
    %v244 = vadd.f32 %v120, %v243
    %v245 = vpop.f32.mrf.mxu0
    %246 = vmatprep.mubr.f32.mxu0 0.0
    %247 = vmatmul.mubr.f32.gmra.mxu0 %v95
    %v248 = vpop.f32.mrf.mxu0
    %v249 = vadd.f32 %v120, %v248
    %v250 = vpop.f32.mrf.mxu0
    %251 = vmatprep.mubr.f32.mxu0 0.0
    %252 = vmatmul.mubr.f32.gmra.mxu0 %v96
    %v253 = vpop.f32.mrf.mxu0
    %v254 = vadd.f32 %v120, %v253
    %v255 = vpop.f32.mrf.mxu0
    %256 = vmatprep.mubr.f32.mxu0 0.0
    %257 = vmatmul.mubr.f32.gmra.mxu0 %v97
    %v258 = vpop.f32.mrf.mxu0
    %v259 = vadd.f32 %v120, %v258
    %v260 = vpop.f32.mrf.mxu0
    %261 = vmatprep.mubr.f32.mxu0 0.0
    %262 = vmatmul.mubr.f32.gmra.mxu0 %v98
    %v263 = vpop.f32.mrf.mxu0
    %v264 = vadd.f32 %v120, %v263
    %v265 = vpop.f32.mrf.mxu0
    %266 = vdwg.mxu0
    %267 = vst [vmem:[#allocation3] sm:$0xff] %v189
    %268 = vst [vmem:[#allocation3 + $0x8] sm:$0xff] %v194
    %269 = vst [vmem:[#allocation3 + $0x10] sm:$0xff] %v199
    %270 = vst [vmem:[#allocation3 + $0x18] sm:$0xff] %v204
    %271 = vst [vmem:[#allocation3 + $0x20] sm:$0xff] %v209
    %272 = vst [vmem:[#allocation3 + $0x28] sm:$0xff] %v214
    %273 = vst [vmem:[#allocation3 + $0x30] sm:$0xff] %v219
    %274 = vst [vmem:[#allocation3 + $0x38] sm:$0xff] %v224
    %275 = vst [vmem:[#allocation3 + $0x40] sm:$0xff] %v229
    %276 = vst [vmem:[#allocation3 + $0x48] sm:$0xff] %v234
    %277 = vst [vmem:[#allocation3 + $0x50] sm:$0xff] %v239
    %278 = vst [vmem:[#allocation3 + $0x58] sm:$0xff] %v244
    %279 = vst [vmem:[#allocation3 + $0x60] sm:$0xff] %v249
    %280 = vst [vmem:[#allocation3 + $0x68] sm:$0xff] %v254
    %281 = vst [vmem:[#allocation3 + $0x70] sm:$0xff] %v259
    %282 = vst [vmem:[#allocation3 + $0x78] sm:$0xff] %v264
  $region57: #{enhanced_sage_forward.5} parent=0 // pred_fallthru
    _
  %v283 = vld [vmem:[#allocation2] sm:$0xff]
  %v284 = vld [vmem:[#allocation2 + $0x8] sm:$0xff]
  %v285 = vld [vmem:[#allocation2 + $0x10] sm:$0xff]
  %v286 = vld [vmem:[#allocation2 + $0x18] sm:$0xff]
  %v287 = vld [vmem:[#allocation2 + $0x20] sm:$0xff]
  %v288 = vld [vmem:[#allocation2 + $0x28] sm:$0xff]
  %v289 = vld [vmem:[#allocation2 + $0x30] sm:$0xff]
  %v290 = vld [vmem:[#allocation2 + $0x38] sm:$0xff]
  %v291 = vld [vmem:[#allocation2 + $0x40] sm:$0xff]
  %v292 = vld [vmem:[#allocation2 + $0x48] sm:$0xff]
  %v293 = vld [vmem:[#allocation2 + $0x50] sm:$0xff]
  %v294 = vld [vmem:[#allocation2 + $0x58] sm:$0xff]
  %v295 = vld [vmem:[#allocation2 + $0x60] sm:$0xff]
  %v296 = vld [vmem:[#allocation2 + $0x68] sm:$0xff]
  %v297 = vld [vmem:[#allocation2 + $0x70] sm:$0xff]
  %v298 = vld [vmem:[#allocation2 + $0x78] sm:$0xff]
  %v299 = vld [vmem:[%s0] sm:$0x3]
  %v300 = vld [vmem:[%s0 + $0x2] sm:$0x3]
  %v301 = vld [vmem:[%s0 + $0x4] sm:$0x3]
  %v302 = vld [vmem:[%s0 + $0x6] sm:$0x3]
  %v303 = vld [vmem:[%s0 + $0x8] sm:$0x3]
  %v304 = vld [vmem:[%s0 + $0xa] sm:$0x3]
  %v305 = vld [vmem:[%s0 + $0xc] sm:$0x3]
  %v306 = vld [vmem:[%s0 + $0xe] sm:$0x3]
  %v307 = vld [vmem:[%s0 + $0x10] sm:$0x3]
  %v308 = vld [vmem:[%s0 + $0x12] sm:$0x3]
  %v309 = vld [vmem:[%s0 + $0x14] sm:$0x3]
  %v310 = vld [vmem:[%s0 + $0x16] sm:$0x3]
  %v311 = vld [vmem:[%s0 + $0x18] sm:$0x3]
  %v312 = vld [vmem:[%s0 + $0x1a] sm:$0x3]
  %v313 = vld [vmem:[%s0 + $0x1c] sm:$0x3]
  %v314 = vld [vmem:[%s0 + $0x1e] sm:$0x3]
  %v315 = vunpack.c.l.s8.bf16 %v299
  %v316 = vunpack.c.l.s8.bf16 %v300
  %v317 = vunpack.c.l.s8.bf16 %v301
  %v318 = vunpack.c.l.s8.bf16 %v302
  %v319 = vunpack.c.l.s8.bf16 %v303
  %v320 = vunpack.c.l.s8.bf16 %v304
  %v321 = vunpack.c.l.s8.bf16 %v305
  %v322 = vunpack.c.l.s8.bf16 %v306
  %v323 = vunpack.c.l.s8.bf16 %v307
  %v324 = vunpack.c.l.s8.bf16 %v308
  %v325 = vunpack.c.l.s8.bf16 %v309
  %v326 = vunpack.c.l.s8.bf16 %v310
  %v327 = vunpack.c.l.s8.bf16 %v311
  %v328 = vunpack.c.l.s8.bf16 %v312
  %v329 = vunpack.c.l.s8.bf16 %v313
  %v330 = vunpack.c.l.s8.bf16 %v314
  %v331 = vld [vmem:[%s1] sm:$0xf]
  %v332 = vld [vmem:[%s1 + $0x4] sm:$0xf]
  %v333 = vld [vmem:[%s1 + $0x8] sm:$0xf]
  %v334 = vld [vmem:[%s1 + $0xc] sm:$0xf]
  %v335 = vld [vmem:[%s1 + $0x10] sm:$0xf]
  %v336 = vld [vmem:[%s1 + $0x14] sm:$0xf]
  %v337 = vld [vmem:[%s1 + $0x18] sm:$0xf]
  %v338 = vld [vmem:[%s1 + $0x1c] sm:$0xf]
  %v339 = vld [vmem:[%s1 + $0x20] sm:$0xf]
  %v340 = vld [vmem:[%s1 + $0x24] sm:$0xf]
  %v341 = vld [vmem:[%s1 + $0x28] sm:$0xf]
  %v342 = vld [vmem:[%s1 + $0x2c] sm:$0xf]
  %v343 = vld [vmem:[%s1 + $0x30] sm:$0xf]
  %v344 = vld [vmem:[%s1 + $0x34] sm:$0xf]
  %v345 = vld [vmem:[%s1 + $0x38] sm:$0xf]
  %v346 = vld [vmem:[%s1 + $0x3c] sm:$0xf]
  %v363 = vunpack.c.l.b16 %v315
  %v364 = vunpack.c.l.b16 %v316
  %v365 = vunpack.c.l.b16 %v317
  %v366 = vunpack.c.l.b16 %v318
  %v367 = vunpack.c.l.b16 %v319
  %v368 = vunpack.c.l.b16 %v320
  %v369 = vunpack.c.l.b16 %v321
  %v370 = vunpack.c.l.b16 %v322
  %v371 = vunpack.c.l.b16 %v323
  %v372 = vunpack.c.l.b16 %v324
  %v373 = vunpack.c.l.b16 %v325
  %v374 = vunpack.c.l.b16 %v326
  %v375 = vunpack.c.l.b16 %v327
  %v376 = vunpack.c.l.b16 %v328
  %v377 = vunpack.c.l.b16 %v329
  %v378 = vunpack.c.l.b16 %v330
  %v379 = vpack.c.b16 %v364, %v363
  %v380 = vpack.c.b16 %v366, %v365
  %v381 = vpack.c.b16 %v368, %v367
  %v382 = vpack.c.b16 %v370, %v369
  %v383 = vpack.c.b16 %v372, %v371
  %v384 = vpack.c.b16 %v374, %v373
  %v385 = vpack.c.b16 %v376, %v375
  %v386 = vpack.c.b16 %v378, %v377
  %v411 = vunpack.c.l.b16 %v331
  %v412 = vunpack.c.l.b16 %v332
  %v413 = vunpack.c.l.b16 %v333
  %v414 = vunpack.c.l.b16 %v334
  %v415 = vunpack.c.l.b16 %v335
  %v416 = vunpack.c.l.b16 %v336
  %v417 = vunpack.c.l.b16 %v337
  %v418 = vunpack.c.l.b16 %v338
  %v419 = vunpack.c.l.b16 %v339
  %v420 = vunpack.c.l.b16 %v340
  %v421 = vunpack.c.l.b16 %v341
  %v422 = vunpack.c.l.b16 %v342
  %v423 = vunpack.c.l.b16 %v343
  %v424 = vunpack.c.l.b16 %v344
  %v425 = vunpack.c.l.b16 %v345
  %v426 = vunpack.c.l.b16 %v346
  %v427 = vpack.c.b16 %v412, %v411
  %v428 = vpack.c.b16 %v414, %v413
  %v429 = vpack.c.b16 %v416, %v415
  %v430 = vpack.c.b16 %v418, %v417
  %v431 = vpack.c.b16 %v420, %v419
  %v432 = vpack.c.b16 %v422, %v421
  %v433 = vpack.c.b16 %v424, %v423
  %v434 = vpack.c.b16 %v426, %v425
  %443 = vmatprep.subr.bf16.mxu0 0
  %444 = vmatpush1.bf16.msra.mxu0 %v434
  %445 = vmatprep.subr.bf16.mxu0 0
  %446 = vmatpush1.bf16.msra.mxu0 %v433
  %447 = vmatprep.subr.bf16.mxu0 0
  %448 = vmatpush1.bf16.msra.mxu0 %v432
  %449 = vmatprep.subr.bf16.mxu0 0
  %450 = vmatpush1.bf16.msra.mxu0 %v431
  %451 = vmatprep.subr.bf16.mxu0 0
  %452 = vmatpush1.bf16.msra.mxu0 %v430
  %453 = vmatprep.subr.bf16.mxu0 0
  %454 = vmatpush1.bf16.msra.mxu0 %v429
  %455 = vmatprep.subr.bf16.mxu0 0
  %456 = vmatpush1.bf16.msra.mxu0 %v428
  %457 = vmatprep.subr.bf16.mxu0 0
  %458 = vmatpush1.bf16.msra.mxu0 %v427
  %459 = vmatprep.subr.bf16.mxu0 0
  %460 = vmatpush2.bf16.msra.mxu0 0
  %461 = vmatprep.subr.bf16.mxu0 0
  %462 = vmatpush2.bf16.msra.mxu0 0
  %463 = vmatprep.subr.bf16.mxu0 0
  %464 = vmatpush2.bf16.msra.mxu0 0
  %465 = vmatprep.subr.bf16.mxu0 0
  %466 = vmatpush2.bf16.msra.mxu0 0
  %467 = vmatprep.subr.bf16.mxu0 0
  %468 = vmatpush2.bf16.msra.mxu0 0
  %469 = vmatprep.subr.bf16.mxu0 0
  %470 = vmatpush2.bf16.msra.mxu0 0
  %471 = vmatprep.subr.bf16.mxu0 0
  %472 = vmatpush2.bf16.msra.mxu0 0
  %473 = vmatprep.subr.bf16.mxu0 0
  %474 = vmatpush2.bf16.msra.mxu0 0
  %475 = vmatprep.mubr.bf16.mxu0 0
  %476 = vmatmul.mubr.bf16.gmra.mxu0 %v379
  %v477 = vpop.f32.mrf.mxu0
  %v478 = vadd.f32 0.0, %v477
  %v479 = vpop.f32.mrf.mxu0
  %v480 = vpop.f32.mrf.mxu0
  %v481 = vadd.f32 0.0, %v480
  %v482 = vpop.f32.mrf.mxu0
  %483 = vmatprep.mubr.bf16.mxu0 0
  %484 = vmatmul.mubr.bf16.gmra.mxu0 %v380
  %v485 = vpop.f32.mrf.mxu0
  %v486 = vadd.f32 0.0, %v485
  %v487 = vpop.f32.mrf.mxu0
  %v488 = vpop.f32.mrf.mxu0
  %v489 = vadd.f32 0.0, %v488
  %v490 = vpop.f32.mrf.mxu0
  %491 = vmatprep.mubr.bf16.mxu0 0
  %492 = vmatmul.mubr.bf16.gmra.mxu0 %v381
  %v493 = vpop.f32.mrf.mxu0
  %v494 = vadd.f32 0.0, %v493
  %v495 = vpop.f32.mrf.mxu0
  %v496 = vpop.f32.mrf.mxu0
  %v497 = vadd.f32 0.0, %v496
  %v498 = vpop.f32.mrf.mxu0
  %499 = vmatprep.mubr.bf16.mxu0 0
  %500 = vmatmul.mubr.bf16.gmra.mxu0 %v382
  %v501 = vpop.f32.mrf.mxu0
  %v502 = vadd.f32 0.0, %v501
  %v503 = vpop.f32.mrf.mxu0
  %v504 = vpop.f32.mrf.mxu0
  %v505 = vadd.f32 0.0, %v504
  %v506 = vpop.f32.mrf.mxu0
  %507 = vmatprep.mubr.bf16.mxu0 0
  %508 = vmatmul.mubr.bf16.gmra.mxu0 %v383
  %v509 = vpop.f32.mrf.mxu0
  %v510 = vadd.f32 0.0, %v509
  %v511 = vpop.f32.mrf.mxu0
  %v512 = vpop.f32.mrf.mxu0
  %v513 = vadd.f32 0.0, %v512
  %v514 = vpop.f32.mrf.mxu0
  %515 = vmatprep.mubr.bf16.mxu0 0
  %516 = vmatmul.mubr.bf16.gmra.mxu0 %v384
  %v517 = vpop.f32.mrf.mxu0
  %v518 = vadd.f32 0.0, %v517
  %v519 = vpop.f32.mrf.mxu0
  %v520 = vpop.f32.mrf.mxu0
  %v521 = vadd.f32 0.0, %v520
  %v522 = vpop.f32.mrf.mxu0
  %523 = vmatprep.mubr.bf16.mxu0 0
  %524 = vmatmul.mubr.bf16.gmra.mxu0 %v385
  %v525 = vpop.f32.mrf.mxu0
  %v526 = vadd.f32 0.0, %v525
  %v527 = vpop.f32.mrf.mxu0
  %v528 = vpop.f32.mrf.mxu0
  %v529 = vadd.f32 0.0, %v528
  %v530 = vpop.f32.mrf.mxu0
  %531 = vmatprep.mubr.bf16.mxu0 0
  %532 = vmatmul.mubr.bf16.gmra.mxu0 %v386
  %v533 = vpop.f32.mrf.mxu0
  %v534 = vadd.f32 0.0, %v533
  %v535 = vpop.f32.mrf.mxu0
  %v536 = vpop.f32.mrf.mxu0
  %v537 = vadd.f32 0.0, %v536
  %v538 = vpop.f32.mrf.mxu0
  %539 = vdwg.mxu0
  %v540 = vadd.f32 %v283, %v478
  %v541 = vadd.f32 %v284, %v481
  %v542 = vadd.f32 %v285, %v486
  %v543 = vadd.f32 %v286, %v489
  %v544 = vadd.f32 %v287, %v494
  %v545 = vadd.f32 %v288, %v497
  %v546 = vadd.f32 %v289, %v502
  %v547 = vadd.f32 %v290, %v505
  %v548 = vadd.f32 %v291, %v510
  %v549 = vadd.f32 %v292, %v513
  %v550 = vadd.f32 %v293, %v518
  %v551 = vadd.f32 %v294, %v521
  %v552 = vadd.f32 %v295, %v526
  %v553 = vadd.f32 %v296, %v529
  %v554 = vadd.f32 %v297, %v534
  %v555 = vadd.f32 %v298, %v537
  %556 = vst [vmem:[#allocation2] sm:$0xff] %v540
  %557 = vst [vmem:[#allocation2 + $0x8] sm:$0xff] %v541
  %558 = vst [vmem:[#allocation2 + $0x10] sm:$0xff] %v542
  %559 = vst [vmem:[#allocation2 + $0x18] sm:$0xff] %v543
  %560 = vst [vmem:[#allocation2 + $0x20] sm:$0xff] %v544
  %561 = vst [vmem:[#allocation2 + $0x28] sm:$0xff] %v545
  %562 = vst [vmem:[#allocation2 + $0x30] sm:$0xff] %v546
  %563 = vst [vmem:[#allocation2 + $0x38] sm:$0xff] %v547
  %564 = vst [vmem:[#allocation2 + $0x40] sm:$0xff] %v548
  %565 = vst [vmem:[#allocation2 + $0x48] sm:$0xff] %v549
  %566 = vst [vmem:[#allocation2 + $0x50] sm:$0xff] %v550
  %567 = vst [vmem:[#allocation2 + $0x58] sm:$0xff] %v551
  %568 = vst [vmem:[#allocation2 + $0x60] sm:$0xff] %v552
  %569 = vst [vmem:[#allocation2 + $0x68] sm:$0xff] %v553
  %570 = vst [vmem:[#allocation2 + $0x70] sm:$0xff] %v554
  %571 = vst [vmem:[#allocation2 + $0x78] sm:$0xff] %v555
  // Predicated region
  $region58: #{enhanced_sage_forward.5} parent=0 // pred_check
    %p572 = pneg %p47
  $region59: #{enhanced_sage_forward.5} parent=0 // pred_check_branch
    %574 = sbr.rel (%p572) target = $region61
  $region60: #{enhanced_sage_forward.5} parent=0 // pred_region
    %v575 = vld [vmem:[#allocation2] sm:$0xff]
    %v576 = vld [vmem:[#allocation2 + $0x8] sm:$0xff]
    %v577 = vld [vmem:[#allocation2 + $0x10] sm:$0xff]
    %v578 = vld [vmem:[#allocation2 + $0x18] sm:$0xff]
    %v579 = vld [vmem:[#allocation2 + $0x20] sm:$0xff]
    %v580 = vld [vmem:[#allocation2 + $0x28] sm:$0xff]
    %v581 = vld [vmem:[#allocation2 + $0x30] sm:$0xff]
    %v582 = vld [vmem:[#allocation2 + $0x38] sm:$0xff]
    %v583 = vld [vmem:[#allocation2 + $0x40] sm:$0xff]
    %v584 = vld [vmem:[#allocation2 + $0x48] sm:$0xff]
    %v585 = vld [vmem:[#allocation2 + $0x50] sm:$0xff]
    %v586 = vld [vmem:[#allocation2 + $0x58] sm:$0xff]
    %v587 = vld [vmem:[#allocation2 + $0x60] sm:$0xff]
    %v588 = vld [vmem:[#allocation2 + $0x68] sm:$0xff]
    %v589 = vld [vmem:[#allocation2 + $0x70] sm:$0xff]
    %v590 = vld [vmem:[#allocation2 + $0x78] sm:$0xff]
    %v591 = vld [vmem:[%s3] sm:$0xff]
    %v592 = vld [vmem:[%s3 + $0x8] sm:$0xff]
    %v593 = vld [vmem:[%s3 + $0x10] sm:$0xff]
    %v594 = vld [vmem:[%s3 + $0x18] sm:$0xff]
    %v595 = vld [vmem:[%s3 + $0x20] sm:$0xff]
    %v596 = vld [vmem:[%s3 + $0x28] sm:$0xff]
    %v597 = vld [vmem:[%s3 + $0x30] sm:$0xff]
    %v598 = vld [vmem:[%s3 + $0x38] sm:$0xff]
    %v599 = vld [vmem:[%s3 + $0x40] sm:$0xff]
    %v600 = vld [vmem:[%s3 + $0x48] sm:$0xff]
    %v601 = vld [vmem:[%s3 + $0x50] sm:$0xff]
    %v602 = vld [vmem:[%s3 + $0x58] sm:$0xff]
    %v603 = vld [vmem:[%s3 + $0x60] sm:$0xff]
    %v604 = vld [vmem:[%s3 + $0x68] sm:$0xff]
    %v605 = vld [vmem:[%s3 + $0x70] sm:$0xff]
    %v606 = vld [vmem:[%s3 + $0x78] sm:$0xff]
    %608 = vset.pattern.permute.xlu0 0
    %609 = vperm.xlu0 %608, %v591
    %v610 = vpop.permute.xlu0 %609
    %613 = vset.pattern.permute.xlu0 0
    %614 = vperm.xlu0 %613, %v592
    %v615 = vpop.permute.xlu0 %614
    %618 = vset.pattern.permute.xlu0 0
    %619 = vperm.xlu0 %618, %v593
    %v620 = vpop.permute.xlu0 %619
    %623 = vset.pattern.permute.xlu0 0
    %624 = vperm.xlu0 %623, %v594
    %v625 = vpop.permute.xlu0 %624
    %628 = vset.pattern.permute.xlu0 0
    %629 = vperm.xlu0 %628, %v595
    %v630 = vpop.permute.xlu0 %629
    %633 = vset.pattern.permute.xlu0 0
    %634 = vperm.xlu0 %633, %v596
    %v635 = vpop.permute.xlu0 %634
    %638 = vset.pattern.permute.xlu0 0
    %639 = vperm.xlu0 %638, %v597
    %v640 = vpop.permute.xlu0 %639
    %643 = vset.pattern.permute.xlu0 0
    %644 = vperm.xlu0 %643, %v598
    %v645 = vpop.permute.xlu0 %644
    %648 = vset.pattern.permute.xlu0 0
    %649 = vperm.xlu0 %648, %v599
    %v650 = vpop.permute.xlu0 %649
    %653 = vset.pattern.permute.xlu0 0
    %654 = vperm.xlu0 %653, %v600
    %v655 = vpop.permute.xlu0 %654
    %658 = vset.pattern.permute.xlu0 0
    %659 = vperm.xlu0 %658, %v601
    %v660 = vpop.permute.xlu0 %659
    %663 = vset.pattern.permute.xlu0 0
    %664 = vperm.xlu0 %663, %v602
    %v665 = vpop.permute.xlu0 %664
    %668 = vset.pattern.permute.xlu0 0
    %669 = vperm.xlu0 %668, %v603
    %v670 = vpop.permute.xlu0 %669
    %673 = vset.pattern.permute.xlu0 0
    %674 = vperm.xlu0 %673, %v604
    %v675 = vpop.permute.xlu0 %674
    %678 = vset.pattern.permute.xlu0 0
    %679 = vperm.xlu0 %678, %v605
    %v680 = vpop.permute.xlu0 %679
    %683 = vset.pattern.permute.xlu0 0
    %684 = vperm.xlu0 %683, %v606
    %v685 = vpop.permute.xlu0 %684
    %v687 = vmul.f32 %v575, %v610
    %v688 = vmul.f32 %v576, %v615
    %v689 = vmul.f32 %v577, %v620
    %v690 = vmul.f32 %v578, %v625
    %v691 = vmul.f32 %v579, %v630
    %v692 = vmul.f32 %v580, %v635
    %v693 = vmul.f32 %v581, %v640
    %v694 = vmul.f32 %v582, %v645
    %v695 = vmul.f32 %v583, %v650
    %v696 = vmul.f32 %v584, %v655
    %v697 = vmul.f32 %v585, %v660
    %v698 = vmul.f32 %v586, %v665
    %v699 = vmul.f32 %v587, %v670
    %v700 = vmul.f32 %v588, %v675
    %v701 = vmul.f32 %v589, %v680
    %v702 = vmul.f32 %v590, %v685
    %v703 = vld [vmem:[%s4] sm:$0xff]
    %v704 = vld [vmem:[%s4 + $0x8] sm:$0xff]
    %v705 = vld [vmem:[%s4 + $0x10] sm:$0xff]
    %v706 = vld [vmem:[%s4 + $0x18] sm:$0xff]
    %v707 = vld [vmem:[%s4 + $0x20] sm:$0xff]
    %v708 = vld [vmem:[%s4 + $0x28] sm:$0xff]
    %v709 = vld [vmem:[%s4 + $0x30] sm:$0xff]
    %v710 = vld [vmem:[%s4 + $0x38] sm:$0xff]
    %v711 = vld [vmem:[%s4 + $0x40] sm:$0xff]
    %v712 = vld [vmem:[%s4 + $0x48] sm:$0xff]
    %v713 = vld [vmem:[%s4 + $0x50] sm:$0xff]
    %v714 = vld [vmem:[%s4 + $0x58] sm:$0xff]
    %v715 = vld [vmem:[%s4 + $0x60] sm:$0xff]
    %v716 = vld [vmem:[%s4 + $0x68] sm:$0xff]
    %v717 = vld [vmem:[%s4 + $0x70] sm:$0xff]
    %v718 = vld [vmem:[%s4 + $0x78] sm:$0xff]
    %v719 = vld [vmem:[#allocation3] sm:$0xff]
    %v720 = vld [vmem:[#allocation3 + $0x8] sm:$0xff]
    %v721 = vld [vmem:[#allocation3 + $0x10] sm:$0xff]
    %v722 = vld [vmem:[#allocation3 + $0x18] sm:$0xff]
    %v723 = vld [vmem:[#allocation3 + $0x20] sm:$0xff]
    %v724 = vld [vmem:[#allocation3 + $0x28] sm:$0xff]
    %v725 = vld [vmem:[#allocation3 + $0x30] sm:$0xff]
    %v726 = vld [vmem:[#allocation3 + $0x38] sm:$0xff]
    %v727 = vld [vmem:[#allocation3 + $0x40] sm:$0xff]
    %v728 = vld [vmem:[#allocation3 + $0x48] sm:$0xff]
    %v729 = vld [vmem:[#allocation3 + $0x50] sm:$0xff]
    %v730 = vld [vmem:[#allocation3 + $0x58] sm:$0xff]
    %v731 = vld [vmem:[#allocation3 + $0x60] sm:$0xff]
    %v732 = vld [vmem:[#allocation3 + $0x68] sm:$0xff]
    %v733 = vld [vmem:[#allocation3 + $0x70] sm:$0xff]
    %v734 = vld [vmem:[#allocation3 + $0x78] sm:$0xff]
    %735 = vmatprep.subr.mxu0 0.0
    %736 = vmatpush1.msra.mxu0 %v718
    %737 = vmatprep.subr.mxu0 0.0
    %738 = vmatpush1.msra.mxu0 %v717
    %739 = vmatprep.subr.mxu0 0.0
    %740 = vmatpush1.msra.mxu0 %v716
    %741 = vmatprep.subr.mxu0 0.0
    %742 = vmatpush1.msra.mxu0 %v715
    %743 = vmatprep.subr.mxu0 0.0
    %744 = vmatpush1.msra.mxu0 %v714
    %745 = vmatprep.subr.mxu0 0.0
    %746 = vmatpush1.msra.mxu0 %v713
    %747 = vmatprep.subr.mxu0 0.0
    %748 = vmatpush1.msra.mxu0 %v712
    %749 = vmatprep.subr.mxu0 0.0
    %750 = vmatpush1.msra.mxu0 %v711
    %751 = vmatprep.subr.mxu0 0.0
    %752 = vmatpush1.msra.mxu0 %v710
    %753 = vmatprep.subr.mxu0 0.0
    %754 = vmatpush1.msra.mxu0 %v709
    %755 = vmatprep.subr.mxu0 0.0
    %756 = vmatpush1.msra.mxu0 %v708
    %757 = vmatprep.subr.mxu0 0.0
    %758 = vmatpush1.msra.mxu0 %v707
    %759 = vmatprep.subr.mxu0 0.0
    %760 = vmatpush1.msra.mxu0 %v706
    %761 = vmatprep.subr.mxu0 0.0
    %762 = vmatpush1.msra.mxu0 %v705
    %763 = vmatprep.subr.mxu0 0.0
    %764 = vmatpush1.msra.mxu0 %v704
    %765 = vmatprep.subr.mxu0 0.0
    %766 = vmatpush1.msra.mxu0 %v703
    %767 = vmatprep.subr.mxu0 0.0
    %768 = vmatpush2.msra.mxu0 0.0
    %769 = vmatprep.subr.mxu0 0.0
    %770 = vmatpush2.msra.mxu0 0.0
    %771 = vmatprep.subr.mxu0 0.0
    %772 = vmatpush2.msra.mxu0 0.0
    %773 = vmatprep.subr.mxu0 0.0
    %774 = vmatpush2.msra.mxu0 0.0
    %775 = vmatprep.subr.mxu0 0.0
    %776 = vmatpush2.msra.mxu0 0.0
    %777 = vmatprep.subr.mxu0 0.0
    %778 = vmatpush2.msra.mxu0 0.0
    %779 = vmatprep.subr.mxu0 0.0
    %780 = vmatpush2.msra.mxu0 0.0
    %781 = vmatprep.subr.mxu0 0.0
    %782 = vmatpush2.msra.mxu0 0.0
    %783 = vmatprep.subr.mxu0 0.0
    %784 = vmatpush2.msra.mxu0 0.0
    %785 = vmatprep.subr.mxu0 0.0
    %786 = vmatpush2.msra.mxu0 0.0
    %787 = vmatprep.subr.mxu0 0.0
    %788 = vmatpush2.msra.mxu0 0.0
    %789 = vmatprep.subr.mxu0 0.0
    %790 = vmatpush2.msra.mxu0 0.0
    %791 = vmatprep.subr.mxu0 0.0
    %792 = vmatpush2.msra.mxu0 0.0
    %793 = vmatprep.subr.mxu0 0.0
    %794 = vmatpush2.msra.mxu0 0.0
    %795 = vmatprep.subr.mxu0 0.0
    %796 = vmatpush2.msra.mxu0 0.0
    %797 = vmatprep.subr.mxu0 0.0
    %798 = vmatpush2.msra.mxu0 0.0
    %799 = vmatprep.mubr.f32.mxu0 0.0
    %800 = vmatmul.mubr.f32.gmra.mxu0 %v687
    %v801 = vpop.f32.mrf.mxu0
    %v802 = vadd.f32 %v719, %v801
    %v803 = vpop.f32.mrf.mxu0
    %804 = vmatprep.mubr.f32.mxu0 0.0
    %805 = vmatmul.mubr.f32.gmra.mxu0 %v688
    %v806 = vpop.f32.mrf.mxu0
    %v807 = vadd.f32 %v720, %v806
    %v808 = vpop.f32.mrf.mxu0
    %809 = vmatprep.mubr.f32.mxu0 0.0
    %810 = vmatmul.mubr.f32.gmra.mxu0 %v689
    %v811 = vpop.f32.mrf.mxu0
    %v812 = vadd.f32 %v721, %v811
    %v813 = vpop.f32.mrf.mxu0
    %814 = vmatprep.mubr.f32.mxu0 0.0
    %815 = vmatmul.mubr.f32.gmra.mxu0 %v690
    %v816 = vpop.f32.mrf.mxu0
    %v817 = vadd.f32 %v722, %v816
    %v818 = vpop.f32.mrf.mxu0
    %819 = vmatprep.mubr.f32.mxu0 0.0
    %820 = vmatmul.mubr.f32.gmra.mxu0 %v691
    %v821 = vpop.f32.mrf.mxu0
    %v822 = vadd.f32 %v723, %v821
    %v823 = vpop.f32.mrf.mxu0
    %824 = vmatprep.mubr.f32.mxu0 0.0
    %825 = vmatmul.mubr.f32.gmra.mxu0 %v692
    %v826 = vpop.f32.mrf.mxu0
    %v827 = vadd.f32 %v724, %v826
    %v828 = vpop.f32.mrf.mxu0
    %829 = vmatprep.mubr.f32.mxu0 0.0
    %830 = vmatmul.mubr.f32.gmra.mxu0 %v693
    %v831 = vpop.f32.mrf.mxu0
    %v832 = vadd.f32 %v725, %v831
    %v833 = vpop.f32.mrf.mxu0
    %834 = vmatprep.mubr.f32.mxu0 0.0
    %835 = vmatmul.mubr.f32.gmra.mxu0 %v694
    %v836 = vpop.f32.mrf.mxu0
    %v837 = vadd.f32 %v726, %v836
    %v838 = vpop.f32.mrf.mxu0
    %839 = vmatprep.mubr.f32.mxu0 0.0
    %840 = vmatmul.mubr.f32.gmra.mxu0 %v695
    %v841 = vpop.f32.mrf.mxu0
    %v842 = vadd.f32 %v727, %v841
    %v843 = vpop.f32.mrf.mxu0
    %844 = vmatprep.mubr.f32.mxu0 0.0
    %845 = vmatmul.mubr.f32.gmra.mxu0 %v696
    %v846 = vpop.f32.mrf.mxu0
    %v847 = vadd.f32 %v728, %v846
    %v848 = vpop.f32.mrf.mxu0
    %849 = vmatprep.mubr.f32.mxu0 0.0
    %850 = vmatmul.mubr.f32.gmra.mxu0 %v697
    %v851 = vpop.f32.mrf.mxu0
    %v852 = vadd.f32 %v729, %v851
    %v853 = vpop.f32.mrf.mxu0
    %854 = vmatprep.mubr.f32.mxu0 0.0
    %855 = vmatmul.mubr.f32.gmra.mxu0 %v698
    %v856 = vpop.f32.mrf.mxu0
    %v857 = vadd.f32 %v730, %v856
    %v858 = vpop.f32.mrf.mxu0
    %859 = vmatprep.mubr.f32.mxu0 0.0
    %860 = vmatmul.mubr.f32.gmra.mxu0 %v699
    %v861 = vpop.f32.mrf.mxu0
    %v862 = vadd.f32 %v731, %v861
    %v863 = vpop.f32.mrf.mxu0
    %864 = vmatprep.mubr.f32.mxu0 0.0
    %865 = vmatmul.mubr.f32.gmra.mxu0 %v700
    %v866 = vpop.f32.mrf.mxu0
    %v867 = vadd.f32 %v732, %v866
    %v868 = vpop.f32.mrf.mxu0
    %869 = vmatprep.mubr.f32.mxu0 0.0
    %870 = vmatmul.mubr.f32.gmra.mxu0 %v701
    %v871 = vpop.f32.mrf.mxu0
    %v872 = vadd.f32 %v733, %v871
    %v873 = vpop.f32.mrf.mxu0
    %874 = vmatprep.mubr.f32.mxu0 0.0
    %875 = vmatmul.mubr.f32.gmra.mxu0 %v702
    %v876 = vpop.f32.mrf.mxu0
    %v877 = vadd.f32 %v734, %v876
    %v878 = vpop.f32.mrf.mxu0
    %879 = vdwg.mxu0
    %v880 = vld [vmem:[%s7] sm:$0xff]
    %v881 = vld [vmem:[%s7 + $0x8] sm:$0xff]
    %v882 = vld [vmem:[%s7 + $0x10] sm:$0xff]
    %v883 = vld [vmem:[%s7 + $0x18] sm:$0xff]
    %v884 = vld [vmem:[%s7 + $0x20] sm:$0xff]
    %v885 = vld [vmem:[%s7 + $0x28] sm:$0xff]
    %v886 = vld [vmem:[%s7 + $0x30] sm:$0xff]
    %v887 = vld [vmem:[%s7 + $0x38] sm:$0xff]
    %v888 = vld [vmem:[%s7 + $0x40] sm:$0xff]
    %v889 = vld [vmem:[%s7 + $0x48] sm:$0xff]
    %v890 = vld [vmem:[%s7 + $0x50] sm:$0xff]
    %v891 = vld [vmem:[%s7 + $0x58] sm:$0xff]
    %v892 = vld [vmem:[%s7 + $0x60] sm:$0xff]
    %v893 = vld [vmem:[%s7 + $0x68] sm:$0xff]
    %v894 = vld [vmem:[%s7 + $0x70] sm:$0xff]
    %v895 = vld [vmem:[%s7 + $0x78] sm:$0xff]
    %v896 = vld [vmem:[%s8] sm:$0x1]
    %v898 = vlaneseq
    %v899 = vshrl.u32 %v898, 7
    %v900 = vsub.s32 0, %v899
    %v901 = vrot.slane %v896, %v900
    %903 = vmatprep.subr.mxu0 0.0
    %904 = vmatpush1.msra.mxu0 %v895
    %905 = vmatprep.subr.mxu0 0.0
    %906 = vmatpush1.msra.mxu0 %v894
    %907 = vmatprep.subr.mxu0 0.0
    %908 = vmatpush1.msra.mxu0 %v893
    %909 = vmatprep.subr.mxu0 0.0
    %910 = vmatpush1.msra.mxu0 %v892
    %911 = vmatprep.subr.mxu0 0.0
    %912 = vmatpush1.msra.mxu0 %v891
    %913 = vmatprep.subr.mxu0 0.0
    %914 = vmatpush1.msra.mxu0 %v890
    %915 = vmatprep.subr.mxu0 0.0
    %916 = vmatpush1.msra.mxu0 %v889
    %917 = vmatprep.subr.mxu0 0.0
    %918 = vmatpush1.msra.mxu0 %v888
    %919 = vmatprep.subr.mxu0 0.0
    %920 = vmatpush1.msra.mxu0 %v887
    %921 = vmatprep.subr.mxu0 0.0
    %922 = vmatpush1.msra.mxu0 %v886
    %923 = vmatprep.subr.mxu0 0.0
    %924 = vmatpush1.msra.mxu0 %v885
    %925 = vmatprep.subr.mxu0 0.0
    %926 = vmatpush1.msra.mxu0 %v884
    %927 = vmatprep.subr.mxu0 0.0
    %928 = vmatpush1.msra.mxu0 %v883
    %929 = vmatprep.subr.mxu0 0.0
    %930 = vmatpush1.msra.mxu0 %v882
    %931 = vmatprep.subr.mxu0 0.0
    %932 = vmatpush1.msra.mxu0 %v881
    %933 = vmatprep.subr.mxu0 0.0
    %934 = vmatpush1.msra.mxu0 %v880
    %935 = vmatprep.subr.mxu0 0.0
    %936 = vmatpush2.msra.mxu0 0.0
    %937 = vmatprep.subr.mxu0 0.0
    %938 = vmatpush2.msra.mxu0 0.0
    %939 = vmatprep.subr.mxu0 0.0
    %940 = vmatpush2.msra.mxu0 0.0
    %941 = vmatprep.subr.mxu0 0.0
    %942 = vmatpush2.msra.mxu0 0.0
    %943 = vmatprep.subr.mxu0 0.0
    %944 = vmatpush2.msra.mxu0 0.0
    %945 = vmatprep.subr.mxu0 0.0
    %946 = vmatpush2.msra.mxu0 0.0
    %947 = vmatprep.subr.mxu0 0.0
    %948 = vmatpush2.msra.mxu0 0.0
    %949 = vmatprep.subr.mxu0 0.0
    %950 = vmatpush2.msra.mxu0 0.0
    %951 = vmatprep.subr.mxu0 0.0
    %952 = vmatpush2.msra.mxu0 0.0
    %953 = vmatprep.subr.mxu0 0.0
    %954 = vmatpush2.msra.mxu0 0.0
    %955 = vmatprep.subr.mxu0 0.0
    %956 = vmatpush2.msra.mxu0 0.0
    %957 = vmatprep.subr.mxu0 0.0
    %958 = vmatpush2.msra.mxu0 0.0
    %959 = vmatprep.subr.mxu0 0.0
    %960 = vmatpush2.msra.mxu0 0.0
    %961 = vmatprep.subr.mxu0 0.0
    %962 = vmatpush2.msra.mxu0 0.0
    %963 = vmatprep.subr.mxu0 0.0
    %964 = vmatpush2.msra.mxu0 0.0
    %965 = vmatprep.subr.mxu0 0.0
    %966 = vmatpush2.msra.mxu0 0.0
    %967 = vmatprep.mubr.f32.mxu0 0.0
    %968 = vmatmul.mubr.f32.gmra.mxu0 %v802
    %v969 = vpop.f32.mrf.mxu0
    %v970 = vadd.f32 %v901, %v969
    %v971 = vpop.f32.mrf.mxu0
    %972 = vmatprep.mubr.f32.mxu0 0.0
    %973 = vmatmul.mubr.f32.gmra.mxu0 %v807
    %v974 = vpop.f32.mrf.mxu0
    %v975 = vadd.f32 %v901, %v974
    %v976 = vpop.f32.mrf.mxu0
    %977 = vmatprep.mubr.f32.mxu0 0.0
    %978 = vmatmul.mubr.f32.gmra.mxu0 %v812
    %v979 = vpop.f32.mrf.mxu0
    %v980 = vadd.f32 %v901, %v979
    %v981 = vpop.f32.mrf.mxu0
    %982 = vmatprep.mubr.f32.mxu0 0.0
    %983 = vmatmul.mubr.f32.gmra.mxu0 %v817
    %v984 = vpop.f32.mrf.mxu0
    %v985 = vadd.f32 %v901, %v984
    %v986 = vpop.f32.mrf.mxu0
    %987 = vmatprep.mubr.f32.mxu0 0.0
    %988 = vmatmul.mubr.f32.gmra.mxu0 %v822
    %v989 = vpop.f32.mrf.mxu0
    %v990 = vadd.f32 %v901, %v989
    %v991 = vpop.f32.mrf.mxu0
    %992 = vmatprep.mubr.f32.mxu0 0.0
    %993 = vmatmul.mubr.f32.gmra.mxu0 %v827
    %v994 = vpop.f32.mrf.mxu0
    %v995 = vadd.f32 %v901, %v994
    %v996 = vpop.f32.mrf.mxu0
    %997 = vmatprep.mubr.f32.mxu0 0.0
    %998 = vmatmul.mubr.f32.gmra.mxu0 %v832
    %v999 = vpop.f32.mrf.mxu0
    %v1000 = vadd.f32 %v901, %v999
    %v1001 = vpop.f32.mrf.mxu0
    %1002 = vmatprep.mubr.f32.mxu0 0.0
    %1003 = vmatmul.mubr.f32.gmra.mxu0 %v837
    %v1004 = vpop.f32.mrf.mxu0
    %v1005 = vadd.f32 %v901, %v1004
    %v1006 = vpop.f32.mrf.mxu0
    %1007 = vmatprep.mubr.f32.mxu0 0.0
    %1008 = vmatmul.mubr.f32.gmra.mxu0 %v842
    %v1009 = vpop.f32.mrf.mxu0
    %v1010 = vadd.f32 %v901, %v1009
    %v1011 = vpop.f32.mrf.mxu0
    %1012 = vmatprep.mubr.f32.mxu0 0.0
    %1013 = vmatmul.mubr.f32.gmra.mxu0 %v847
    %v1014 = vpop.f32.mrf.mxu0
    %v1015 = vadd.f32 %v901, %v1014
    %v1016 = vpop.f32.mrf.mxu0
    %1017 = vmatprep.mubr.f32.mxu0 0.0
    %1018 = vmatmul.mubr.f32.gmra.mxu0 %v852
    %v1019 = vpop.f32.mrf.mxu0
    %v1020 = vadd.f32 %v901, %v1019
    %v1021 = vpop.f32.mrf.mxu0
    %1022 = vmatprep.mubr.f32.mxu0 0.0
    %1023 = vmatmul.mubr.f32.gmra.mxu0 %v857
    %v1024 = vpop.f32.mrf.mxu0
    %v1025 = vadd.f32 %v901, %v1024
    %v1026 = vpop.f32.mrf.mxu0
    %1027 = vmatprep.mubr.f32.mxu0 0.0
    %1028 = vmatmul.mubr.f32.gmra.mxu0 %v862
    %v1029 = vpop.f32.mrf.mxu0
    %v1030 = vadd.f32 %v901, %v1029
    %v1031 = vpop.f32.mrf.mxu0
    %1032 = vmatprep.mubr.f32.mxu0 0.0
    %1033 = vmatmul.mubr.f32.gmra.mxu0 %v867
    %v1034 = vpop.f32.mrf.mxu0
    %v1035 = vadd.f32 %v901, %v1034
    %v1036 = vpop.f32.mrf.mxu0
    %1037 = vmatprep.mubr.f32.mxu0 0.0
    %1038 = vmatmul.mubr.f32.gmra.mxu0 %v872
    %v1039 = vpop.f32.mrf.mxu0
    %v1040 = vadd.f32 %v901, %v1039
    %v1041 = vpop.f32.mrf.mxu0
    %1042 = vmatprep.mubr.f32.mxu0 0.0
    %1043 = vmatmul.mubr.f32.gmra.mxu0 %v877
    %v1044 = vpop.f32.mrf.mxu0
    %v1045 = vadd.f32 %v901, %v1044
    %v1046 = vpop.f32.mrf.mxu0
    %1047 = vdwg.mxu0
    %v1048 = vmax.f32 %v970, 0.0
    %v1049 = vmax.f32 %v975, 0.0
    %v1050 = vmax.f32 %v980, 0.0
    %v1051 = vmax.f32 %v985, 0.0
    %v1052 = vmax.f32 %v990, 0.0
    %v1053 = vmax.f32 %v995, 0.0
    %v1054 = vmax.f32 %v1000, 0.0
    %v1055 = vmax.f32 %v1005, 0.0
    %v1056 = vmax.f32 %v1010, 0.0
    %v1057 = vmax.f32 %v1015, 0.0
    %v1058 = vmax.f32 %v1020, 0.0
    %v1059 = vmax.f32 %v1025, 0.0
    %v1060 = vmax.f32 %v1030, 0.0
    %v1061 = vmax.f32 %v1035, 0.0
    %v1062 = vmax.f32 %v1040, 0.0
    %v1063 = vmax.f32 %v1045, 0.0
    %v1064 = vld [vmem:[%s9] sm:$0xff]
    %v1065 = vld [vmem:[%s9 + $0x8] sm:$0xff]
    %v1066 = vld [vmem:[%s9 + $0x10] sm:$0xff]
    %v1067 = vld [vmem:[%s9 + $0x18] sm:$0xff]
    %v1068 = vld [vmem:[%s9 + $0x20] sm:$0xff]
    %v1069 = vld [vmem:[%s9 + $0x28] sm:$0xff]
    %v1070 = vld [vmem:[%s9 + $0x30] sm:$0xff]
    %v1071 = vld [vmem:[%s9 + $0x38] sm:$0xff]
    %v1072 = vld [vmem:[%s9 + $0x40] sm:$0xff]
    %v1073 = vld [vmem:[%s9 + $0x48] sm:$0xff]
    %v1074 = vld [vmem:[%s9 + $0x50] sm:$0xff]
    %v1075 = vld [vmem:[%s9 + $0x58] sm:$0xff]
    %v1076 = vld [vmem:[%s9 + $0x60] sm:$0xff]
    %v1077 = vld [vmem:[%s9 + $0x68] sm:$0xff]
    %v1078 = vld [vmem:[%s9 + $0x70] sm:$0xff]
    %v1079 = vld [vmem:[%s9 + $0x78] sm:$0xff]
    %v1080 = vld [vmem:[%s10] sm:$0x1]
    %v1082 = vlaneseq
    %v1083 = vshrl.u32 %v1082, 7
    %v1084 = vsub.s32 0, %v1083
    %v1085 = vrot.slane %v1080, %v1084
    %1087 = vmatprep.subr.mxu0 0.0
    %1088 = vmatpush1.msra.mxu0 %v1079
    %1089 = vmatprep.subr.mxu0 0.0
    %1090 = vmatpush1.msra.mxu0 %v1078
    %1091 = vmatprep.subr.mxu0 0.0
    %1092 = vmatpush1.msra.mxu0 %v1077
    %1093 = vmatprep.subr.mxu0 0.0
    %1094 = vmatpush1.msra.mxu0 %v1076
    %1095 = vmatprep.subr.mxu0 0.0
    %1096 = vmatpush1.msra.mxu0 %v1075
    %1097 = vmatprep.subr.mxu0 0.0
    %1098 = vmatpush1.msra.mxu0 %v1074
    %1099 = vmatprep.subr.mxu0 0.0
    %1100 = vmatpush1.msra.mxu0 %v1073
    %1101 = vmatprep.subr.mxu0 0.0
    %1102 = vmatpush1.msra.mxu0 %v1072
    %1103 = vmatprep.subr.mxu0 0.0
    %1104 = vmatpush1.msra.mxu0 %v1071
    %1105 = vmatprep.subr.mxu0 0.0
    %1106 = vmatpush1.msra.mxu0 %v1070
    %1107 = vmatprep.subr.mxu0 0.0
    %1108 = vmatpush1.msra.mxu0 %v1069
    %1109 = vmatprep.subr.mxu0 0.0
    %1110 = vmatpush1.msra.mxu0 %v1068
    %1111 = vmatprep.subr.mxu0 0.0
    %1112 = vmatpush1.msra.mxu0 %v1067
    %1113 = vmatprep.subr.mxu0 0.0
    %1114 = vmatpush1.msra.mxu0 %v1066
    %1115 = vmatprep.subr.mxu0 0.0
    %1116 = vmatpush1.msra.mxu0 %v1065
    %1117 = vmatprep.subr.mxu0 0.0
    %1118 = vmatpush1.msra.mxu0 %v1064
    %1119 = vmatprep.subr.mxu0 0.0
    %1120 = vmatpush2.msra.mxu0 0.0
    %1121 = vmatprep.subr.mxu0 0.0
    %1122 = vmatpush2.msra.mxu0 0.0
    %1123 = vmatprep.subr.mxu0 0.0
    %1124 = vmatpush2.msra.mxu0 0.0
    %1125 = vmatprep.subr.mxu0 0.0
    %1126 = vmatpush2.msra.mxu0 0.0
    %1127 = vmatprep.subr.mxu0 0.0
    %1128 = vmatpush2.msra.mxu0 0.0
    %1129 = vmatprep.subr.mxu0 0.0
    %1130 = vmatpush2.msra.mxu0 0.0
    %1131 = vmatprep.subr.mxu0 0.0
    %1132 = vmatpush2.msra.mxu0 0.0
    %1133 = vmatprep.subr.mxu0 0.0
    %1134 = vmatpush2.msra.mxu0 0.0
    %1135 = vmatprep.subr.mxu0 0.0
    %1136 = vmatpush2.msra.mxu0 0.0
    %1137 = vmatprep.subr.mxu0 0.0
    %1138 = vmatpush2.msra.mxu0 0.0
    %1139 = vmatprep.subr.mxu0 0.0
    %1140 = vmatpush2.msra.mxu0 0.0
    %1141 = vmatprep.subr.mxu0 0.0
    %1142 = vmatpush2.msra.mxu0 0.0
    %1143 = vmatprep.subr.mxu0 0.0
    %1144 = vmatpush2.msra.mxu0 0.0
    %1145 = vmatprep.subr.mxu0 0.0
    %1146 = vmatpush2.msra.mxu0 0.0
    %1147 = vmatprep.subr.mxu0 0.0
    %1148 = vmatpush2.msra.mxu0 0.0
    %1149 = vmatprep.subr.mxu0 0.0
    %1150 = vmatpush2.msra.mxu0 0.0
    %1151 = vmatprep.mubr.f32.mxu0 0.0
    %1152 = vmatmul.mubr.f32.gmra.mxu0 %v1048
    %v1153 = vpop.f32.mrf.mxu0
    %v1154 = vadd.f32 %v1085, %v1153
    %v1155 = vpop.f32.mrf.mxu0
    %1156 = vmatprep.mubr.f32.mxu0 0.0
    %1157 = vmatmul.mubr.f32.gmra.mxu0 %v1049
    %v1158 = vpop.f32.mrf.mxu0
    %v1159 = vadd.f32 %v1085, %v1158
    %v1160 = vpop.f32.mrf.mxu0
    %1161 = vmatprep.mubr.f32.mxu0 0.0
    %1162 = vmatmul.mubr.f32.gmra.mxu0 %v1050
    %v1163 = vpop.f32.mrf.mxu0
    %v1164 = vadd.f32 %v1085, %v1163
    %v1165 = vpop.f32.mrf.mxu0
    %1166 = vmatprep.mubr.f32.mxu0 0.0
    %1167 = vmatmul.mubr.f32.gmra.mxu0 %v1051
    %v1168 = vpop.f32.mrf.mxu0
    %v1169 = vadd.f32 %v1085, %v1168
    %v1170 = vpop.f32.mrf.mxu0
    %1171 = vmatprep.mubr.f32.mxu0 0.0
    %1172 = vmatmul.mubr.f32.gmra.mxu0 %v1052
    %v1173 = vpop.f32.mrf.mxu0
    %v1174 = vadd.f32 %v1085, %v1173
    %v1175 = vpop.f32.mrf.mxu0
    %1176 = vmatprep.mubr.f32.mxu0 0.0
    %1177 = vmatmul.mubr.f32.gmra.mxu0 %v1053
    %v1178 = vpop.f32.mrf.mxu0
    %v1179 = vadd.f32 %v1085, %v1178
    %v1180 = vpop.f32.mrf.mxu0
    %1181 = vmatprep.mubr.f32.mxu0 0.0
    %1182 = vmatmul.mubr.f32.gmra.mxu0 %v1054
    %v1183 = vpop.f32.mrf.mxu0
    %v1184 = vadd.f32 %v1085, %v1183
    %v1185 = vpop.f32.mrf.mxu0
    %1186 = vmatprep.mubr.f32.mxu0 0.0
    %1187 = vmatmul.mubr.f32.gmra.mxu0 %v1055
    %v1188 = vpop.f32.mrf.mxu0
    %v1189 = vadd.f32 %v1085, %v1188
    %v1190 = vpop.f32.mrf.mxu0
    %1191 = vmatprep.mubr.f32.mxu0 0.0
    %1192 = vmatmul.mubr.f32.gmra.mxu0 %v1056
    %v1193 = vpop.f32.mrf.mxu0
    %v1194 = vadd.f32 %v1085, %v1193
    %v1195 = vpop.f32.mrf.mxu0
    %1196 = vmatprep.mubr.f32.mxu0 0.0
    %1197 = vmatmul.mubr.f32.gmra.mxu0 %v1057
    %v1198 = vpop.f32.mrf.mxu0
    %v1199 = vadd.f32 %v1085, %v1198
    %v1200 = vpop.f32.mrf.mxu0
    %1201 = vmatprep.mubr.f32.mxu0 0.0
    %1202 = vmatmul.mubr.f32.gmra.mxu0 %v1058
    %v1203 = vpop.f32.mrf.mxu0
    %v1204 = vadd.f32 %v1085, %v1203
    %v1205 = vpop.f32.mrf.mxu0
    %1206 = vmatprep.mubr.f32.mxu0 0.0
    %1207 = vmatmul.mubr.f32.gmra.mxu0 %v1059
    %v1208 = vpop.f32.mrf.mxu0
    %v1209 = vadd.f32 %v1085, %v1208
    %v1210 = vpop.f32.mrf.mxu0
    %1211 = vmatprep.mubr.f32.mxu0 0.0
    %1212 = vmatmul.mubr.f32.gmra.mxu0 %v1060
    %v1213 = vpop.f32.mrf.mxu0
    %v1214 = vadd.f32 %v1085, %v1213
    %v1215 = vpop.f32.mrf.mxu0
    %1216 = vmatprep.mubr.f32.mxu0 0.0
    %1217 = vmatmul.mubr.f32.gmra.mxu0 %v1061
    %v1218 = vpop.f32.mrf.mxu0
    %v1219 = vadd.f32 %v1085, %v1218
    %v1220 = vpop.f32.mrf.mxu0
    %1221 = vmatprep.mubr.f32.mxu0 0.0
    %1222 = vmatmul.mubr.f32.gmra.mxu0 %v1062
    %v1223 = vpop.f32.mrf.mxu0
    %v1224 = vadd.f32 %v1085, %v1223
    %v1225 = vpop.f32.mrf.mxu0
    %1226 = vmatprep.mubr.f32.mxu0 0.0
    %1227 = vmatmul.mubr.f32.gmra.mxu0 %v1063
    %v1228 = vpop.f32.mrf.mxu0
    %v1229 = vadd.f32 %v1085, %v1228
    %v1230 = vpop.f32.mrf.mxu0
    %1231 = vdwg.mxu0
    %v1232 = vld [vmem:[%s11] sm:$0xff]
    %v1233 = vld [vmem:[%s11 + $0x8] sm:$0xff]
    %v1234 = vld [vmem:[%s11 + $0x10] sm:$0xff]
    %v1235 = vld [vmem:[%s11 + $0x18] sm:$0xff]
    %v1236 = vld [vmem:[%s11 + $0x20] sm:$0xff]
    %v1237 = vld [vmem:[%s11 + $0x28] sm:$0xff]
    %v1238 = vld [vmem:[%s11 + $0x30] sm:$0xff]
    %v1239 = vld [vmem:[%s11 + $0x38] sm:$0xff]
    %v1240 = vld [vmem:[%s11 + $0x40] sm:$0xff]
    %v1241 = vld [vmem:[%s11 + $0x48] sm:$0xff]
    %v1242 = vld [vmem:[%s11 + $0x50] sm:$0xff]
    %v1243 = vld [vmem:[%s11 + $0x58] sm:$0xff]
    %v1244 = vld [vmem:[%s11 + $0x60] sm:$0xff]
    %v1245 = vld [vmem:[%s11 + $0x68] sm:$0xff]
    %v1246 = vld [vmem:[%s11 + $0x70] sm:$0xff]
    %v1247 = vld [vmem:[%s11 + $0x78] sm:$0xff]
    %v1248 = vld [vmem:[%s12] sm:$0x1]
    %v1250 = vlaneseq
    %v1251 = vshrl.u32 %v1250, 7
    %v1252 = vsub.s32 0, %v1251
    %v1253 = vrot.slane %v1248, %v1252
    %1255 = vmatprep.subr.mxu0 0.0
    %1256 = vmatpush1.msra.mxu0 %v1247
    %1257 = vmatprep.subr.mxu0 0.0
    %1258 = vmatpush1.msra.mxu0 %v1246
    %1259 = vmatprep.subr.mxu0 0.0
    %1260 = vmatpush1.msra.mxu0 %v1245
    %1261 = vmatprep.subr.mxu0 0.0
    %1262 = vmatpush1.msra.mxu0 %v1244
    %1263 = vmatprep.subr.mxu0 0.0
    %1264 = vmatpush1.msra.mxu0 %v1243
    %1265 = vmatprep.subr.mxu0 0.0
    %1266 = vmatpush1.msra.mxu0 %v1242
    %1267 = vmatprep.subr.mxu0 0.0
    %1268 = vmatpush1.msra.mxu0 %v1241
    %1269 = vmatprep.subr.mxu0 0.0
    %1270 = vmatpush1.msra.mxu0 %v1240
    %1271 = vmatprep.subr.mxu0 0.0
    %1272 = vmatpush1.msra.mxu0 %v1239
    %1273 = vmatprep.subr.mxu0 0.0
    %1274 = vmatpush1.msra.mxu0 %v1238
    %1275 = vmatprep.subr.mxu0 0.0
    %1276 = vmatpush1.msra.mxu0 %v1237
    %1277 = vmatprep.subr.mxu0 0.0
    %1278 = vmatpush1.msra.mxu0 %v1236
    %1279 = vmatprep.subr.mxu0 0.0
    %1280 = vmatpush1.msra.mxu0 %v1235
    %1281 = vmatprep.subr.mxu0 0.0
    %1282 = vmatpush1.msra.mxu0 %v1234
    %1283 = vmatprep.subr.mxu0 0.0
    %1284 = vmatpush1.msra.mxu0 %v1233
    %1285 = vmatprep.subr.mxu0 0.0
    %1286 = vmatpush1.msra.mxu0 %v1232
    %1287 = vmatprep.subr.mxu0 0.0
    %1288 = vmatpush2.msra.mxu0 0.0
    %1289 = vmatprep.subr.mxu0 0.0
    %1290 = vmatpush2.msra.mxu0 0.0
    %1291 = vmatprep.subr.mxu0 0.0
    %1292 = vmatpush2.msra.mxu0 0.0
    %1293 = vmatprep.subr.mxu0 0.0
    %1294 = vmatpush2.msra.mxu0 0.0
    %1295 = vmatprep.subr.mxu0 0.0
    %1296 = vmatpush2.msra.mxu0 0.0
    %1297 = vmatprep.subr.mxu0 0.0
    %1298 = vmatpush2.msra.mxu0 0.0
    %1299 = vmatprep.subr.mxu0 0.0
    %1300 = vmatpush2.msra.mxu0 0.0
    %1301 = vmatprep.subr.mxu0 0.0
    %1302 = vmatpush2.msra.mxu0 0.0
    %1303 = vmatprep.subr.mxu0 0.0
    %1304 = vmatpush2.msra.mxu0 0.0
    %1305 = vmatprep.subr.mxu0 0.0
    %1306 = vmatpush2.msra.mxu0 0.0
    %1307 = vmatprep.subr.mxu0 0.0
    %1308 = vmatpush2.msra.mxu0 0.0
    %1309 = vmatprep.subr.mxu0 0.0
    %1310 = vmatpush2.msra.mxu0 0.0
    %1311 = vmatprep.subr.mxu0 0.0
    %1312 = vmatpush2.msra.mxu0 0.0
    %1313 = vmatprep.subr.mxu0 0.0
    %1314 = vmatpush2.msra.mxu0 0.0
    %1315 = vmatprep.subr.mxu0 0.0
    %1316 = vmatpush2.msra.mxu0 0.0
    %1317 = vmatprep.subr.mxu0 0.0
    %1318 = vmatpush2.msra.mxu0 0.0
    %1319 = vmatprep.mubr.f32.mxu0 0.0
    %1320 = vmatmul.mubr.f32.gmra.mxu0 %v1154
    %v1321 = vpop.f32.mrf.mxu0
    %v1322 = vadd.f32 %v1253, %v1321
    %v1323 = vpop.f32.mrf.mxu0
    %1324 = vmatprep.mubr.f32.mxu0 0.0
    %1325 = vmatmul.mubr.f32.gmra.mxu0 %v1159
    %v1326 = vpop.f32.mrf.mxu0
    %v1327 = vadd.f32 %v1253, %v1326
    %v1328 = vpop.f32.mrf.mxu0
    %1329 = vmatprep.mubr.f32.mxu0 0.0
    %1330 = vmatmul.mubr.f32.gmra.mxu0 %v1164
    %v1331 = vpop.f32.mrf.mxu0
    %v1332 = vadd.f32 %v1253, %v1331
    %v1333 = vpop.f32.mrf.mxu0
    %1334 = vmatprep.mubr.f32.mxu0 0.0
    %1335 = vmatmul.mubr.f32.gmra.mxu0 %v1169
    %v1336 = vpop.f32.mrf.mxu0
    %v1337 = vadd.f32 %v1253, %v1336
    %v1338 = vpop.f32.mrf.mxu0
    %1339 = vmatprep.mubr.f32.mxu0 0.0
    %1340 = vmatmul.mubr.f32.gmra.mxu0 %v1174
    %v1341 = vpop.f32.mrf.mxu0
    %v1342 = vadd.f32 %v1253, %v1341
    %v1343 = vpop.f32.mrf.mxu0
    %1344 = vmatprep.mubr.f32.mxu0 0.0
    %1345 = vmatmul.mubr.f32.gmra.mxu0 %v1179
    %v1346 = vpop.f32.mrf.mxu0
    %v1347 = vadd.f32 %v1253, %v1346
    %v1348 = vpop.f32.mrf.mxu0
    %1349 = vmatprep.mubr.f32.mxu0 0.0
    %1350 = vmatmul.mubr.f32.gmra.mxu0 %v1184
    %v1351 = vpop.f32.mrf.mxu0
    %v1352 = vadd.f32 %v1253, %v1351
    %v1353 = vpop.f32.mrf.mxu0
    %1354 = vmatprep.mubr.f32.mxu0 0.0
    %1355 = vmatmul.mubr.f32.gmra.mxu0 %v1189
    %v1356 = vpop.f32.mrf.mxu0
    %v1357 = vadd.f32 %v1253, %v1356
    %v1358 = vpop.f32.mrf.mxu0
    %1359 = vmatprep.mubr.f32.mxu0 0.0
    %1360 = vmatmul.mubr.f32.gmra.mxu0 %v1194
    %v1361 = vpop.f32.mrf.mxu0
    %v1362 = vadd.f32 %v1253, %v1361
    %v1363 = vpop.f32.mrf.mxu0
    %1364 = vmatprep.mubr.f32.mxu0 0.0
    %1365 = vmatmul.mubr.f32.gmra.mxu0 %v1199
    %v1366 = vpop.f32.mrf.mxu0
    %v1367 = vadd.f32 %v1253, %v1366
    %v1368 = vpop.f32.mrf.mxu0
    %1369 = vmatprep.mubr.f32.mxu0 0.0
    %1370 = vmatmul.mubr.f32.gmra.mxu0 %v1204
    %v1371 = vpop.f32.mrf.mxu0
    %v1372 = vadd.f32 %v1253, %v1371
    %v1373 = vpop.f32.mrf.mxu0
    %1374 = vmatprep.mubr.f32.mxu0 0.0
    %1375 = vmatmul.mubr.f32.gmra.mxu0 %v1209
    %v1376 = vpop.f32.mrf.mxu0
    %v1377 = vadd.f32 %v1253, %v1376
    %v1378 = vpop.f32.mrf.mxu0
    %1379 = vmatprep.mubr.f32.mxu0 0.0
    %1380 = vmatmul.mubr.f32.gmra.mxu0 %v1214
    %v1381 = vpop.f32.mrf.mxu0
    %v1382 = vadd.f32 %v1253, %v1381
    %v1383 = vpop.f32.mrf.mxu0
    %1384 = vmatprep.mubr.f32.mxu0 0.0
    %1385 = vmatmul.mubr.f32.gmra.mxu0 %v1219
    %v1386 = vpop.f32.mrf.mxu0
    %v1387 = vadd.f32 %v1253, %v1386
    %v1388 = vpop.f32.mrf.mxu0
    %1389 = vmatprep.mubr.f32.mxu0 0.0
    %1390 = vmatmul.mubr.f32.gmra.mxu0 %v1224
    %v1391 = vpop.f32.mrf.mxu0
    %v1392 = vadd.f32 %v1253, %v1391
    %v1393 = vpop.f32.mrf.mxu0
    %1394 = vmatprep.mubr.f32.mxu0 0.0
    %1395 = vmatmul.mubr.f32.gmra.mxu0 %v1229
    %v1396 = vpop.f32.mrf.mxu0
    %v1397 = vadd.f32 %v1253, %v1396
    %v1398 = vpop.f32.mrf.mxu0
    %1399 = vdwg.mxu0
    %1400 = vst [vmem:[%s14] sm:$0xff] %v1154
    %1401 = vst [vmem:[%s14 + $0x8] sm:$0xff] %v1159
    %1402 = vst [vmem:[%s14 + $0x10] sm:$0xff] %v1164
    %1403 = vst [vmem:[%s14 + $0x18] sm:$0xff] %v1169
    %1404 = vst [vmem:[%s14 + $0x20] sm:$0xff] %v1174
    %1405 = vst [vmem:[%s14 + $0x28] sm:$0xff] %v1179
    %1406 = vst [vmem:[%s14 + $0x30] sm:$0xff] %v1184
    %1407 = vst [vmem:[%s14 + $0x38] sm:$0xff] %v1189
    %1408 = vst [vmem:[%s14 + $0x40] sm:$0xff] %v1194
    %1409 = vst [vmem:[%s14 + $0x48] sm:$0xff] %v1199
    %1410 = vst [vmem:[%s14 + $0x50] sm:$0xff] %v1204
    %1411 = vst [vmem:[%s14 + $0x58] sm:$0xff] %v1209
    %1412 = vst [vmem:[%s14 + $0x60] sm:$0xff] %v1214
    %1413 = vst [vmem:[%s14 + $0x68] sm:$0xff] %v1219
    %1414 = vst [vmem:[%s14 + $0x70] sm:$0xff] %v1224
    %1415 = vst [vmem:[%s14 + $0x78] sm:$0xff] %v1229
    %1416 = vst [vmem:[%s13] sm:$0xff] %v1322
    %1417 = vst [vmem:[%s13 + $0x8] sm:$0xff] %v1327
    %1418 = vst [vmem:[%s13 + $0x10] sm:$0xff] %v1332
    %1419 = vst [vmem:[%s13 + $0x18] sm:$0xff] %v1337
    %1420 = vst [vmem:[%s13 + $0x20] sm:$0xff] %v1342
    %1421 = vst [vmem:[%s13 + $0x28] sm:$0xff] %v1347
    %1422 = vst [vmem:[%s13 + $0x30] sm:$0xff] %v1352
    %1423 = vst [vmem:[%s13 + $0x38] sm:$0xff] %v1357
    %1424 = vst [vmem:[%s13 + $0x40] sm:$0xff] %v1362
    %1425 = vst [vmem:[%s13 + $0x48] sm:$0xff] %v1367
    %1426 = vst [vmem:[%s13 + $0x50] sm:$0xff] %v1372
    %1427 = vst [vmem:[%s13 + $0x58] sm:$0xff] %v1377
    %1428 = vst [vmem:[%s13 + $0x60] sm:$0xff] %v1382
    %1429 = vst [vmem:[%s13 + $0x68] sm:$0xff] %v1387
    %1430 = vst [vmem:[%s13 + $0x70] sm:$0xff] %v1392
    %1431 = vst [vmem:[%s13 + $0x78] sm:$0xff] %v1397
  $region61: #{enhanced_sage_forward.5} parent=0 // pred_fallthru
    _
  // Predicated region
  $region62: #{enhanced_sage_forward.5} parent=0 // pred_check
    _
  $region63: #{enhanced_sage_forward.5} parent=0 // pred_check_branch
    %1433 = sbr.rel (0) target = $region65
  $region64: #{enhanced_sage_forward.5} parent=0 // pred_region
    _
  $region65: #{enhanced_sage_forward.5} parent=0 // pred_fallthru
    _
  // Predicated region
  $region66: #{enhanced_sage_forward.5} parent=0 // pred_check
    _
  $region67: #{enhanced_sage_forward.5} parent=0 // pred_check_branch
    %1435 = sbr.rel (0) target = $region69
  $region68: #{enhanced_sage_forward.5} parent=0 // pred_region
    _
  $region69: #{enhanced_sage_forward.5} parent=0 // pred_fallthru
    _
  // Predicated region
  $region70: #{enhanced_sage_forward.5} parent=0 // pred_check
    _
  $region71: #{enhanced_sage_forward.5} parent=0 // pred_check_branch
    %1437 = sbr.rel (0) target = $region73
  $region72: #{enhanced_sage_forward.5} parent=0 // pred_region
    _
  $region73: #{enhanced_sage_forward.5} parent=0 // pred_fallthru
    _
  // Predicated region
  $region74: #{enhanced_sage_forward.5} parent=0 // pred_check
    _
  $region75: #{enhanced_sage_forward.5} parent=0 // pred_check_branch
    %1439 = sbr.rel (0) target = $region77
  $region76: #{enhanced_sage_forward.5} parent=0 // pred_region
    _
  $region77: #{enhanced_sage_forward.5} parent=0 // pred_fallthru
    _

</llo_original>
